<compile_context>
chip_gen: v5e
topology: v5e:2x2
jax: 0.10.0
libtpu: 0.0.40
codegen_flags: <defaults>
</compile_context>

<pallas_src>
import jax
import jax.numpy as jnp
from jax import lax
from jax.experimental import pallas as pl
from jax.experimental.pallas import tpu as pltpu

_INV_SQRT2 = 0.7071067811865476


def _erf(x):
    # Abramowitz & Stegun 7.1.26 rational approximation (|err| <= 1.5e-7).
    # Built from primitives guaranteed to lower in Mosaic (abs/exp/mul/where);
    # exp lands on the EUP slot.
    a1, a2, a3, a4, a5 = (0.254829592, -0.284496736, 1.421413741,
                          -1.453152027, 1.061405429)
    p = 0.3275911
    ax = jnp.abs(x)
    t = 1.0 / (1.0 + p * ax)
    poly = ((((a5 * t + a4) * t + a3) * t + a2) * t + a1) * t
    y = 1.0 - poly * jnp.exp(-ax * ax)
    return jnp.where(x >= 0, y, -y)


def _make_gelu(approximate):
    if approximate:
        return lambda v: jax.nn.gelu(v, approximate=True)   # tanh -> EUP
    return lambda v: 0.5 * v * (1.0 + _erf(v * _INV_SQRT2))  # exact (erf)


# ----------------------------------------------------------------------------
# Fused kernel builder
# ----------------------------------------------------------------------------
def _build_kernel(W, Cx, Cs, C1, C2, tH, merge9_1, merge9_2, approx_gelu):
    """Kernel computing tH final output rows per grid step."""
    has_skip = Cs > 0
    Ct = Cx + Cs
    R1 = tH + 2                     # conv1 rows per tile (1-row halo each side)
    gelu = _make_gelu(approx_gelu)

    def kernel(*args):
        if has_skip:
            xw_ref, sw_ref, w1_ref, b1_ref, w2_ref, b2_ref, o_ref = args
        else:
            xw_ref, w1_ref, b1_ref, w2_ref, b2_ref, o_ref = args

        # ---- upsample rows x2 + concat with skip: (tH+4, W+2, Ct) bf16 -------
        xr = xw_ref[0]                                           # (tH//2+2, W+2, Cx)
        xr = jnp.concatenate([xr[:, None], xr[:, None]], axis=1)
        xup = xr.reshape(tH + 4, W + 2, Cx)                      # rows repeated x2
        cin = jnp.concatenate([xup, sw_ref[0]], axis=-1) if has_skip else xup

        # ---- conv1: im2col built once, MXU dot(s), f32 accum in registers ----
        cols1 = jnp.concatenate(
            [cin[:, 0:W], cin[:, 1:W + 1], cin[:, 2:W + 2]], axis=-1)  # (tH+4, W, 3Ct)
        if merge9_1:
            p1 = jnp.concatenate(
                [cols1[0:R1], cols1[1:R1 + 1], cols1[2:R1 + 2]],
                axis=-1).reshape(R1 * W, 9 * Ct)
            acc1 = jnp.dot(p1, w1_ref[...], preferred_element_type=jnp.float32)
        else:
            acc1 = jnp.dot(cols1[0:R1].reshape(R1 * W, 3 * Ct), w1_ref[0],
                           preferred_element_type=jnp.float32)
            for kh in (1, 2):
                acc1 = acc1 + jnp.dot(
                    cols1[kh:kh + R1].reshape(R1 * W, 3 * Ct), w1_ref[kh],
                    preferred_element_type=jnp.float32)
        y1 = gelu(acc1 + b1_ref[...]).reshape(R1, W, C1)          # f32 epilogue

        # ---- zero only the (<=2) halo rows that fall outside the image -------
        t = pl.program_id(1)
        keep_top = (t > 0).astype(jnp.float32)
        keep_bot = (t < pl.num_programs(1) - 1).astype(jnp.float32)
        top = y1[0:1] * keep_top
        bot = y1[R1 - 1:R1] * keep_bot
        zc = jnp.zeros((R1, 1, C1), jnp.float32)                  # conv2 W padding
        mid = jnp.concatenate(
            [zc, jnp.concatenate([top, y1[1:R1 - 1], bot], axis=0), zc],
            axis=1).astype(jnp.bfloat16)                          # (R1, W+2, C1)

        # ---- conv2: result produced directly as (C2, tH*W) (no transpose) ----
        cols2 = jnp.concatenate(
            [mid[:, 0:W], mid[:, 1:W + 1], mid[:, 2:W + 2]], axis=-1)  # (R1, W, 3C1)
        dn = (((1,), (1,)), ((), ()))                             # contract K vs K
        if merge9_2:
            p2 = jnp.concatenate(
                [cols2[0:tH], cols2[1:tH + 1], cols2[2:tH + 2]],
                axis=-1).reshape(tH * W, 9 * C1)
            acc2 = lax.dot_general(w2_ref[...], p2, dn,
                                   preferred_element_type=jnp.float32)
        else:
            acc2 = lax.dot_general(w2_ref[0],
                                   cols2[0:tH].reshape(tH * W, 3 * C1), dn,
                                   preferred_element_type=jnp.float32)
            for kh in (1, 2):
                acc2 = acc2 + lax.dot_general(
                    w2_ref[kh], cols2[kh:kh + tH].reshape(tH * W, 3 * C1), dn,
                    preferred_element_type=jnp.float32)
        y2 = gelu(acc2 + b2_ref[...])                             # (C2, tH*W)

        # lane-dense, NCHW-ready store
        o_ref[0] = y2.astype(o_ref.dtype)

    return kernel


def _fused_call(xw, sw, w1, b1, w2, b2, N, H, W, Cx, Cs, C1, C2,
                tH, n_t, merge9_1, merge9_2, out_dtype, approx_gelu, vmem_limit):
    kernel = _build_kernel(W, Cx, Cs, C1, C2, tH, merge9_1, merge9_2, approx_gelu)
    has_skip = Cs > 0
    Ct = Cx + Cs
    tHl = tH // 2

    in_specs = [pl.BlockSpec((1, tHl + 2, W + 2, Cx),
                             lambda n, t: (n * n_t + t, 0, 0, 0))]
    inputs = [xw]
    if has_skip:
        in_specs.append(pl.BlockSpec((1, tH + 4, W + 2, Cs),
                                     lambda n, t: (n * n_t + t, 0, 0, 0)))
        inputs.append(sw)
    if merge9_1:
        in_specs.append(pl.BlockSpec((9 * Ct, C1), lambda n, t: (0, 0)))
    else:
        in_specs.append(pl.BlockSpec((3, 3 * Ct, C1), lambda n, t: (0, 0, 0)))
    in_specs.append(pl.BlockSpec((1, C1), lambda n, t: (0, 0)))
    if merge9_2:
        in_specs.append(pl.BlockSpec((C2, 9 * C1), lambda n, t: (0, 0)))
    else:
        in_specs.append(pl.BlockSpec((3, C2, 3 * C1), lambda n, t: (0, 0, 0)))
    in_specs.append(pl.BlockSpec((C2, 1), lambda n, t: (0, 0)))
    inputs += [w1, b1, w2, b2]

    return pl.pallas_call(
        kernel,
        out_shape=jax.ShapeDtypeStruct((N, C2, H * W), out_dtype),
        grid_spec=pltpu.PrefetchScalarGridSpec(
            num_scalar_prefetch=0,
            grid=(N, n_t),
            in_specs=in_specs,
            out_specs=pl.BlockSpec((1, C2, tH * W), lambda n, t: (n, 0, t)),
        ),
        compiler_params=pltpu.CompilerParams(
            dimension_semantics=("parallel", "parallel"),
            vmem_limit_bytes=int(vmem_limit),
        ),
    )(*inputs)


# ----------------------------------------------------------------------------
# Generation-aware sizing helpers
# ----------------------------------------------------------------------------
def _vmem_capacity_bytes():
    try:
        info = pltpu.get_tpu_info()
        for name in ("vmem_capacity_bytes", "vmem_size_bytes", "vmem_bytes"):
            v = getattr(info, name, None)
            if v:
                return int(v)
    except Exception:
        pass
    return 64 * 1024 * 1024          # conservative (v7x physical VMEM)


def _estimate_tile_bytes(tH, W, Cx, Cs, C1, C2, merge9_1, merge9_2, out_bytes):
    Ct = Cx + Cs
    tHl = tH // 2
    R1 = tH + 2
    b = 0
    # double-buffered input windows + output blocks
    b += 2 * (tHl + 2) * (W + 2) * Cx * 2
    b += 2 * (tH + 4) * (W + 2) * Cs * 2
    b += 2 * C2 * tH * W * out_bytes
    # dominant live temporaries
    b += (tH + 4) * (W + 2) * Ct * 2            # cin
    b += (tH + 4) * W * 3 * Ct * 2              # cols1
    if merge9_1:
        b += R1 * W * 9 * Ct * 2                # merged patch1
    b += R1 * W * C1 * 4                        # acc1 / y1 (f32)
    b += R1 * (W + 2) * C1 * 2                  # mid (bf16)
    b += R1 * W * 3 * C1 * 2                    # cols2
    if merge9_2:
        b += tH * W * 9 * C1 * 2                # merged patch2
    b += C2 * tH * W * 4                        # acc2 / y2 (f32)
    return b


def _pick_tile_h(H, W, Cx, Cs, C1, C2, merge9_1, merge9_2, out_bytes,
                 budget, prefer_splits):
    cands = []
    for th in range(2, H + 1, 2):
        if H % th:
            continue
        if (th * W) % 128 and th != H:          # lane-dense output block
            continue
        if _estimate_tile_bytes(th, W, Cx, Cs, C1, C2,
                                merge9_1, merge9_2, out_bytes) > budget:
            continue
        cands.append(th)
    if not cands:
        return H                                 # last resort for extreme shapes
    if prefer_splits > 1:                        # keep >=2 grid points for 2 TCs
        split_ok = [th for th in cands if H // th >= prefer_splits]
        if split_ok:
            return max(split_ok)
    return max(cands)


def _row_windows(a, win, step, n_t):
    """(N, R, W2, C) -> (N*n_t, win, W2, C) overlapping row windows."""
    N = a.shape[0]
    w = jnp.stack([a[:, i * step:i * step + win] for i in range(n_t)], axis=1)
    return w.reshape(N * n_t, win, a.shape[2], a.shape[3])


# ----------------------------------------------------------------------------
# Weight prep (BN scale folded, bf16, matmul-ready layouts)
# ----------------------------------------------------------------------------
def _prep_w1(w_t, scale, merge9):
    # (Cout, Cin, 3, 3) -> (9*Cin, Cout) or (3, 3*Cin, Cout)   [K order: kh,kw,ci]
    cout, cin = w_t.shape[0], w_t.shape[1]
    w = (w_t * scale[:, None, None, None]).astype(jnp.float32)
    w = jnp.transpose(w, (2, 3, 1, 0))                        # (kh, kw, ci, co)
    w = w.reshape(9 * cin, cout) if merge9 else w.reshape(3, 3 * cin, cout)
    return w.astype(jnp.bfloat16)


def _prep_w2(w_t, scale, merge9):
    # (Cout, Cin, 3, 3) -> (Cout, 9*Cin) or (3, Cout, 3*Cin)   [K order: kh,kw,ci]
    cout, cin = w_t.shape[0], w_t.shape[1]
    w = (w_t * scale[:, None, None, None]).astype(jnp.float32)
    if merge9:
        w = jnp.transpose(w, (0, 2, 3, 1)).reshape(cout, 9 * cin)
    else:
        w = jnp.transpose(w, (2, 0, 3, 1)).reshape(3, cout, 3 * cin)
    return w.astype(jnp.bfloat16)


# ----------------------------------------------------------------------------
# Module wrapper
# ----------------------------------------------------------------------------
def upsample_decoder_block(x_nchw, skip_nchw, params, scale_factor=2,
                           tile_h=None, out_dtype=jnp.bfloat16,
                           approximate_gelu=False):
    assert scale_factor == 2, "TODO(synk): fused path assumes scale_factor == 2"
    N, Cx, Hl, Wl = x_nchw.shape
    H, W = 2 * Hl, 2 * Wl
    C1 = params["w1_t"].shape[0]
    C2 = params["w2_t"].shape[0]
    Cs = 0 if skip_nchw is None else skip_nchw.shape[1]
    Ct = Cx + Cs
    assert params["w1_t"].shape[1] == Ct

    # merge all 9 taps into one deep-K dot when channels are small
    merge9_1 = (3 * Ct) <= 128
    merge9_2 = (3 * C1) <= 128

    out_bytes = jnp.dtype(out_dtype).itemsize
    cap = _vmem_capacity_bytes()
    budget = max(2 * 1024 * 1024, cap // 16)
    vmem_limit = max(32 * 1024 * 1024, min((cap * 3) // 4, 96 * 1024 * 1024))

    if tile_h is None:
        prefer_splits = 2 if N < 2 else 1
        tH = _pick_tile_h(H, W, Cx, Cs, C1, C2, merge9_1, merge9_2,
                          out_bytes, budget, prefer_splits)
    else:
        tH = tile_h
    assert H % tH == 0 and tH % 2 == 0
    assert (tH * W) % 128 == 0 or tH == H
    n_t = H // tH
    tHl = tH // 2

    # --- fold BN scale into conv weights; shift becomes a post-matmul bias ----
    w1 = _prep_w1(params["w1_t"], params["scale1"], merge9_1)
    w2 = _prep_w2(params["w2_t"], params["scale2"], merge9_2)
    b1 = params["shift1"].reshape(1, C1).astype(jnp.float32)
    b2 = params["shift2"].reshape(C2, 1).astype(jnp.float32)

    # --- cheap input prep in XLA: ---------------------------------------------
    #   x : NCHW->NHWC, pad 1 (low-res), column-upsample x2, per-tile row windows
    #   skip: NCHW->NHWC, pad 2 rows / 1 col, per-tile row windows
    xb = jnp.transpose(x_nchw, (0, 2, 3, 1)).astype(jnp.bfloat16)
    xp = jnp.pad(xb, ((0, 0), (1, 1), (1, 1), (0, 0)))
    xcp = jnp.repeat(xp, 2, axis=2)[:, :, 1:W + 3, :]          # (N, Hl+2, W+2, Cx)
    xw = _row_windows(xcp, tHl + 2, tHl, n_t)                  # (N*n_t, tHl+2, W+2, Cx)

    if Cs:
        sb = jnp.transpose(skip_nchw, (0, 2, 3, 1)).astype(jnp.bfloat16)
        sp = jnp.pad(sb, ((0, 0), (2, 2), (1, 1), (0, 0)))     # (N, H+4, W+2, Cs)
        sw = _row_windows(sp, tH + 4, tH, n_t)                 # (N*n_t, tH+4, W+2, Cs)
    else:
        sw = None

    out_flat = _fused_call(xw, sw, w1, b1, w2, b2, N, H, W, Cx, Cs, C1, C2,
                           tH, n_t, merge9_1, merge9_2, out_dtype,
                           approximate_gelu, vmem_limit)
    return out_flat.reshape(N, C2, H, W)                       # free reshape -> NCHW


# ----------------------------------------------------------------------------
# Deterministic parameter init (shapes from the module's __init__)
# ----------------------------------------------------------------------------
def init_params(key, in_channels, skip_channels, out_channels):
    cin1 = in_channels + skip_channels
    ks = jax.random.split(key, 10)
    w1_t = 0.1 * jax.random.normal(ks[0], (out_channels, cin1, 3, 3), jnp.float32)
    w2_t = 0.1 * jax.random.normal(ks[1], (out_channels, out_channels, 3, 3),
                                   jnp.float32)

    def bn(kg, kb, km, kv, c, eps=1e-5):
        gamma = 1.0 + 0.1 * jax.random.normal(kg, (c,), jnp.float32)
        beta = 0.1 * jax.random.normal(kb, (c,), jnp.float32)
        mean = 0.1 * jax.random.normal(km, (c,), jnp.float32)
        var = 0.5 + jnp.abs(jax.random.normal(kv, (c,), jnp.float32))
        scale = gamma / jnp.sqrt(var + eps)
        shift = beta - mean * scale
        return scale, shift

    scale1, shift1 = bn(ks[2], ks[3], ks[4], ks[5], out_channels)
    scale2, shift2 = bn(ks[6], ks[7], ks[8], ks[9], out_channels)
    return {"w1_t": w1_t, "scale1": scale1, "shift1": shift1,
            "w2_t": w2_t, "scale2": scale2, "shift2": shift2}


# ----------------------------------------------------------------------------
# Pure-JAX f32 reference (lax.conv) for correctness check
# ----------------------------------------------------------------------------
def ref_forward(x_nchw, skip_nchw, params, scale_factor=2):
    x = jnp.transpose(x_nchw, (0, 2, 3, 1))
    x = jnp.repeat(jnp.repeat(x, scale_factor, axis=1), scale_factor, axis=2)
    if skip_nchw is not None:
        x = jnp.concatenate([x, jnp.transpose(skip_nchw, (0, 2, 3, 1))], axis=-1)

    def conv_bn_gelu(x, w_t, scale, shift):
        w_hwio = jnp.transpose(w_t, (2, 3, 1, 0))
        y = lax.conv_general_dilated(x, w_hwio, (1, 1), "SAME",
                                     dimension_numbers=("NHWC", "HWIO", "NHWC"))
        y = y * scale + shift
        return 0.5 * y * (1.0 + lax.erf(y * _INV_SQRT2))

    y = conv_bn_gelu(x, params["w1_t"], params["scale1"], params["shift1"])
    y = conv_bn_gelu(y, params["w2_t"], params["scale2"], params["shift2"])
    return jnp.transpose(y, (0, 3, 1, 2))


if __name__ == "__main__":
    N, IN_CH, SKIP_CH, OUT_CH = 2, 4, 4, 8
    H0 = W0 = 16
    SCALE = 2

    key = jax.random.PRNGKey(0)
    kx, ksk, kp, kp2 = jax.random.split(key, 4)
    x = jax.random.normal(kx, (N, IN_CH, H0, W0), jnp.float32)               # NCHW
    skip = jax.random.normal(ksk, (N, SKIP_CH, H0 * SCALE, W0 * SCALE),
                             jnp.float32)                                    # NCHW
    params = init_params(kp, IN_CH, SKIP_CH, OUT_CH)
    params_ns = init_params(kp2, IN_CH, 0, OUT_CH)

    @jax.jit
    def fwd(x, skip, params):
        # fixed small tile -> exercises the multi-tile halo / masking path
        return upsample_decoder_block(x, skip, params, scale_factor=SCALE,
                                      tile_h=8)

    @jax.jit
    def fwd_no_skip(x, params):
        # skip_con=None path, auto (generation-aware) tile size
        return upsample_decoder_block(x, None, params, scale_factor=SCALE)

    out = jax.block_until_ready(fwd(x, skip, params)).astype(jnp.float32)
    ref = jax.block_until_ready(ref_forward(x, skip, params, SCALE))
    assert out.shape == (N, OUT_CH, H0 * SCALE, W0 * SCALE), out.shape
    # bf16 matmul operands + bf16 output vs pure-f32 reference
    assert jnp.allclose(out, ref, atol=1.5e-1, rtol=5e-2), \
        float(jnp.max(jnp.abs(out - ref)))

    out2 = jax.block_until_ready(fwd_no_skip(x, params_ns)).astype(jnp.float32)
    ref2 = jax.block_until_ready(ref_forward(x, None, params_ns, SCALE))
    assert jnp.allclose(out2, ref2, atol=1.5e-1, rtol=5e-2), \
        float(jnp.max(jnp.abs(out2 - ref2)))

    print("KERNEL_OK")
</pallas_src>

<mosaic_0001>
module attributes {stable_mosaic.version = 11 : i64} {
  func.func @kernel(%arg0: i32, %arg1: i32, %arg2: memref<1x6x34x4xbf16, #tpu.memory_space<vmem>>, %arg3: memref<1x12x34x4xbf16, #tpu.memory_space<vmem>>, %arg4: memref<72x8xbf16, #tpu.memory_space<vmem>>, %arg5: memref<1x8xf32, #tpu.memory_space<vmem>>, %arg6: memref<8x72xbf16, #tpu.memory_space<vmem>>, %arg7: memref<8x1xf32, #tpu.memory_space<vmem>>, %arg8: memref<1x8x256xbf16, #tpu.memory_space<vmem>>) attributes {dimension_semantics = [#tpu.dimension_semantics<parallel>, #tpu.dimension_semantics<parallel>], iteration_bounds = array<i64: 2, 4>, scalar_prefetch = 0 : i64, scratch_operands = 0 : i64, tpu.core_type = #tpu.core_type<tc>, window_params = [{transform_indices = @transform_0, window_bounds = array<i64: 1, 6, 34, 4>}, {transform_indices = @transform_1, window_bounds = array<i64: 1, 12, 34, 4>}, {pipeline_mode = #tpu.pipeline_mode<synchronous>, transform_indices = @transform_2, window_bounds = array<i64: 72, 8>}, {pipeline_mode = #tpu.pipeline_mode<synchronous>, transform_indices = @transform_3, window_bounds = array<i64: 1, 8>}, {pipeline_mode = #tpu.pipeline_mode<synchronous>, transform_indices = @transform_4, window_bounds = array<i64: 8, 72>}, {pipeline_mode = #tpu.pipeline_mode<synchronous>, transform_indices = @transform_5, window_bounds = array<i64: 8, 1>}, {transform_indices = @transform_6, window_bounds = array<i64: 1, 8, 256>}]} {
    %c0 = arith.constant 0 : index
    %c0_0 = arith.constant 0 : index
    %c0_1 = arith.constant 0 : index
    %c0_2 = arith.constant 0 : index
    %0 = vector.load %arg2[%c0, %c0_0, %c0_1, %c0_2] : memref<1x6x34x4xbf16, #tpu.memory_space<vmem>>, vector<1x6x34x4xbf16>
    %1 = vector.shape_cast %0 : vector<1x6x34x4xbf16> to vector<6x34x4xbf16>
    %2 = vector.shape_cast %1 : vector<6x34x4xbf16> to vector<6x1x34x4xbf16>
    %3 = vector.shape_cast %1 : vector<6x34x4xbf16> to vector<6x1x34x4xbf16>
    %4 = tpu.concatenate %2, %3 in 1 : vector<6x1x34x4xbf16>, vector<6x1x34x4xbf16> -> vector<6x2x34x4xbf16>
    %5 = vector.shape_cast %4 : vector<6x2x34x4xbf16> to vector<12x34x4xbf16>
    %c0_3 = arith.constant 0 : index
    %c0_4 = arith.constant 0 : index
    %c0_5 = arith.constant 0 : index
    %c0_6 = arith.constant 0 : index
    %6 = vector.load %arg3[%c0_3, %c0_4, %c0_5, %c0_6] : memref<1x12x34x4xbf16, #tpu.memory_space<vmem>>, vector<1x12x34x4xbf16>
    %7 = vector.shape_cast %6 : vector<1x12x34x4xbf16> to vector<12x34x4xbf16>
    %8 = tpu.concatenate %5, %7 in 2 : vector<12x34x4xbf16>, vector<12x34x4xbf16> -> vector<12x34x8xbf16>
    %9 = vector.extract_strided_slice %8 {offsets = [0, 0, 0], sizes = [12, 32, 8], strides = [1, 1, 1]} : vector<12x34x8xbf16> to vector<12x32x8xbf16>
    %10 = vector.extract_strided_slice %8 {offsets = [0, 1, 0], sizes = [12, 32, 8], strides = [1, 1, 1]} : vector<12x34x8xbf16> to vector<12x32x8xbf16>
    %11 = vector.extract_strided_slice %8 {offsets = [0, 2, 0], sizes = [12, 32, 8], strides = [1, 1, 1]} : vector<12x34x8xbf16> to vector<12x32x8xbf16>
    %12 = tpu.concatenate %9, %10, %11 in 2 : vector<12x32x8xbf16>, vector<12x32x8xbf16>, vector<12x32x8xbf16> -> vector<12x32x24xbf16>
    %13 = vector.extract_strided_slice %12 {offsets = [0, 0, 0], sizes = [10, 32, 24], strides = [1, 1, 1]} : vector<12x32x24xbf16> to vector<10x32x24xbf16>
    %14 = vector.extract_strided_slice %12 {offsets = [1, 0, 0], sizes = [10, 32, 24], strides = [1, 1, 1]} : vector<12x32x24xbf16> to vector<10x32x24xbf16>
    %15 = vector.extract_strided_slice %12 {offsets = [2, 0, 0], sizes = [10, 32, 24], strides = [1, 1, 1]} : vector<12x32x24xbf16> to vector<10x32x24xbf16>
    %16 = tpu.concatenate %13, %14, %15 in 2 : vector<10x32x24xbf16>, vector<10x32x24xbf16>, vector<10x32x24xbf16> -> vector<10x32x72xbf16>
    %17 = vector.shape_cast %16 : vector<10x32x72xbf16> to vector<320x72xbf16>
    %c0_7 = arith.constant 0 : index
    %c0_8 = arith.constant 0 : index
    %18 = vector.load %arg4[%c0_7, %c0_8] : memref<72x8xbf16, #tpu.memory_space<vmem>>, vector<72x8xbf16>
    %cst = arith.constant dense<0.000000e+00> : vector<320x8xf32>
    %19 = tpu.matmul %17, %18, %cst {dimension_numbers = #tpu.dot_dimension_numbers<[1], [0], [0], [1], [0, 0, 1, 1], [], []>} : vector<320x72xbf16>, vector<72x8xbf16>, vector<320x8xf32> -> vector<320x8xf32>
    %c0_9 = arith.constant 0 : index
    %c0_10 = arith.constant 0 : index
    %20 = vector.load %arg5[%c0_9, %c0_10] : memref<1x8xf32, #tpu.memory_space<vmem>>, vector<1x8xf32>
    %21 = vector.broadcast %20 : vector<1x8xf32> to vector<320x8xf32>
    %22 = arith.addf %19, %21 : vector<320x8xf32>
    %cst_11 = arith.constant 5.000000e-01 : f32
    %23 = vector.broadcast %cst_11 : f32 to vector<320x8xf32>
    %24 = arith.mulf %23, %22 : vector<320x8xf32>
    %cst_12 = arith.constant 0.707106769 : f32
    %25 = vector.broadcast %cst_12 : f32 to vector<320x8xf32>
    %26 = arith.mulf %22, %25 : vector<320x8xf32>
    %27 = math.absf %26 : vector<320x8xf32>
    %cst_13 = arith.constant 0.327591091 : f32
    %28 = vector.broadcast %cst_13 : f32 to vector<320x8xf32>
    %29 = arith.mulf %28, %27 : vector<320x8xf32>
    %cst_14 = arith.constant 1.000000e+00 : f32
    %30 = vector.broadcast %cst_14 : f32 to vector<320x8xf32>
    %31 = arith.addf %30, %29 : vector<320x8xf32>
    %cst_15 = arith.constant 1.000000e+00 : f32
    %32 = vector.broadcast %cst_15 : f32 to vector<320x8xf32>
    %33 = arith.divf %32, %31 : vector<320x8xf32>
    %cst_16 = arith.constant 1.06140542 : f32
    %34 = vector.broadcast %cst_16 : f32 to vector<320x8xf32>
    %35 = arith.mulf %34, %33 : vector<320x8xf32>
    %cst_17 = arith.constant -1.45315206 : f32
    %36 = vector.broadcast %cst_17 : f32 to vector<320x8xf32>
    %37 = arith.addf %35, %36 : vector<320x8xf32>
    %38 = arith.mulf %37, %33 : vector<320x8xf32>
    %cst_18 = arith.constant 1.42141378 : f32
    %39 = vector.broadcast %cst_18 : f32 to vector<320x8xf32>
    %40 = arith.addf %38, %39 : vector<320x8xf32>
    %41 = arith.mulf %40, %33 : vector<320x8xf32>
    %cst_19 = arith.constant -0.284496725 : f32
    %42 = vector.broadcast %cst_19 : f32 to vector<320x8xf32>
    %43 = arith.addf %41, %42 : vector<320x8xf32>
    %44 = arith.mulf %43, %33 : vector<320x8xf32>
    %cst_20 = arith.constant 0.254829586 : f32
    %45 = vector.broadcast %cst_20 : f32 to vector<320x8xf32>
    %46 = arith.addf %44, %45 : vector<320x8xf32>
    %47 = arith.mulf %46, %33 : vector<320x8xf32>
    %cst_21 = arith.constant 0.000000e+00 : f32
    %48 = vector.broadcast %cst_21 : f32 to vector<320x8xf32>
    %49 = arith.subf %48, %27 : vector<320x8xf32>
    %50 = arith.mulf %49, %27 : vector<320x8xf32>
    %51 = math.exp %50 : vector<320x8xf32>
    %52 = arith.mulf %47, %51 : vector<320x8xf32>
    %cst_22 = arith.constant 1.000000e+00 : f32
    %53 = vector.broadcast %cst_22 : f32 to vector<320x8xf32>
    %54 = arith.subf %53, %52 : vector<320x8xf32>
    %cst_23 = arith.constant 0.000000e+00 : f32
    %55 = vector.broadcast %cst_23 : f32 to vector<320x8xf32>
    %56 = arith.cmpf oge, %26, %55 : vector<320x8xf32>
    %cst_24 = arith.constant 0.000000e+00 : f32
    %57 = vector.broadcast %cst_24 : f32 to vector<320x8xf32>
    %58 = arith.subf %57, %54 : vector<320x8xf32>
    %59 = arith.select %56, %54, %58 : vector<320x8xi1>, vector<320x8xf32>
    %cst_25 = arith.constant 1.000000e+00 : f32
    %60 = vector.broadcast %cst_25 : f32 to vector<320x8xf32>
    %61 = arith.addf %60, %59 : vector<320x8xf32>
    %62 = arith.mulf %24, %61 : vector<320x8xf32>
    %63 = vector.shape_cast %62 : vector<320x8xf32> to vector<10x32x8xf32>
    %c0_i32 = arith.constant 0 : i32
    %64 = arith.cmpi sgt, %arg1, %c0_i32 : i32
    %65 = arith.extui %64 : i1 to i32
    %66 = arith.sitofp %65 : i32 to f32
    %c3_i32 = arith.constant 3 : i32
    %67 = arith.cmpi slt, %arg1, %c3_i32 : i32
    %68 = arith.extui %67 : i1 to i32
    %69 = arith.sitofp %68 : i32 to f32
    %70 = vector.extract_strided_slice %63 {offsets = [0, 0, 0], sizes = [1, 32, 8], strides = [1, 1, 1]} : vector<10x32x8xf32> to vector<1x32x8xf32>
    %71 = vector.broadcast %66 : f32 to vector<1x32x8xf32>
    %72 = arith.mulf %70, %71 : vector<1x32x8xf32>
    %73 = vector.extract_strided_slice %63 {offsets = [9, 0, 0], sizes = [1, 32, 8], strides = [1, 1, 1]} : vector<10x32x8xf32> to vector<1x32x8xf32>
    %74 = vector.broadcast %69 : f32 to vector<1x32x8xf32>
    %75 = arith.mulf %73, %74 : vector<1x32x8xf32>
    %cst_26 = arith.constant 0.000000e+00 : f32
    %76 = vector.broadcast %cst_26 : f32 to vector<10x1x8xf32>
    %77 = vector.extract_strided_slice %63 {offsets = [1, 0, 0], sizes = [8, 32, 8], strides = [1, 1, 1]} : vector<10x32x8xf32> to vector<8x32x8xf32>
    %78 = tpu.concatenate %72, %77, %75 in 0 : vector<1x32x8xf32>, vector<8x32x8xf32>, vector<1x32x8xf32> -> vector<10x32x8xf32>
    %79 = tpu.concatenate %76, %78, %76 in 1 : vector<10x1x8xf32>, vector<10x32x8xf32>, vector<10x1x8xf32> -> vector<10x34x8xf32>
    %80 = arith.truncf %79 : vector<10x34x8xf32> to vector<10x34x8xbf16>
    %81 = vector.extract_strided_slice %80 {offsets = [0, 0, 0], sizes = [10, 32, 8], strides = [1, 1, 1]} : vector<10x34x8xbf16> to vector<10x32x8xbf16>
    %82 = vector.extract_strided_slice %80 {offsets = [0, 1, 0], sizes = [10, 32, 8], strides = [1, 1, 1]} : vector<10x34x8xbf16> to vector<10x32x8xbf16>
    %83 = vector.extract_strided_slice %80 {offsets = [0, 2, 0], sizes = [10, 32, 8], strides = [1, 1, 1]} : vector<10x34x8xbf16> to vector<10x32x8xbf16>
    %84 = tpu.concatenate %81, %82, %83 in 2 : vector<10x32x8xbf16>, vector<10x32x8xbf16>, vector<10x32x8xbf16> -> vector<10x32x24xbf16>
    %85 = vector.extract_strided_slice %84 {offsets = [0, 0, 0], sizes = [8, 32, 24], strides = [1, 1, 1]} : vector<10x32x24xbf16> to vector<8x32x24xbf16>
    %86 = vector.extract_strided_slice %84 {offsets = [1, 0, 0], sizes = [8, 32, 24], strides = [1, 1, 1]} : vector<10x32x24xbf16> to vector<8x32x24xbf16>
    %87 = vector.extract_strided_slice %84 {offsets = [2, 0, 0], sizes = [8, 32, 24], strides = [1, 1, 1]} : vector<10x32x24xbf16> to vector<8x32x24xbf16>
    %88 = tpu.concatenate %85, %86, %87 in 2 : vector<8x32x24xbf16>, vector<8x32x24xbf16>, vector<8x32x24xbf16> -> vector<8x32x72xbf16>
    %89 = vector.shape_cast %88 : vector<8x32x72xbf16> to vector<256x72xbf16>
    %c0_27 = arith.constant 0 : index
    %c0_28 = arith.constant 0 : index
    %90 = vector.load %arg6[%c0_27, %c0_28] : memref<8x72xbf16, #tpu.memory_space<vmem>>, vector<8x72xbf16>
    %cst_29 = arith.constant dense<0.000000e+00> : vector<8x256xf32>
    %91 = tpu.matmul %90, %89, %cst_29 {dimension_numbers = #tpu.dot_dimension_numbers<[1], [1], [0], [0], [0, 0, 1, 0], [], []>} : vector<8x72xbf16>, vector<256x72xbf16>, vector<8x256xf32> -> vector<8x256xf32>
    %c0_30 = arith.constant 0 : index
    %c0_31 = arith.constant 0 : index
    %92 = vector.load %arg7[%c0_30, %c0_31] : memref<8x1xf32, #tpu.memory_space<vmem>>, vector<8x1xf32>
    %93 = vector.broadcast %92 : vector<8x1xf32> to vector<8x256xf32>
    %94 = arith.addf %91, %93 : vector<8x256xf32>
    %cst_32 = arith.constant 5.000000e-01 : f32
    %95 = vector.broadcast %cst_32 : f32 to vector<8x256xf32>
    %96 = arith.mulf %95, %94 : vector<8x256xf32>
    %cst_33 = arith.constant 0.707106769 : f32
    %97 = vector.broadcast %cst_33 : f32 to vector<8x256xf32>
    %98 = arith.mulf %94, %97 : vector<8x256xf32>
    %99 = math.absf %98 : vector<8x256xf32>
    %cst_34 = arith.constant 0.327591091 : f32
    %100 = vector.broadcast %cst_34 : f32 to vector<8x256xf32>
    %101 = arith.mulf %100, %99 : vector<8x256xf32>
    %cst_35 = arith.constant 1.000000e+00 : f32
    %102 = vector.broadcast %cst_35 : f32 to vector<8x256xf32>
    %103 = arith.addf %102, %101 : vector<8x256xf32>
    %cst_36 = arith.constant 1.000000e+00 : f32
    %104 = vector.broadcast %cst_36 : f32 to vector<8x256xf32>
    %105 = arith.divf %104, %103 : vector<8x256xf32>
    %cst_37 = arith.constant 1.06140542 : f32
    %106 = vector.broadcast %cst_37 : f32 to vector<8x256xf32>
    %107 = arith.mulf %106, %105 : vector<8x256xf32>
    %cst_38 = arith.constant -1.45315206 : f32
    %108 = vector.broadcast %cst_38 : f32 to vector<8x256xf32>
    %109 = arith.addf %107, %108 : vector<8x256xf32>
    %110 = arith.mulf %109, %105 : vector<8x256xf32>
    %cst_39 = arith.constant 1.42141378 : f32
    %111 = vector.broadcast %cst_39 : f32 to vector<8x256xf32>
    %112 = arith.addf %110, %111 : vector<8x256xf32>
    %113 = arith.mulf %112, %105 : vector<8x256xf32>
    %cst_40 = arith.constant -0.284496725 : f32
    %114 = vector.broadcast %cst_40 : f32 to vector<8x256xf32>
    %115 = arith.addf %113, %114 : vector<8x256xf32>
    %116 = arith.mulf %115, %105 : vector<8x256xf32>
    %cst_41 = arith.constant 0.254829586 : f32
    %117 = vector.broadcast %cst_41 : f32 to vector<8x256xf32>
    %118 = arith.addf %116, %117 : vector<8x256xf32>
    %119 = arith.mulf %118, %105 : vector<8x256xf32>
    %cst_42 = arith.constant 0.000000e+00 : f32
    %120 = vector.broadcast %cst_42 : f32 to vector<8x256xf32>
    %121 = arith.subf %120, %99 : vector<8x256xf32>
    %122 = arith.mulf %121, %99 : vector<8x256xf32>
    %123 = math.exp %122 : vector<8x256xf32>
    %124 = arith.mulf %119, %123 : vector<8x256xf32>
    %cst_43 = arith.constant 1.000000e+00 : f32
    %125 = vector.broadcast %cst_43 : f32 to vector<8x256xf32>
    %126 = arith.subf %125, %124 : vector<8x256xf32>
    %cst_44 = arith.constant 0.000000e+00 : f32
    %127 = vector.broadcast %cst_44 : f32 to vector<8x256xf32>
    %128 = arith.cmpf oge, %98, %127 : vector<8x256xf32>
    %cst_45 = arith.constant 0.000000e+00 : f32
    %129 = vector.broadcast %cst_45 : f32 to vector<8x256xf32>
    %130 = arith.subf %129, %126 : vector<8x256xf32>
    %131 = arith.select %128, %126, %130 : vector<8x256xi1>, vector<8x256xf32>
    %cst_46 = arith.constant 1.000000e+00 : f32
    %132 = vector.broadcast %cst_46 : f32 to vector<8x256xf32>
    %133 = arith.addf %132, %131 : vector<8x256xf32>
    %134 = arith.mulf %96, %133 : vector<8x256xf32>
    %135 = arith.truncf %134 : vector<8x256xf32> to vector<8x256xbf16>
    %c0_47 = arith.constant 0 : index
    %c0_48 = arith.constant 0 : index
    %c0_49 = arith.constant 0 : index
    %136 = vector.load %arg8[%c0_47, %c0_48, %c0_49] : memref<1x8x256xbf16, #tpu.memory_space<vmem>>, vector<1x8x256xbf16>
    %137 = vector.shape_cast %136 : vector<1x8x256xbf16> to vector<8x256xbf16>
    %138 = vector.shape_cast %135 : vector<8x256xbf16> to vector<1x8x256xbf16>
    tpu.vector_store %arg8[%c0_47, %c0_48, %c0_49], %138 {strides = array<i32>} : memref<1x8x256xbf16, #tpu.memory_space<vmem>>, vector<1x8x256xbf16>,
    return
  }
  func.func @transform_0(%arg0: i32, %arg1: i32) -> (i32, i32, i32, i32) {
    %c4_i32 = arith.constant 4 : i32
    %0 = arith.muli %arg0, %c4_i32 : i32
    %1 = arith.addi %0, %arg1 : i32
    %c0_i32 = arith.constant 0 : i32
    %c0_i32_0 = arith.constant 0 : i32
    %c0_i32_1 = arith.constant 0 : i32
    %c0_i32_2 = arith.constant 0 : i32
    return %1, %c0_i32, %c0_i32_0, %c0_i32_1 : i32, i32, i32, i32
  }
  func.func @transform_1(%arg0: i32, %arg1: i32) -> (i32, i32, i32, i32) {
    %c4_i32 = arith.constant 4 : i32
    %0 = arith.muli %arg0, %c4_i32 : i32
    %1 = arith.addi %0, %arg1 : i32
    %c0_i32 = arith.constant 0 : i32
    %c0_i32_0 = arith.constant 0 : i32
    %c0_i32_1 = arith.constant 0 : i32
    %c0_i32_2 = arith.constant 0 : i32
    return %1, %c0_i32, %c0_i32_0, %c0_i32_1 : i32, i32, i32, i32
  }
  func.func @transform_2(%arg0: i32, %arg1: i32) -> (i32, i32) {
    %c0_i32 = arith.constant 0 : i32
    %c0_i32_0 = arith.constant 0 : i32
    %c0_i32_1 = arith.constant 0 : i32
    return %c0_i32, %c0_i32_0 : i32, i32
  }
  func.func @transform_3(%arg0: i32, %arg1: i32) -> (i32, i32) {
    %c0_i32 = arith.constant 0 : i32
    %c0_i32_0 = arith.constant 0 : i32
    %c0_i32_1 = arith.constant 0 : i32
    return %c0_i32, %c0_i32_0 : i32, i32
  }
  func.func @transform_4(%arg0: i32, %arg1: i32) -> (i32, i32) {
    %c0_i32 = arith.constant 0 : i32
    %c0_i32_0 = arith.constant 0 : i32
    %c0_i32_1 = arith.constant 0 : i32
    return %c0_i32, %c0_i32_0 : i32, i32
  }
  func.func @transform_5(%arg0: i32, %arg1: i32) -> (i32, i32) {
    %c0_i32 = arith.constant 0 : i32
    %c0_i32_0 = arith.constant 0 : i32
    %c0_i32_1 = arith.constant 0 : i32
    return %c0_i32, %c0_i32_0 : i32, i32
  }
  func.func @transform_6(%arg0: i32, %arg1: i32) -> (i32, i32, i32) {
    %c0_i32 = arith.constant 0 : i32
    %c0_i32_0 = arith.constant 0 : i32
    return %arg0, %c0_i32, %arg1 : i32, i32, i32
  }
}

</mosaic_0001>

<llo_original>
// kernel: fwd.1
$region0: #{fwd.1}
  #allocation0 [shape = 'u32[]', space=smem, size = 0x4, offset = 0x4, fixed_abs, tag = 'smem constant byte address 0x4 - core index']
  #allocation1 [shape = 'u32[72,128]{1,0:T(1,128)}', space=vmem, size = 0x9000, scoped, tag = 'internal scratch']
  %s0 = inlined_call_operand.vmem [shape: bf16[8,6,34,4], index: 0, kind: input, shape index: {}]
  %s1 = inlined_call_operand.vmem [shape: bf16[8,12,34,4], index: 1, kind: input, shape index: {}]
  %s2 = inlined_call_operand.vmem [shape: bf16[72,8], index: 2, kind: input, shape index: {}]
  %s3 = inlined_call_operand.vmem [shape: f32[1,8], index: 3, kind: input, shape index: {}]
  %s4 = inlined_call_operand.vmem [shape: bf16[8,72], index: 4, kind: input, shape index: {}]
  %s5 = inlined_call_operand.vmem [shape: f32[8,1], index: 5, kind: input, shape index: {}]
  %s6 = inlined_call_operand.vmem [shape: bf16[2,8,1024], index: 6, kind: output, shape index: {}]
  %s7 = sld [smem:[#allocation0]]
  $region57: #{fwd.1} parent=0
    _
  %s9 = ssub.s32 1, %s7
  %s10 = scalar_select 0, %s9, %s7
  loop: start=0, step=1, limit=10
  $region2: #{fwd.1} parent=0 // loop_pre_header
    _
  $region3: #{fwd.1} parent=0 // loop_header
    %s12 = sphi 0, %s16
    %p13 = scmp.ge.s32.totalorder %s12, 10
    %s19 = sphi 0, %s31
    %s20 = sphi 0, %s27
    %s21 = sphi 0, %s19
    %s22 = sphi 0, %s20
    %s23 = sphi 0, %s21
    %s24 = sphi 0, %s22
    %s38 = sphi 0, %s40
    %s41 = sphi 0, %s38
    %s42 = sphi 0, %s41
    %s58 = sphi 0, %s42
    %s68 = sphi 0, %s70
    %s71 = sphi 0, %s68
    %s72 = sphi 0, %s71
    %s88 = sphi 0, %s72
    %s92 = sphi 0, %s92
    %s94 = sphi 0, %s92
    %s95 = sphi 0, %s94
    %s109 = sphi 0, %s95
    %s113 = sphi 0, %s113
    %s115 = sphi 0, %s113
    %s116 = sphi 0, %s115
    %s130 = sphi 0, %s116
    %s134 = sphi 0, %s134
    %s136 = sphi 0, %s134
    %s137 = sphi 0, %s136
    %s151 = sphi 0, %s137
    %s155 = sphi 0, %s155
    %s157 = sphi 0, %s155
    %s158 = sphi 0, %s157
    %s172 = sphi 0, %s158
    %s180 = sphi 0, %s182
    %s183 = sphi 0, %s180
    %s184 = sphi 0, %s183
    %s200 = sphi 0, %s184
  $region4: #{fwd.1} parent=0 // loop_header_branch
    %15 = sbr.rel (%p13) target = $region8
  $region5: #{fwd.1} parent=0 // loop_body
    %s17 = ssub.s32 %s12, 1
    %s18 = ssub.s32 %s12, 2
    %s25 = sadd.s32 1, %s20
    %p26 = scmp.ge.s32.totalorder %s25, 4
    %s27 = scalar_select %p26, 0, %s25
    %s28 = sadd.s32 1, %s19
    %s29 = scalar_select %p26, %s28, %s19
    %p30 = scmp.ge.s32.totalorder %s29, 2
    %s31 = scalar_select %p30, 0, %s29
    %s32 = smul.u32 %s19, 4
    %s33 = sadd.s32 %s32, %s20
    %s34 = smul.u32 %s31, 4
    %s35 = sadd.s32 %s34, %s27
    %s36 = ssub.s32 %s33, %s35
    %p37 = scmp.eq.s32.totalorder %s36, 0
    %s39 = sadd.s32 %s38, 1
    %s40 = scalar_select %p37, %s38, %s39
    %p43 = pneg %p37
    %p44 = scmp.eq.s32.totalorder %s12, 7
    %p45 = por %p43, %p44
    %p46 = scmp.ne.s32.totalorder %s38, %s41
    %p47 = scmp.eq.s32.totalorder %s12, 0
    %p48 = por %p46, %p47
    %p49 = scmp.ne.s32.totalorder %s38, %s41
    %p50 = scmp.eq.s32.totalorder %s17, 7
    %p51 = por %p49, %p50
    %p52 = scmp.ne.s32.totalorder %s41, %s42
    %p53 = scmp.eq.s32.totalorder %s17, 0
    %p54 = por %p52, %p53
    %p55 = scmp.ne.s32.totalorder %s41, %s42
    %p56 = scmp.eq.s32.totalorder %s18, 7
    %p57 = por %p55, %p56
    %p59 = scmp.ne.s32.totalorder %s42, %s58
    %p60 = scmp.eq.s32.totalorder %s18, 0
    %p61 = por %p59, %p60
    %s62 = smul.u32 %s19, 4
    %s63 = sadd.s32 %s62, %s20
    %s64 = smul.u32 %s31, 4
    %s65 = sadd.s32 %s64, %s27
    %s66 = ssub.s32 %s63, %s65
    %p67 = scmp.eq.s32.totalorder %s66, 0
    %s69 = sadd.s32 %s68, 1
    %s70 = scalar_select %p67, %s68, %s69
    %p73 = pneg %p67
    %p74 = scmp.eq.s32.totalorder %s12, 7
    %p75 = por %p73, %p74
    %p76 = scmp.ne.s32.totalorder %s68, %s71
    %p77 = scmp.eq.s32.totalorder %s12, 0
    %p78 = por %p76, %p77
    %p79 = scmp.ne.s32.totalorder %s68, %s71
    %p80 = scmp.eq.s32.totalorder %s17, 7
    %p81 = por %p79, %p80
    %p82 = scmp.ne.s32.totalorder %s71, %s72
    %p83 = scmp.eq.s32.totalorder %s17, 0
    %p84 = por %p82, %p83
    %p85 = scmp.ne.s32.totalorder %s71, %s72
    %p86 = scmp.eq.s32.totalorder %s18, 7
    %p87 = por %p85, %p86
    %p89 = scmp.ne.s32.totalorder %s72, %s88
    %p90 = scmp.eq.s32.totalorder %s18, 0
    %p91 = por %p89, %p90
    %s93 = sadd.s32 %s92, 1
    %p96 = scmp.eq.s32.totalorder %s12, 7
    %p97 = scmp.ne.s32.totalorder %s92, %s94
    %p98 = scmp.eq.s32.totalorder %s12, 0
    %p99 = por %p97, %p98
    %p100 = scmp.ne.s32.totalorder %s92, %s94
    %p101 = scmp.eq.s32.totalorder %s17, 7
    %p102 = por %p100, %p101
    %p103 = scmp.ne.s32.totalorder %s94, %s95
    %p104 = scmp.eq.s32.totalorder %s17, 0
    %p105 = por %p103, %p104
    %p106 = scmp.ne.s32.totalorder %s94, %s95
    %p107 = scmp.eq.s32.totalorder %s18, 7
    %p108 = por %p106, %p107
    %p110 = scmp.ne.s32.totalorder %s95, %s109
    %p111 = scmp.eq.s32.totalorder %s18, 0
    %p112 = por %p110, %p111
    %s114 = sadd.s32 %s113, 1
    %p117 = scmp.eq.s32.totalorder %s12, 7
    %p118 = scmp.ne.s32.totalorder %s113, %s115
    %p119 = scmp.eq.s32.totalorder %s12, 0
    %p120 = por %p118, %p119
    %p121 = scmp.ne.s32.totalorder %s113, %s115
    %p122 = scmp.eq.s32.totalorder %s17, 7
    %p123 = por %p121, %p122
    %p124 = scmp.ne.s32.totalorder %s115, %s116
    %p125 = scmp.eq.s32.totalorder %s17, 0
    %p126 = por %p124, %p125
    %p127 = scmp.ne.s32.totalorder %s115, %s116
    %p128 = scmp.eq.s32.totalorder %s18, 7
    %p129 = por %p127, %p128
    %p131 = scmp.ne.s32.totalorder %s116, %s130
    %p132 = scmp.eq.s32.totalorder %s18, 0
    %p133 = por %p131, %p132
    %s135 = sadd.s32 %s134, 1
    %p138 = scmp.eq.s32.totalorder %s12, 7
    %p139 = scmp.ne.s32.totalorder %s134, %s136
    %p140 = scmp.eq.s32.totalorder %s12, 0
    %p141 = por %p139, %p140
    %p142 = scmp.ne.s32.totalorder %s134, %s136
    %p143 = scmp.eq.s32.totalorder %s17, 7
    %p144 = por %p142, %p143
    %p145 = scmp.ne.s32.totalorder %s136, %s137
    %p146 = scmp.eq.s32.totalorder %s17, 0
    %p147 = por %p145, %p146
    %p148 = scmp.ne.s32.totalorder %s136, %s137
    %p149 = scmp.eq.s32.totalorder %s18, 7
    %p150 = por %p148, %p149
    %p152 = scmp.ne.s32.totalorder %s137, %s151
    %p153 = scmp.eq.s32.totalorder %s18, 0
    %p154 = por %p152, %p153
    %s156 = sadd.s32 %s155, 1
    %p159 = scmp.eq.s32.totalorder %s12, 7
    %p160 = scmp.ne.s32.totalorder %s155, %s157
    %p161 = scmp.eq.s32.totalorder %s12, 0
    %p162 = por %p160, %p161
    %p163 = scmp.ne.s32.totalorder %s155, %s157
    %p164 = scmp.eq.s32.totalorder %s17, 7
    %p165 = por %p163, %p164
    %p166 = scmp.ne.s32.totalorder %s157, %s158
    %p167 = scmp.eq.s32.totalorder %s17, 0
    %p168 = por %p166, %p167
    %p169 = scmp.ne.s32.totalorder %s157, %s158
    %p170 = scmp.eq.s32.totalorder %s18, 7
    %p171 = por %p169, %p170
    %p173 = scmp.ne.s32.totalorder %s158, %s172
    %p174 = scmp.eq.s32.totalorder %s18, 0
    %p175 = por %p173, %p174
    %s176 = ssub.s32 %s19, %s31
    %s177 = ssub.s32 %s20, %s27
    %s178 = sor.u32 %s176, %s177
    %p179 = scmp.eq.s32.totalorder %s178, 0
    %s181 = sadd.s32 %s180, 1
    %s182 = scalar_select %p179, %s180, %s181
    %p185 = pneg %p179
    %p186 = scmp.eq.s32.totalorder %s12, 7
    %p187 = por %p185, %p186
    %p188 = scmp.ne.s32.totalorder %s180, %s183
    %p189 = scmp.eq.s32.totalorder %s12, 0
    %p190 = por %p188, %p189
    %p191 = scmp.ne.s32.totalorder %s180, %s183
    %p192 = scmp.eq.s32.totalorder %s17, 7
    %p193 = por %p191, %p192
    %p194 = scmp.ne.s32.totalorder %s183, %s184
    %p195 = scmp.eq.s32.totalorder %s17, 0
    %p196 = por %p194, %p195
    %p197 = scmp.ne.s32.totalorder %s183, %s184
    %p198 = scmp.eq.s32.totalorder %s18, 7
    %p199 = por %p197, %p198
    %p201 = scmp.ne.s32.totalorder %s184, %s200
    %p202 = scmp.eq.s32.totalorder %s18, 0
    %p203 = por %p201, %p202
    %p204 = scmp.le.s32.totalorder 1, %s12
    %p205 = scmp.lt.s32.totalorder %s12, 9
    %p206 = pnand %p204, %p205
    %p207 = pneg %p206
    // Predicated region
    $region9: #{fwd.1} parent=5 // pred_check
      _
    $region10: #{fwd.1} parent=5 // pred_check_branch
      %209 = sbr.rel (%p206) target = $region12
    $region11: #{fwd.1} parent=5 // pred_region
      %s210 = ssub.s32 %s12, 1
      // Predicated region
      $region13: #{fwd.1} parent=11 // pred_check
        %p211 = pneg %p105
      $region14: #{fwd.1} parent=11 // pred_check_branch
        %213 = sbr.rel (%p211) target = $region16
      $region15: #{fwd.1} parent=11 // pred_region
        _
      $region16: #{fwd.1} parent=11 // pred_fallthru
        _
      // Predicated region
      $region17: #{fwd.1} parent=11 // pred_check
        %p214 = pneg %p126
      $region18: #{fwd.1} parent=11 // pred_check_branch
        %216 = sbr.rel (%p214) target = $region20
      $region19: #{fwd.1} parent=11 // pred_region
        _
      $region20: #{fwd.1} parent=11 // pred_fallthru
        _
      // Predicated region
      $region21: #{fwd.1} parent=11 // pred_check
        %p217 = pneg %p147
      $region22: #{fwd.1} parent=11 // pred_check_branch
        %219 = sbr.rel (%p217) target = $region24
      $region23: #{fwd.1} parent=11 // pred_region
        _
      $region24: #{fwd.1} parent=11 // pred_fallthru
        _
      // Predicated region
      $region25: #{fwd.1} parent=11 // pred_check
        %p220 = pneg %p168
      $region26: #{fwd.1} parent=11 // pred_check_branch
        %222 = sbr.rel (%p220) target = $region28
      $region27: #{fwd.1} parent=11 // pred_region
        _
      $region28: #{fwd.1} parent=11 // pred_fallthru
        _
    $region12: #{fwd.1} parent=5 // pred_fallthru
      _
    %p223 = scmp.lt.s32.totalorder %s12, 8
    // Predicated region
    $region29: #{fwd.1} parent=5 // pred_check
      %p224 = pneg %p223
    $region30: #{fwd.1} parent=5 // pred_check_branch
      %226 = sbr.rel (%p224) target = $region32
    $region31: #{fwd.1} parent=5 // pred_region
      // Predicated region
      $region33: #{fwd.1} parent=31 // pred_check
        %p227 = pneg %p48
      $region34: #{fwd.1} parent=31 // pred_check_branch
        %229 = sbr.rel (%p227) target = $region36
      $region35: #{fwd.1} parent=31 // pred_region
        %s230 = smul.u32 %s19, 4
        %s231 = sadd.s32 %s230, %s20
        %p232 = scmp.lt.s32.totalorder %s231, 7
        %s233 = scalar_select %p232, %s231, 7
        %s234 = smul.addr %s233, 30
        %s235 = smul.addr %s234, 4
        %s236 = scalar_lea.vmem %s0, %s235
        %s237 = smul.u32 %s19, 4
        %s238 = sadd.s32 %s237, %s20
      $region36: #{fwd.1} parent=31 // pred_fallthru
        _
      // Predicated region
      $region37: #{fwd.1} parent=31 // pred_check
        %p239 = pneg %p78
      $region38: #{fwd.1} parent=31 // pred_check_branch
        %241 = sbr.rel (%p239) target = $region40
      $region39: #{fwd.1} parent=31 // pred_region
        %s242 = smul.u32 %s19, 4
        %s243 = sadd.s32 %s242, %s20
        %p244 = scmp.lt.s32.totalorder %s243, 7
        %s245 = scalar_select %p244, %s243, 7
        %s246 = smul.addr %s245, 60
        %s247 = smul.addr %s246, 4
        %s248 = scalar_lea.vmem %s1, %s247
        %s249 = smul.u32 %s19, 4
        %s250 = sadd.s32 %s249, %s20
      $region40: #{fwd.1} parent=31 // pred_fallthru
        _
    $region32: #{fwd.1} parent=5 // pred_fallthru
      _
    %p251 = scmp.le.s32.totalorder 1, %s12
    %p252 = scmp.lt.s32.totalorder %s12, 9
    %p253 = pnand %p251, %p252
    %p254 = pneg %p253
    // Predicated region
    $region41: #{fwd.1} parent=5 // pred_check
      _
    $region42: #{fwd.1} parent=5 // pred_check_branch
      %256 = sbr.rel (%p253) target = $region44
    $region43: #{fwd.1} parent=5 // pred_region
      %s257 = ssub.s32 %s12, 1
      %s258 = smul.u32 %s21, 4
      %s259 = sadd.s32 %s258, %s22
      %p260 = scmp.lt.s32.totalorder %s259, 7
      %s261 = scalar_select %p260, %s259, 7
      %s262 = smul.addr %s261, 30
      %s263 = smul.addr %s262, 4
      %s264 = scalar_lea.vmem %s0, %s263
      %p265 = pneg %p54
      %p266 = pneg %p51
      %s267 = smul.u32 %s21, 4
      %s268 = sadd.s32 %s267, %s22
      %p269 = scmp.lt.s32.totalorder %s268, 7
      %s270 = scalar_select %p269, %s268, 7
      %s271 = smul.addr %s270, 60
      %s272 = smul.addr %s271, 4
      %s273 = scalar_lea.vmem %s1, %s272
      %p274 = pneg %p84
      %p275 = pneg %p81
      %p276 = pneg %p105
      %p277 = pneg %p102
      %p278 = pneg %p126
      %p279 = pneg %p123
      %p280 = pneg %p147
      %p281 = pneg %p144
      %p282 = pneg %p168
      %p283 = pneg %p165
      %p284 = pneg %p196
      %p285 = pneg %p193
      %s286 = smul.u32 2, %s22
      %p287 = scmp.lt.s32.totalorder %s21, 1
      %s288 = scalar_select %p287, %s21, 1
      %p289 = scmp.lt.s32.totalorder %s286, 7
      %s290 = scalar_select %p289, %s286, 7
      %s291 = smul.addr %s288, 8
      %s292 = sadd.s32 %s290, %s291
      %s293 = smul.addr %s292, 4
      %s294 = scalar_lea.vmem %s6, %s293
      %s295 = smul.u32 %s21, 4
      %s296 = sadd.s32 %s295, %s22
      %p297 = scmp.lt.s32.totalorder %s296, 7
      %s298 = scalar_select %p297, %s296, 7
      %s299 = smul.addr %s298, 30
      %s300 = smul.addr %s299, 4
      %s301 = scalar_lea.vmem %s0, %s300
      %s302 = smul.u32 %s21, 4
      %s303 = sadd.s32 %s302, %s22
      %s304 = smul.u32 %s21, 4
      %s305 = sadd.s32 %s304, %s22
      %p306 = scmp.lt.s32.totalorder %s305, 7
      %s307 = scalar_select %p306, %s305, 7
      %s308 = smul.addr %s307, 60
      %s309 = smul.addr %s308, 4
      %s310 = scalar_lea.vmem %s1, %s309
      %s311 = smul.u32 %s21, 4
      %s312 = sadd.s32 %s311, %s22
      %s313 = smul.u32 2, %s22
      %p314 = scmp.lt.s32.totalorder %s21, 1
      %s315 = scalar_select %p314, %s21, 1
      %p316 = scmp.lt.s32.totalorder %s313, 7
      %s317 = scalar_select %p316, %s313, 7
      %s318 = smul.addr %s315, 8
      %s319 = sadd.s32 %s317, %s318
      %s320 = smul.addr %s319, 4
      %s321 = scalar_lea.vmem %s6, %s320
      %s322 = smul.u32 2, %s22
      %v324 = vld [vmem:[%s301] sm:$0xf]
      %v325 = vld [vmem:[%s301 + $0x4] sm:$0xf]
      %v326 = vld [vmem:[%s301 + $0x8] sm:$0xf]
      %v327 = vld [vmem:[%s301 + $0xc] sm:$0xf]
      %v328 = vld [vmem:[%s301 + $0x10] sm:$0x1]
      %v329 = vld [vmem:[%s301 + $0x14] sm:$0xf]
      %v330 = vld [vmem:[%s301 + $0x18] sm:$0xf]
      %v331 = vld [vmem:[%s301 + $0x1c] sm:$0xf]
      %v332 = vld [vmem:[%s301 + $0x20] sm:$0xf]
      %v333 = vld [vmem:[%s301 + $0x24] sm:$0x1]
      %v334 = vld [vmem:[%s301 + $0x28] sm:$0xf]
      %v335 = vld [vmem:[%s301 + $0x2c] sm:$0xf]
      %v336 = vld [vmem:[%s301 + $0x30] sm:$0xf]
      %v337 = vld [vmem:[%s301 + $0x34] sm:$0xf]
      %v338 = vld [vmem:[%s301 + $0x38] sm:$0x1]
      %v339 = vld [vmem:[%s301 + $0x3c] sm:$0xf]
      %v340 = vld [vmem:[%s301 + $0x40] sm:$0xf]
      %v341 = vld [vmem:[%s301 + $0x44] sm:$0xf]
      %v342 = vld [vmem:[%s301 + $0x48] sm:$0xf]
      %v343 = vld [vmem:[%s301 + $0x4c] sm:$0x1]
      %v344 = vld [vmem:[%s301 + $0x50] sm:$0xf]
      %v345 = vld [vmem:[%s301 + $0x54] sm:$0xf]
      %v346 = vld [vmem:[%s301 + $0x58] sm:$0xf]
      %v347 = vld [vmem:[%s301 + $0x5c] sm:$0xf]
      %v348 = vld [vmem:[%s301 + $0x60] sm:$0x1]
      %v349 = vld [vmem:[%s301 + $0x64] sm:$0xf]
      %v350 = vld [vmem:[%s301 + $0x68] sm:$0xf]
      %v351 = vld [vmem:[%s301 + $0x6c] sm:$0xf]
      %v352 = vld [vmem:[%s301 + $0x70] sm:$0xf]
      %v353 = vld [vmem:[%s301 + $0x74] sm:$0x1]
      %v354 = vld [vmem:[%s310] sm:$0xf]
      %v355 = vld [vmem:[%s310 + $0x4] sm:$0xf]
      %v356 = vld [vmem:[%s310 + $0x8] sm:$0xf]
      %v357 = vld [vmem:[%s310 + $0xc] sm:$0xf]
      %v358 = vld [vmem:[%s310 + $0x10] sm:$0x1]
      %v359 = vld [vmem:[%s310 + $0x14] sm:$0xf]
      %v360 = vld [vmem:[%s310 + $0x18] sm:$0xf]
      %v361 = vld [vmem:[%s310 + $0x1c] sm:$0xf]
      %v362 = vld [vmem:[%s310 + $0x20] sm:$0xf]
      %v363 = vld [vmem:[%s310 + $0x24] sm:$0x1]
      %v364 = vld [vmem:[%s310 + $0x28] sm:$0xf]
      %v365 = vld [vmem:[%s310 + $0x2c] sm:$0xf]
      %v366 = vld [vmem:[%s310 + $0x30] sm:$0xf]
      %v367 = vld [vmem:[%s310 + $0x34] sm:$0xf]
      %v368 = vld [vmem:[%s310 + $0x38] sm:$0x1]
      %v369 = vld [vmem:[%s310 + $0x3c] sm:$0xf]
      %v370 = vld [vmem:[%s310 + $0x40] sm:$0xf]
      %v371 = vld [vmem:[%s310 + $0x44] sm:$0xf]
      %v372 = vld [vmem:[%s310 + $0x48] sm:$0xf]
      %v373 = vld [vmem:[%s310 + $0x4c] sm:$0x1]
      %v374 = vld [vmem:[%s310 + $0x50] sm:$0xf]
      %v375 = vld [vmem:[%s310 + $0x54] sm:$0xf]
      %v376 = vld [vmem:[%s310 + $0x58] sm:$0xf]
      %v377 = vld [vmem:[%s310 + $0x5c] sm:$0xf]
      %v378 = vld [vmem:[%s310 + $0x60] sm:$0x1]
      %v379 = vld [vmem:[%s310 + $0x64] sm:$0xf]
      %v380 = vld [vmem:[%s310 + $0x68] sm:$0xf]
      %v381 = vld [vmem:[%s310 + $0x6c] sm:$0xf]
      %v382 = vld [vmem:[%s310 + $0x70] sm:$0xf]
      %v383 = vld [vmem:[%s310 + $0x74] sm:$0x1]
      %v384 = vld [vmem:[%s310 + $0x78] sm:$0xf]
      %v385 = vld [vmem:[%s310 + $0x7c] sm:$0xf]
      %v386 = vld [vmem:[%s310 + $0x80] sm:$0xf]
      %v387 = vld [vmem:[%s310 + $0x84] sm:$0xf]
      %v388 = vld [vmem:[%s310 + $0x88] sm:$0x1]
      %v389 = vld [vmem:[%s310 + $0x8c] sm:$0xf]
      %v390 = vld [vmem:[%s310 + $0x90] sm:$0xf]
      %v391 = vld [vmem:[%s310 + $0x94] sm:$0xf]
      %v392 = vld [vmem:[%s310 + $0x98] sm:$0xf]
      %v393 = vld [vmem:[%s310 + $0x9c] sm:$0x1]
      %v394 = vld [vmem:[%s310 + $0xa0] sm:$0xf]
      %v395 = vld [vmem:[%s310 + $0xa4] sm:$0xf]
      %v396 = vld [vmem:[%s310 + $0xa8] sm:$0xf]
      %v397 = vld [vmem:[%s310 + $0xac] sm:$0xf]
      %v398 = vld [vmem:[%s310 + $0xb0] sm:$0x1]
      %v399 = vld [vmem:[%s310 + $0xb4] sm:$0xf]
      %v400 = vld [vmem:[%s310 + $0xb8] sm:$0xf]
      %v401 = vld [vmem:[%s310 + $0xbc] sm:$0xf]
      %v402 = vld [vmem:[%s310 + $0xc0] sm:$0xf]
      %v403 = vld [vmem:[%s310 + $0xc4] sm:$0x1]
      %v404 = vld [vmem:[%s310 + $0xc8] sm:$0xf]
      %v405 = vld [vmem:[%s310 + $0xcc] sm:$0xf]
      %v406 = vld [vmem:[%s310 + $0xd0] sm:$0xf]
      %v407 = vld [vmem:[%s310 + $0xd4] sm:$0xf]
      %v408 = vld [vmem:[%s310 + $0xd8] sm:$0x1]
      %v409 = vld [vmem:[%s310 + $0xdc] sm:$0xf]
      %v410 = vld [vmem:[%s310 + $0xe0] sm:$0xf]
      %v411 = vld [vmem:[%s310 + $0xe4] sm:$0xf]
      %v412 = vld [vmem:[%s310 + $0xe8] sm:$0xf]
      %v413 = vld [vmem:[%s310 + $0xec] sm:$0x1]
      %v444 = vunpack.c.l.b16 %v324
      %v445 = vunpack.c.l.b16 %v325
      %v446 = vunpack.c.l.b16 %v326
      %v447 = vunpack.c.l.b16 %v327
      %v448 = vunpack.c.l.b16 %v328
      %v449 = vunpack.c.l.b16 %v329
      %v450 = vunpack.c.l.b16 %v330
      %v451 = vunpack.c.l.b16 %v331
      %v452 = vunpack.c.l.b16 %v332
      %v453 = vunpack.c.l.b16 %v333
      %v454 = vunpack.c.l.b16 %v334
      %v455 = vunpack.c.l.b16 %v335
      %v456 = vunpack.c.l.b16 %v336
      %v457 = vunpack.c.l.b16 %v337
      %v458 = vunpack.c.l.b16 %v338
      %v459 = vunpack.c.l.b16 %v339
      %v460 = vunpack.c.l.b16 %v340
      %v461 = vunpack.c.l.b16 %v341
      %v462 = vunpack.c.l.b16 %v342
      %v463 = vunpack.c.l.b16 %v343
      %v464 = vunpack.c.l.b16 %v344
      %v465 = vunpack.c.l.b16 %v345
      %v466 = vunpack.c.l.b16 %v346
      %v467 = vunpack.c.l.b16 %v347
      %v468 = vunpack.c.l.b16 %v348
      %v469 = vunpack.c.l.b16 %v349
      %v470 = vunpack.c.l.b16 %v350
      %v471 = vunpack.c.l.b16 %v351
      %v472 = vunpack.c.l.b16 %v352
      %v473 = vunpack.c.l.b16 %v353
      %v474 = vpack.c.b16 %v445, %v444
      %v475 = vpack.c.b16 %v447, %v446
      %v476 = vpack.c.b16 %v448, %v448
      %v477 = vpack.c.b16 %v450, %v449
      %v478 = vpack.c.b16 %v452, %v451
      %v479 = vpack.c.b16 %v453, %v453
      %v480 = vpack.c.b16 %v455, %v454
      %v481 = vpack.c.b16 %v457, %v456
      %v482 = vpack.c.b16 %v458, %v458
      %v483 = vpack.c.b16 %v460, %v459
      %v484 = vpack.c.b16 %v462, %v461
      %v485 = vpack.c.b16 %v463, %v463
      %v486 = vpack.c.b16 %v465, %v464
      %v487 = vpack.c.b16 %v467, %v466
      %v488 = vpack.c.b16 %v468, %v468
      %v489 = vpack.c.b16 %v470, %v469
      %v490 = vpack.c.b16 %v472, %v471
      %v491 = vpack.c.b16 %v473, %v473
      %v552 = vunpack.c.l.b16 %v354
      %v553 = vunpack.c.l.b16 %v355
      %v554 = vunpack.c.l.b16 %v356
      %v555 = vunpack.c.l.b16 %v357
      %v556 = vunpack.c.l.b16 %v358
      %v557 = vunpack.c.l.b16 %v359
      %v558 = vunpack.c.l.b16 %v360
      %v559 = vunpack.c.l.b16 %v361
      %v560 = vunpack.c.l.b16 %v362
      %v561 = vunpack.c.l.b16 %v363
      %v562 = vunpack.c.l.b16 %v364
      %v563 = vunpack.c.l.b16 %v365
      %v564 = vunpack.c.l.b16 %v366
      %v565 = vunpack.c.l.b16 %v367
      %v566 = vunpack.c.l.b16 %v368
      %v567 = vunpack.c.l.b16 %v369
      %v568 = vunpack.c.l.b16 %v370
      %v569 = vunpack.c.l.b16 %v371
      %v570 = vunpack.c.l.b16 %v372
      %v571 = vunpack.c.l.b16 %v373
      %v572 = vunpack.c.l.b16 %v374
      %v573 = vunpack.c.l.b16 %v375
      %v574 = vunpack.c.l.b16 %v376
      %v575 = vunpack.c.l.b16 %v377
      %v576 = vunpack.c.l.b16 %v378
      %v577 = vunpack.c.l.b16 %v379
      %v578 = vunpack.c.l.b16 %v380
      %v579 = vunpack.c.l.b16 %v381
      %v580 = vunpack.c.l.b16 %v382
      %v581 = vunpack.c.l.b16 %v383
      %v582 = vunpack.c.l.b16 %v384
      %v583 = vunpack.c.l.b16 %v385
      %v584 = vunpack.c.l.b16 %v386
      %v585 = vunpack.c.l.b16 %v387
      %v586 = vunpack.c.l.b16 %v388
      %v587 = vunpack.c.l.b16 %v389
      %v588 = vunpack.c.l.b16 %v390
      %v589 = vunpack.c.l.b16 %v391
      %v590 = vunpack.c.l.b16 %v392
      %v591 = vunpack.c.l.b16 %v393
      %v592 = vunpack.c.l.b16 %v394
      %v593 = vunpack.c.l.b16 %v395
      %v594 = vunpack.c.l.b16 %v396
      %v595 = vunpack.c.l.b16 %v397
      %v596 = vunpack.c.l.b16 %v398
      %v597 = vunpack.c.l.b16 %v399
      %v598 = vunpack.c.l.b16 %v400
      %v599 = vunpack.c.l.b16 %v401
      %v600 = vunpack.c.l.b16 %v402
      %v601 = vunpack.c.l.b16 %v403
      %v602 = vunpack.c.l.b16 %v404
      %v603 = vunpack.c.l.b16 %v405
      %v604 = vunpack.c.l.b16 %v406
      %v605 = vunpack.c.l.b16 %v407
      %v606 = vunpack.c.l.b16 %v408
      %v607 = vunpack.c.l.b16 %v409
      %v608 = vunpack.c.l.b16 %v410
      %v609 = vunpack.c.l.b16 %v411
      %v610 = vunpack.c.l.b16 %v412
      %v611 = vunpack.c.l.b16 %v413
      %v612 = vpack.c.b16 %v553, %v552
      %v613 = vpack.c.b16 %v555, %v554
      %v614 = vpack.c.b16 %v556, %v556
      %v615 = vpack.c.b16 %v558, %v557
      %v616 = vpack.c.b16 %v560, %v559
      %v617 = vpack.c.b16 %v561, %v561
      %v618 = vpack.c.b16 %v563, %v562
      %v619 = vpack.c.b16 %v565, %v564
      %v620 = vpack.c.b16 %v566, %v566
      %v621 = vpack.c.b16 %v568, %v567
      %v622 = vpack.c.b16 %v570, %v569
      %v623 = vpack.c.b16 %v571, %v571
      %v624 = vpack.c.b16 %v573, %v572
      %v625 = vpack.c.b16 %v575, %v574
      %v626 = vpack.c.b16 %v576, %v576
      %v627 = vpack.c.b16 %v578, %v577
      %v628 = vpack.c.b16 %v580, %v579
      %v629 = vpack.c.b16 %v581, %v581
      %v630 = vpack.c.b16 %v583, %v582
      %v631 = vpack.c.b16 %v585, %v584
      %v632 = vpack.c.b16 %v586, %v586
      %v633 = vpack.c.b16 %v588, %v587
      %v634 = vpack.c.b16 %v590, %v589
      %v635 = vpack.c.b16 %v591, %v591
      %v636 = vpack.c.b16 %v593, %v592
      %v637 = vpack.c.b16 %v595, %v594
      %v638 = vpack.c.b16 %v596, %v596
      %v639 = vpack.c.b16 %v598, %v597
      %v640 = vpack.c.b16 %v600, %v599
      %v641 = vpack.c.b16 %v601, %v601
      %v642 = vpack.c.b16 %v603, %v602
      %v643 = vpack.c.b16 %v605, %v604
      %v644 = vpack.c.b16 %v606, %v606
      %v645 = vpack.c.b16 %v608, %v607
      %v646 = vpack.c.b16 %v610, %v609
      %v647 = vpack.c.b16 %v611, %v611
      %648 = vrot.lane.b32.xlu0 %v612, 4
      %v649 = vpop.permute.xlu0 %648
      %650 = vrot.lane.b32.xlu0 %v613, 4
      %v651 = vpop.permute.xlu0 %650
      %652 = vrot.lane.b32.xlu0 %v614, 4
      %v653 = vpop.permute.xlu0 %652
      %654 = vrot.lane.b32.xlu0 %v615, 4
      %v655 = vpop.permute.xlu0 %654
      %656 = vrot.lane.b32.xlu0 %v616, 4
      %v657 = vpop.permute.xlu0 %656
      %658 = vrot.lane.b32.xlu0 %v617, 4
      %v659 = vpop.permute.xlu0 %658
      %660 = vrot.lane.b32.xlu0 %v618, 4
      %v661 = vpop.permute.xlu0 %660
      %662 = vrot.lane.b32.xlu0 %v619, 4
      %v663 = vpop.permute.xlu0 %662
      %664 = vrot.lane.b32.xlu0 %v620, 4
      %v665 = vpop.permute.xlu0 %664
      %666 = vrot.lane.b32.xlu0 %v621, 4
      %v667 = vpop.permute.xlu0 %666
      %668 = vrot.lane.b32.xlu0 %v622, 4
      %v669 = vpop.permute.xlu0 %668
      %670 = vrot.lane.b32.xlu0 %v623, 4
      %v671 = vpop.permute.xlu0 %670
      %672 = vrot.lane.b32.xlu0 %v624, 4
      %v673 = vpop.permute.xlu0 %672
      %674 = vrot.lane.b32.xlu0 %v625, 4
      %v675 = vpop.permute.xlu0 %674
      %676 = vrot.lane.b32.xlu0 %v626, 4
      %v677 = vpop.permute.xlu0 %676
      %678 = vrot.lane.b32.xlu0 %v627, 4
      %v679 = vpop.permute.xlu0 %678
      %680 = vrot.lane.b32.xlu0 %v628, 4
      %v681 = vpop.permute.xlu0 %680
      %682 = vrot.lane.b32.xlu0 %v629, 4
      %v683 = vpop.permute.xlu0 %682
      %684 = vrot.lane.b32.xlu0 %v630, 4
      %v685 = vpop.permute.xlu0 %684
      %686 = vrot.lane.b32.xlu0 %v631, 4
      %v687 = vpop.permute.xlu0 %686
      %688 = vrot.lane.b32.xlu0 %v632, 4
      %v689 = vpop.permute.xlu0 %688
      %690 = vrot.lane.b32.xlu0 %v633, 4
      %v691 = vpop.permute.xlu0 %690
      %692 = vrot.lane.b32.xlu0 %v634, 4
      %v693 = vpop.permute.xlu0 %692
      %694 = vrot.lane.b32.xlu0 %v635, 4
      %v695 = vpop.permute.xlu0 %694
      %696 = vrot.lane.b32.xlu0 %v636, 4
      %v697 = vpop.permute.xlu0 %696
      %698 = vrot.lane.b32.xlu0 %v637, 4
      %v699 = vpop.permute.xlu0 %698
      %700 = vrot.lane.b32.xlu0 %v638, 4
      %v701 = vpop.permute.xlu0 %700
      %702 = vrot.lane.b32.xlu0 %v639, 4
      %v703 = vpop.permute.xlu0 %702
      %704 = vrot.lane.b32.xlu0 %v640, 4
      %v705 = vpop.permute.xlu0 %704
      %706 = vrot.lane.b32.xlu0 %v641, 4
      %v707 = vpop.permute.xlu0 %706
      %708 = vrot.lane.b32.xlu0 %v642, 4
      %v709 = vpop.permute.xlu0 %708
      %710 = vrot.lane.b32.xlu0 %v643, 4
      %v711 = vpop.permute.xlu0 %710
      %712 = vrot.lane.b32.xlu0 %v644, 4
      %v713 = vpop.permute.xlu0 %712
      %714 = vrot.lane.b32.xlu0 %v645, 4
      %v715 = vpop.permute.xlu0 %714
      %716 = vrot.lane.b32.xlu0 %v646, 4
      %v717 = vpop.permute.xlu0 %716
      %718 = vrot.lane.b32.xlu0 %v647, 4
      %v719 = vpop.permute.xlu0 %718
      %vm720 = vcmask 31744
      %v723 = vsel %vm720, %v474, %v649
      %v726 = vsel %vm720, %v475, %v651
      %v729 = vsel %vm720, %v476, %v653
      %v731 = vsel %vm720, %v474, %v655
      %v733 = vsel %vm720, %v475, %v657
      %v735 = vsel %vm720, %v476, %v659
      %v738 = vsel %vm720, %v477, %v661
      %v741 = vsel %vm720, %v478, %v663
      %v744 = vsel %vm720, %v479, %v665
      %v746 = vsel %vm720, %v477, %v667
      %v748 = vsel %vm720, %v478, %v669
      %v750 = vsel %vm720, %v479, %v671
      %v753 = vsel %vm720, %v480, %v673
      %v756 = vsel %vm720, %v481, %v675
      %v759 = vsel %vm720, %v482, %v677
      %v761 = vsel %vm720, %v480, %v679
      %v763 = vsel %vm720, %v481, %v681
      %v765 = vsel %vm720, %v482, %v683
      %v768 = vsel %vm720, %v483, %v685
      %v771 = vsel %vm720, %v484, %v687
      %v774 = vsel %vm720, %v485, %v689
      %v776 = vsel %vm720, %v483, %v691
      %v778 = vsel %vm720, %v484, %v693
      %v780 = vsel %vm720, %v485, %v695
      %v783 = vsel %vm720, %v486, %v697
      %v786 = vsel %vm720, %v487, %v699
      %v789 = vsel %vm720, %v488, %v701
      %v791 = vsel %vm720, %v486, %v703
      %v793 = vsel %vm720, %v487, %v705
      %v795 = vsel %vm720, %v488, %v707
      %v798 = vsel %vm720, %v489, %v709
      %v801 = vsel %vm720, %v490, %v711
      %v804 = vsel %vm720, %v491, %v713
      %v806 = vsel %vm720, %v489, %v715
      %v808 = vsel %vm720, %v490, %v717
      %v810 = vsel %vm720, %v491, %v719
      %vm811 = vsmask.f32 7424
      %v812 = vshrl.u32 %v723, 16
      %v814 = vshll.u32 %v723, 16
      %v816 = vrot.slane %v814, 1
      %v817 = vor.u32 %v812, %v816
      %v818 = vshll.u32 %v726, 16
      %v820 = vrot.slane %v818, 1
      %v821 = vsel %vm811, %v817, %v820
      %v822 = vshrl.u32 %v726, 16
      %v824 = vor.u32 %v822, %v820
      %v825 = vshll.u32 %v729, 16
      %v827 = vrot.slane %v825, 1
      %v828 = vsel %vm811, %v824, %v827
      %v829 = vshrl.u32 %v731, 16
      %v831 = vshll.u32 %v731, 16
      %v833 = vrot.slane %v831, 1
      %v834 = vor.u32 %v829, %v833
      %v835 = vshll.u32 %v733, 16
      %v837 = vrot.slane %v835, 1
      %v838 = vsel %vm811, %v834, %v837
      %v839 = vshrl.u32 %v733, 16
      %v841 = vor.u32 %v839, %v837
      %v842 = vshll.u32 %v735, 16
      %v844 = vrot.slane %v842, 1
      %v845 = vsel %vm811, %v841, %v844
      %v846 = vshrl.u32 %v738, 16
      %v848 = vshll.u32 %v738, 16
      %v850 = vrot.slane %v848, 1
      %v851 = vor.u32 %v846, %v850
      %v852 = vshll.u32 %v741, 16
      %v854 = vrot.slane %v852, 1
      %v855 = vsel %vm811, %v851, %v854
      %v856 = vshrl.u32 %v741, 16
      %v858 = vor.u32 %v856, %v854
      %v859 = vshll.u32 %v744, 16
      %v861 = vrot.slane %v859, 1
      %v862 = vsel %vm811, %v858, %v861
      %v863 = vshrl.u32 %v746, 16
      %v865 = vshll.u32 %v746, 16
      %v867 = vrot.slane %v865, 1
      %v868 = vor.u32 %v863, %v867
      %v869 = vshll.u32 %v748, 16
      %v871 = vrot.slane %v869, 1
      %v872 = vsel %vm811, %v868, %v871
      %v873 = vshrl.u32 %v748, 16
      %v875 = vor.u32 %v873, %v871
      %v876 = vshll.u32 %v750, 16
      %v878 = vrot.slane %v876, 1
      %v879 = vsel %vm811, %v875, %v878
      %v880 = vshrl.u32 %v753, 16
      %v882 = vshll.u32 %v753, 16
      %v884 = vrot.slane %v882, 1
      %v885 = vor.u32 %v880, %v884
      %v886 = vshll.u32 %v756, 16
      %v888 = vrot.slane %v886, 1
      %v889 = vsel %vm811, %v885, %v888
      %v890 = vshrl.u32 %v756, 16
      %v892 = vor.u32 %v890, %v888
      %v893 = vshll.u32 %v759, 16
      %v895 = vrot.slane %v893, 1
      %v896 = vsel %vm811, %v892, %v895
      %v897 = vshrl.u32 %v761, 16
      %v899 = vshll.u32 %v761, 16
      %v901 = vrot.slane %v899, 1
      %v902 = vor.u32 %v897, %v901
      %v903 = vshll.u32 %v763, 16
      %v905 = vrot.slane %v903, 1
      %v906 = vsel %vm811, %v902, %v905
      %v907 = vshrl.u32 %v763, 16
      %v909 = vor.u32 %v907, %v905
      %v910 = vshll.u32 %v765, 16
      %v912 = vrot.slane %v910, 1
      %v913 = vsel %vm811, %v909, %v912
      %v914 = vshrl.u32 %v768, 16
      %v916 = vshll.u32 %v768, 16
      %v918 = vrot.slane %v916, 1
      %v919 = vor.u32 %v914, %v918
      %v920 = vshll.u32 %v771, 16
      %v922 = vrot.slane %v920, 1
      %v923 = vsel %vm811, %v919, %v922
      %v924 = vshrl.u32 %v771, 16
      %v926 = vor.u32 %v924, %v922
      %v927 = vshll.u32 %v774, 16
      %v929 = vrot.slane %v927, 1
      %v930 = vsel %vm811, %v926, %v929
      %v931 = vshrl.u32 %v776, 16
      %v933 = vshll.u32 %v776, 16
      %v935 = vrot.slane %v933, 1
      %v936 = vor.u32 %v931, %v935
      %v937 = vshll.u32 %v778, 16
      %v939 = vrot.slane %v937, 1
      %v940 = vsel %vm811, %v936, %v939
      %v941 = vshrl.u32 %v778, 16
      %v943 = vor.u32 %v941, %v939
      %v944 = vshll.u32 %v780, 16
      %v946 = vrot.slane %v944, 1
      %v947 = vsel %vm811, %v943, %v946
      %v948 = vshrl.u32 %v783, 16
      %v950 = vshll.u32 %v783, 16
      %v952 = vrot.slane %v950, 1
      %v953 = vor.u32 %v948, %v952
      %v954 = vshll.u32 %v786, 16
      %v956 = vrot.slane %v954, 1
      %v957 = vsel %vm811, %v953, %v956
      %v958 = vshrl.u32 %v786, 16
      %v960 = vor.u32 %v958, %v956
      %v961 = vshll.u32 %v789, 16
      %v963 = vrot.slane %v961, 1
      %v964 = vsel %vm811, %v960, %v963
      %v965 = vshrl.u32 %v791, 16
      %v967 = vshll.u32 %v791, 16
      %v969 = vrot.slane %v967, 1
      %v970 = vor.u32 %v965, %v969
      %v971 = vshll.u32 %v793, 16
      %v973 = vrot.slane %v971, 1
      %v974 = vsel %vm811, %v970, %v973
      %v975 = vshrl.u32 %v793, 16
      %v977 = vor.u32 %v975, %v973
      %v978 = vshll.u32 %v795, 16
      %v980 = vrot.slane %v978, 1
      %v981 = vsel %vm811, %v977, %v980
      %v982 = vshrl.u32 %v798, 16
      %v984 = vshll.u32 %v798, 16
      %v986 = vrot.slane %v984, 1
      %v987 = vor.u32 %v982, %v986
      %v988 = vshll.u32 %v801, 16
      %v990 = vrot.slane %v988, 1
      %v991 = vsel %vm811, %v987, %v990
      %v992 = vshrl.u32 %v801, 16
      %v994 = vor.u32 %v992, %v990
      %v995 = vshll.u32 %v804, 16
      %v997 = vrot.slane %v995, 1
      %v998 = vsel %vm811, %v994, %v997
      %v999 = vshrl.u32 %v806, 16
      %v1001 = vshll.u32 %v806, 16
      %v1003 = vrot.slane %v1001, 1
      %v1004 = vor.u32 %v999, %v1003
      %v1005 = vshll.u32 %v808, 16
      %v1007 = vrot.slane %v1005, 1
      %v1008 = vsel %vm811, %v1004, %v1007
      %v1009 = vshrl.u32 %v808, 16
      %v1011 = vor.u32 %v1009, %v1007
      %v1012 = vshll.u32 %v810, 16
      %v1014 = vrot.slane %v1012, 1
      %v1015 = vsel %vm811, %v1011, %v1014
      %1016 = vrot.lane.b32.xlu0 %v821, 8
      %v1017 = vpop.permute.xlu0 %1016
      %1018 = vrot.lane.b32.xlu0 %v828, 8
      %v1019 = vpop.permute.xlu0 %1018
      %1020 = vrot.lane.b32.xlu0 %v838, 8
      %v1021 = vpop.permute.xlu0 %1020
      %1022 = vrot.lane.b32.xlu0 %v845, 8
      %v1023 = vpop.permute.xlu0 %1022
      %1024 = vrot.lane.b32.xlu0 %v855, 8
      %v1025 = vpop.permute.xlu0 %1024
      %1026 = vrot.lane.b32.xlu0 %v862, 8
      %v1027 = vpop.permute.xlu0 %1026
      %1028 = vrot.lane.b32.xlu0 %v872, 8
      %v1029 = vpop.permute.xlu0 %1028
      %1030 = vrot.lane.b32.xlu0 %v879, 8
      %v1031 = vpop.permute.xlu0 %1030
      %1032 = vrot.lane.b32.xlu0 %v889, 8
      %v1033 = vpop.permute.xlu0 %1032
      %1034 = vrot.lane.b32.xlu0 %v896, 8
      %v1035 = vpop.permute.xlu0 %1034
      %1036 = vrot.lane.b32.xlu0 %v906, 8
      %v1037 = vpop.permute.xlu0 %1036
      %1038 = vrot.lane.b32.xlu0 %v913, 8
      %v1039 = vpop.permute.xlu0 %1038
      %1040 = vrot.lane.b32.xlu0 %v923, 8
      %v1041 = vpop.permute.xlu0 %1040
      %1042 = vrot.lane.b32.xlu0 %v930, 8
      %v1043 = vpop.permute.xlu0 %1042
      %1044 = vrot.lane.b32.xlu0 %v940, 8
      %v1045 = vpop.permute.xlu0 %1044
      %1046 = vrot.lane.b32.xlu0 %v947, 8
      %v1047 = vpop.permute.xlu0 %1046
      %1048 = vrot.lane.b32.xlu0 %v957, 8
      %v1049 = vpop.permute.xlu0 %1048
      %1050 = vrot.lane.b32.xlu0 %v964, 8
      %v1051 = vpop.permute.xlu0 %1050
      %1052 = vrot.lane.b32.xlu0 %v974, 8
      %v1053 = vpop.permute.xlu0 %1052
      %1054 = vrot.lane.b32.xlu0 %v981, 8
      %v1055 = vpop.permute.xlu0 %1054
      %1056 = vrot.lane.b32.xlu0 %v991, 8
      %v1057 = vpop.permute.xlu0 %1056
      %1058 = vrot.lane.b32.xlu0 %v998, 8
      %v1059 = vpop.permute.xlu0 %1058
      %1060 = vrot.lane.b32.xlu0 %v1008, 8
      %v1061 = vpop.permute.xlu0 %1060
      %1062 = vrot.lane.b32.xlu0 %v1015, 8
      %v1063 = vpop.permute.xlu0 %1062
      %vm1100 = vcmask 1046528
      %v1101 = vrot.slane %v723, 1
      %v1102 = vrot.slane %v726, 1
      %v1103 = vsel %vm1100, %v1101, %v1102
      %v1104 = vrot.slane %v729, 1
      %v1105 = vsel %vm1100, %v1102, %v1104
      %v1106 = vrot.slane %v731, 1
      %v1107 = vrot.slane %v733, 1
      %v1108 = vsel %vm1100, %v1106, %v1107
      %v1109 = vrot.slane %v735, 1
      %v1110 = vsel %vm1100, %v1107, %v1109
      %v1111 = vrot.slane %v738, 1
      %v1112 = vrot.slane %v741, 1
      %v1113 = vsel %vm1100, %v1111, %v1112
      %v1114 = vrot.slane %v744, 1
      %v1115 = vsel %vm1100, %v1112, %v1114
      %v1116 = vrot.slane %v746, 1
      %v1117 = vrot.slane %v748, 1
      %v1118 = vsel %vm1100, %v1116, %v1117
      %v1119 = vrot.slane %v750, 1
      %v1120 = vsel %vm1100, %v1117, %v1119
      %v1121 = vrot.slane %v753, 1
      %v1122 = vrot.slane %v756, 1
      %v1123 = vsel %vm1100, %v1121, %v1122
      %v1124 = vrot.slane %v759, 1
      %v1125 = vsel %vm1100, %v1122, %v1124
      %v1126 = vrot.slane %v761, 1
      %v1127 = vrot.slane %v763, 1
      %v1128 = vsel %vm1100, %v1126, %v1127
      %v1129 = vrot.slane %v765, 1
      %v1130 = vsel %vm1100, %v1127, %v1129
      %v1131 = vrot.slane %v768, 1
      %v1132 = vrot.slane %v771, 1
      %v1133 = vsel %vm1100, %v1131, %v1132
      %v1134 = vrot.slane %v774, 1
      %v1135 = vsel %vm1100, %v1132, %v1134
      %v1136 = vrot.slane %v776, 1
      %v1137 = vrot.slane %v778, 1
      %v1138 = vsel %vm1100, %v1136, %v1137
      %v1139 = vrot.slane %v780, 1
      %v1140 = vsel %vm1100, %v1137, %v1139
      %v1141 = vrot.slane %v783, 1
      %v1142 = vrot.slane %v786, 1
      %v1143 = vsel %vm1100, %v1141, %v1142
      %v1144 = vrot.slane %v789, 1
      %v1145 = vsel %vm1100, %v1142, %v1144
      %v1146 = vrot.slane %v791, 1
      %v1147 = vrot.slane %v793, 1
      %v1148 = vsel %vm1100, %v1146, %v1147
      %v1149 = vrot.slane %v795, 1
      %v1150 = vsel %vm1100, %v1147, %v1149
      %v1151 = vrot.slane %v798, 1
      %v1152 = vrot.slane %v801, 1
      %v1153 = vsel %vm1100, %v1151, %v1152
      %v1154 = vrot.slane %v804, 1
      %v1155 = vsel %vm1100, %v1152, %v1154
      %v1156 = vrot.slane %v806, 1
      %v1157 = vrot.slane %v808, 1
      %v1158 = vsel %vm1100, %v1156, %v1157
      %v1159 = vrot.slane %v810, 1
      %v1160 = vsel %vm1100, %v1157, %v1159
      %1161 = vrot.lane.b32.xlu0 %v1103, 16
      %v1162 = vpop.permute.xlu0 %1161
      %1163 = vrot.lane.b32.xlu0 %v1105, 16
      %v1164 = vpop.permute.xlu0 %1163
      %1165 = vrot.lane.b32.xlu0 %v1108, 16
      %v1166 = vpop.permute.xlu0 %1165
      %1167 = vrot.lane.b32.xlu0 %v1110, 16
      %v1168 = vpop.permute.xlu0 %1167
      %1169 = vrot.lane.b32.xlu0 %v1113, 16
      %v1170 = vpop.permute.xlu0 %1169
      %1171 = vrot.lane.b32.xlu0 %v1115, 16
      %v1172 = vpop.permute.xlu0 %1171
      %1173 = vrot.lane.b32.xlu0 %v1118, 16
      %v1174 = vpop.permute.xlu0 %1173
      %1175 = vrot.lane.b32.xlu0 %v1120, 16
      %v1176 = vpop.permute.xlu0 %1175
      %1177 = vrot.lane.b32.xlu0 %v1123, 16
      %v1178 = vpop.permute.xlu0 %1177
      %1179 = vrot.lane.b32.xlu0 %v1125, 16
      %v1180 = vpop.permute.xlu0 %1179
      %1181 = vrot.lane.b32.xlu0 %v1128, 16
      %v1182 = vpop.permute.xlu0 %1181
      %1183 = vrot.lane.b32.xlu0 %v1130, 16
      %v1184 = vpop.permute.xlu0 %1183
      %1185 = vrot.lane.b32.xlu0 %v1133, 16
      %v1186 = vpop.permute.xlu0 %1185
      %1187 = vrot.lane.b32.xlu0 %v1135, 16
      %v1188 = vpop.permute.xlu0 %1187
      %1189 = vrot.lane.b32.xlu0 %v1138, 16
      %v1190 = vpop.permute.xlu0 %1189
      %1191 = vrot.lane.b32.xlu0 %v1140, 16
      %v1192 = vpop.permute.xlu0 %1191
      %1193 = vrot.lane.b32.xlu0 %v1143, 16
      %v1194 = vpop.permute.xlu0 %1193
      %1195 = vrot.lane.b32.xlu0 %v1145, 16
      %v1196 = vpop.permute.xlu0 %1195
      %1197 = vrot.lane.b32.xlu0 %v1148, 16
      %v1198 = vpop.permute.xlu0 %1197
      %1199 = vrot.lane.b32.xlu0 %v1150, 16
      %v1200 = vpop.permute.xlu0 %1199
      %1201 = vrot.lane.b32.xlu0 %v1153, 16
      %v1202 = vpop.permute.xlu0 %1201
      %1203 = vrot.lane.b32.xlu0 %v1155, 16
      %v1204 = vpop.permute.xlu0 %1203
      %1205 = vrot.lane.b32.xlu0 %v1158, 16
      %v1206 = vpop.permute.xlu0 %1205
      %1207 = vrot.lane.b32.xlu0 %v1160, 16
      %v1208 = vpop.permute.xlu0 %1207
      %vm1209 = vcmask 64512
      %v1211 = vsel %vm1209, %v723, %v1017
      %v1213 = vsel %vm1209, %v726, %v1019
      %v1215 = vsel %vm1209, %v731, %v1021
      %v1217 = vsel %vm1209, %v733, %v1023
      %v1219 = vsel %vm1209, %v738, %v1025
      %v1221 = vsel %vm1209, %v741, %v1027
      %v1223 = vsel %vm1209, %v746, %v1029
      %v1225 = vsel %vm1209, %v748, %v1031
      %v1227 = vsel %vm1209, %v753, %v1033
      %v1229 = vsel %vm1209, %v756, %v1035
      %v1231 = vsel %vm1209, %v761, %v1037
      %v1233 = vsel %vm1209, %v763, %v1039
      %v1235 = vsel %vm1209, %v768, %v1041
      %v1237 = vsel %vm1209, %v771, %v1043
      %v1239 = vsel %vm1209, %v776, %v1045
      %v1241 = vsel %vm1209, %v778, %v1047
      %v1243 = vsel %vm1209, %v783, %v1049
      %v1245 = vsel %vm1209, %v786, %v1051
      %v1247 = vsel %vm1209, %v791, %v1053
      %v1249 = vsel %vm1209, %v793, %v1055
      %v1251 = vsel %vm1209, %v798, %v1057
      %v1253 = vsel %vm1209, %v801, %v1059
      %v1255 = vsel %vm1209, %v806, %v1061
      %v1257 = vsel %vm1209, %v808, %v1063
      %vm1258 = vcmask 130048
      %v1260 = vsel %vm1258, %v1211, %v1162
      %v1262 = vsel %vm1258, %v1213, %v1164
      %v1264 = vsel %vm1258, %v1215, %v1166
      %v1266 = vsel %vm1258, %v1217, %v1168
      %v1268 = vsel %vm1258, %v1219, %v1170
      %v1270 = vsel %vm1258, %v1221, %v1172
      %v1272 = vsel %vm1258, %v1223, %v1174
      %v1274 = vsel %vm1258, %v1225, %v1176
      %v1276 = vsel %vm1258, %v1227, %v1178
      %v1278 = vsel %vm1258, %v1229, %v1180
      %v1280 = vsel %vm1258, %v1231, %v1182
      %v1282 = vsel %vm1258, %v1233, %v1184
      %v1284 = vsel %vm1258, %v1235, %v1186
      %v1286 = vsel %vm1258, %v1237, %v1188
      %v1288 = vsel %vm1258, %v1239, %v1190
      %v1290 = vsel %vm1258, %v1241, %v1192
      %v1292 = vsel %vm1258, %v1243, %v1194
      %v1294 = vsel %vm1258, %v1245, %v1196
      %v1296 = vsel %vm1258, %v1247, %v1198
      %v1298 = vsel %vm1258, %v1249, %v1200
      %v1300 = vsel %vm1258, %v1251, %v1202
      %v1302 = vsel %vm1258, %v1253, %v1204
      %v1304 = vsel %vm1258, %v1255, %v1206
      %v1306 = vsel %vm1258, %v1257, %v1208
      %1327 = vrot.lane.b32.xlu0 %v1264, 24
      %v1328 = vpop.permute.xlu0 %1327
      %1329 = vrot.lane.b32.xlu0 %v1266, 24
      %v1330 = vpop.permute.xlu0 %1329
      %1331 = vrot.lane.b32.xlu0 %v1268, 24
      %v1332 = vpop.permute.xlu0 %1331
      %1333 = vrot.lane.b32.xlu0 %v1270, 24
      %v1334 = vpop.permute.xlu0 %1333
      %1335 = vrot.lane.b32.xlu0 %v1272, 24
      %v1336 = vpop.permute.xlu0 %1335
      %1337 = vrot.lane.b32.xlu0 %v1274, 24
      %v1338 = vpop.permute.xlu0 %1337
      %1339 = vrot.lane.b32.xlu0 %v1276, 24
      %v1340 = vpop.permute.xlu0 %1339
      %1341 = vrot.lane.b32.xlu0 %v1278, 24
      %v1342 = vpop.permute.xlu0 %1341
      %1343 = vrot.lane.b32.xlu0 %v1280, 24
      %v1344 = vpop.permute.xlu0 %1343
      %1345 = vrot.lane.b32.xlu0 %v1282, 24
      %v1346 = vpop.permute.xlu0 %1345
      %1347 = vrot.lane.b32.xlu0 %v1284, 24
      %v1348 = vpop.permute.xlu0 %1347
      %1349 = vrot.lane.b32.xlu0 %v1286, 24
      %v1350 = vpop.permute.xlu0 %1349
      %1351 = vrot.lane.b32.xlu0 %v1288, 24
      %v1352 = vpop.permute.xlu0 %1351
      %1353 = vrot.lane.b32.xlu0 %v1290, 24
      %v1354 = vpop.permute.xlu0 %1353
      %1355 = vrot.lane.b32.xlu0 %v1292, 24
      %v1356 = vpop.permute.xlu0 %1355
      %1357 = vrot.lane.b32.xlu0 %v1294, 24
      %v1358 = vpop.permute.xlu0 %1357
      %1359 = vrot.lane.b32.xlu0 %v1296, 24
      %v1360 = vpop.permute.xlu0 %1359
      %1361 = vrot.lane.b32.xlu0 %v1298, 24
      %v1362 = vpop.permute.xlu0 %1361
      %1363 = vrot.lane.b32.xlu0 %v1300, 24
      %v1364 = vpop.permute.xlu0 %1363
      %1365 = vrot.lane.b32.xlu0 %v1302, 24
      %v1366 = vpop.permute.xlu0 %1365
      %1369 = vrot.lane.b32.xlu0 %v1268, 48
      %v1370 = vpop.permute.xlu0 %1369
      %1371 = vrot.lane.b32.xlu0 %v1270, 48
      %v1372 = vpop.permute.xlu0 %1371
      %1373 = vrot.lane.b32.xlu0 %v1272, 48
      %v1374 = vpop.permute.xlu0 %1373
      %1375 = vrot.lane.b32.xlu0 %v1274, 48
      %v1376 = vpop.permute.xlu0 %1375
      %1377 = vrot.lane.b32.xlu0 %v1276, 48
      %v1378 = vpop.permute.xlu0 %1377
      %1379 = vrot.lane.b32.xlu0 %v1278, 48
      %v1380 = vpop.permute.xlu0 %1379
      %1381 = vrot.lane.b32.xlu0 %v1280, 48
      %v1382 = vpop.permute.xlu0 %1381
      %1383 = vrot.lane.b32.xlu0 %v1282, 48
      %v1384 = vpop.permute.xlu0 %1383
      %1385 = vrot.lane.b32.xlu0 %v1284, 48
      %v1386 = vpop.permute.xlu0 %1385
      %1387 = vrot.lane.b32.xlu0 %v1286, 48
      %v1388 = vpop.permute.xlu0 %1387
      %1389 = vrot.lane.b32.xlu0 %v1288, 48
      %v1390 = vpop.permute.xlu0 %1389
      %1391 = vrot.lane.b32.xlu0 %v1290, 48
      %v1392 = vpop.permute.xlu0 %1391
      %1393 = vrot.lane.b32.xlu0 %v1292, 48
      %v1394 = vpop.permute.xlu0 %1393
      %1395 = vrot.lane.b32.xlu0 %v1294, 48
      %v1396 = vpop.permute.xlu0 %1395
      %1397 = vrot.lane.b32.xlu0 %v1296, 48
      %v1398 = vpop.permute.xlu0 %1397
      %1399 = vrot.lane.b32.xlu0 %v1298, 48
      %v1400 = vpop.permute.xlu0 %1399
      %1401 = vrot.lane.b32.xlu0 %v1300, 48
      %v1402 = vpop.permute.xlu0 %1401
      %1403 = vrot.lane.b32.xlu0 %v1302, 48
      %v1404 = vpop.permute.xlu0 %1403
      %1405 = vrot.lane.b32.xlu0 %v1304, 48
      %v1406 = vpop.permute.xlu0 %1405
      %1407 = vrot.lane.b32.xlu0 %v1306, 48
      %v1408 = vpop.permute.xlu0 %1407
      %vm1409 = vcmask 195584
      %v1411 = vsel %vm1409, %v1260, %v1328
      %v1413 = vsel %vm1409, %v1262, %v1330
      %v1415 = vsel %vm1409, %v1264, %v1332
      %v1417 = vsel %vm1409, %v1266, %v1334
      %v1419 = vsel %vm1409, %v1268, %v1336
      %v1421 = vsel %vm1409, %v1270, %v1338
      %v1423 = vsel %vm1409, %v1272, %v1340
      %v1425 = vsel %vm1409, %v1274, %v1342
      %v1427 = vsel %vm1409, %v1276, %v1344
      %v1429 = vsel %vm1409, %v1278, %v1346
      %v1431 = vsel %vm1409, %v1280, %v1348
      %v1433 = vsel %vm1409, %v1282, %v1350
      %v1435 = vsel %vm1409, %v1284, %v1352
      %v1437 = vsel %vm1409, %v1286, %v1354
      %v1439 = vsel %vm1409, %v1288, %v1356
      %v1441 = vsel %vm1409, %v1290, %v1358
      %v1443 = vsel %vm1409, %v1292, %v1360
      %v1445 = vsel %vm1409, %v1294, %v1362
      %v1447 = vsel %vm1409, %v1296, %v1364
      %v1449 = vsel %vm1409, %v1298, %v1366
      %vm1450 = vcmask 392192
      %v1452 = vsel %vm1450, %v1411, %v1370
      %v1454 = vsel %vm1450, %v1413, %v1372
      %v1456 = vsel %vm1450, %v1415, %v1374
      %v1458 = vsel %vm1450, %v1417, %v1376
      %v1460 = vsel %vm1450, %v1419, %v1378
      %v1462 = vsel %vm1450, %v1421, %v1380
      %v1464 = vsel %vm1450, %v1423, %v1382
      %v1466 = vsel %vm1450, %v1425, %v1384
      %v1468 = vsel %vm1450, %v1427, %v1386
      %v1470 = vsel %vm1450, %v1429, %v1388
      %v1472 = vsel %vm1450, %v1431, %v1390
      %v1474 = vsel %vm1450, %v1433, %v1392
      %v1476 = vsel %vm1450, %v1435, %v1394
      %v1478 = vsel %vm1450, %v1437, %v1396
      %v1480 = vsel %vm1450, %v1439, %v1398
      %v1482 = vsel %vm1450, %v1441, %v1400
      %v1484 = vsel %vm1450, %v1443, %v1402
      %v1486 = vsel %vm1450, %v1445, %v1404
      %v1488 = vsel %vm1450, %v1447, %v1406
      %v1490 = vsel %vm1450, %v1449, %v1408
      %v1491 = vld [vmem:[%s2] sm:$0xf]
      %v1492 = vld [vmem:[%s2 + $0x4] sm:$0xf]
      %v1493 = vld [vmem:[%s2 + $0x8] sm:$0xf]
      %v1494 = vld [vmem:[%s2 + $0xc] sm:$0xf]
      %v1495 = vld [vmem:[%s2 + $0x10] sm:$0xf]
      %v1496 = vld [vmem:[%s2 + $0x14] sm:$0xf]
      %v1497 = vld [vmem:[%s2 + $0x18] sm:$0xf]
      %v1498 = vld [vmem:[%s2 + $0x1c] sm:$0xf]
      %v1499 = vld [vmem:[%s2 + $0x20] sm:$0xf]
      %v1500 = vld [vmem:[%s3] sm:$0x1]
      %v1502 = vperm.slane %v1500, 0
      %v1513 = vunpack.c.l.b16 %v1491
      %v1514 = vunpack.c.l.b16 %v1492
      %v1515 = vunpack.c.l.b16 %v1493
      %v1516 = vunpack.c.l.b16 %v1494
      %v1517 = vunpack.c.l.b16 %v1495
      %v1518 = vunpack.c.l.b16 %v1496
      %v1519 = vunpack.c.l.b16 %v1497
      %v1520 = vunpack.c.l.b16 %v1498
      %v1521 = vunpack.c.l.b16 %v1499
      %v1522 = vpack.c.b16 %v1514, %v1513
      %v1523 = vpack.c.b16 %v1516, %v1515
      %v1524 = vpack.c.b16 %v1518, %v1517
      %v1525 = vpack.c.b16 %v1520, %v1519
      %v1526 = vpack.c.b16 %v1521, %v1521
      %vm1531 = vcmask 588800
      %v1532 = vsel %vm1531, %v1452, 0
      %v1534 = vsel %vm1531, %v1454, 0
      %v1536 = vsel %vm1531, %v1456, 0
      %v1538 = vsel %vm1531, %v1458, 0
      %v1540 = vsel %vm1531, %v1460, 0
      %v1542 = vsel %vm1531, %v1462, 0
      %v1544 = vsel %vm1531, %v1464, 0
      %v1546 = vsel %vm1531, %v1466, 0
      %v1548 = vsel %vm1531, %v1468, 0
      %v1550 = vsel %vm1531, %v1470, 0
      %v1552 = vsel %vm1531, %v1472, 0
      %v1554 = vsel %vm1531, %v1474, 0
      %v1556 = vsel %vm1531, %v1476, 0
      %v1558 = vsel %vm1531, %v1478, 0
      %v1560 = vsel %vm1531, %v1480, 0
      %v1562 = vsel %vm1531, %v1482, 0
      %v1564 = vsel %vm1531, %v1484, 0
      %v1566 = vsel %vm1531, %v1486, 0
      %v1568 = vsel %vm1531, %v1488, 0
      %v1570 = vsel %vm1531, %v1490, 0
      %vm1572 = vcmask 1043456
      %v1574 = vsel %vm1572, %v1526, 0
      %1576 = vmatpush.bf16.msra.mxu0 0
      %1577 = vmatpush.bf16.msra.mxu0 0
      %1578 = vmatpush.bf16.msra.mxu0 0
      %1579 = vmatpush.bf16.msra.mxu0 %v1574
      %1580 = vmatpush.bf16.msra.mxu0 %v1525
      %1581 = vmatpush.bf16.msra.mxu0 %v1524
      %1582 = vmatpush.bf16.msra.mxu0 %v1523
      %1583 = vmatpush.bf16.msra.mxu0 %v1522
      %1584 = vmatmul.bf16.gmra.mxu0 %v1532
      %v1585 = vpop.f32.mrf.mxu0
      %v1586 = vadd.f32 %v1502, %v1585
      %v1587 = vpop.f32.mrf.mxu0
      %v1588 = vadd.f32 %v1502, %v1587
      %1589 = vmatmul.bf16.gmra.mxu0 %v1534
      %v1590 = vpop.f32.mrf.mxu0
      %v1591 = vadd.f32 %v1502, %v1590
      %v1592 = vpop.f32.mrf.mxu0
      %v1593 = vadd.f32 %v1502, %v1592
      %1594 = vmatmul.bf16.gmra.mxu0 %v1536
      %v1595 = vpop.f32.mrf.mxu0
      %v1596 = vadd.f32 %v1502, %v1595
      %v1597 = vpop.f32.mrf.mxu0
      %v1598 = vadd.f32 %v1502, %v1597
      %1599 = vmatmul.bf16.gmra.mxu0 %v1538
      %v1600 = vpop.f32.mrf.mxu0
      %v1601 = vadd.f32 %v1502, %v1600
      %v1602 = vpop.f32.mrf.mxu0
      %v1603 = vadd.f32 %v1502, %v1602
      %1604 = vmatmul.bf16.gmra.mxu0 %v1540
      %v1605 = vpop.f32.mrf.mxu0
      %v1606 = vadd.f32 %v1502, %v1605
      %v1607 = vpop.f32.mrf.mxu0
      %v1608 = vadd.f32 %v1502, %v1607
      %1609 = vmatmul.bf16.gmra.mxu0 %v1542
      %v1610 = vpop.f32.mrf.mxu0
      %v1611 = vadd.f32 %v1502, %v1610
      %v1612 = vpop.f32.mrf.mxu0
      %v1613 = vadd.f32 %v1502, %v1612
      %1614 = vmatmul.bf16.gmra.mxu0 %v1544
      %v1615 = vpop.f32.mrf.mxu0
      %v1616 = vadd.f32 %v1502, %v1615
      %v1617 = vpop.f32.mrf.mxu0
      %v1618 = vadd.f32 %v1502, %v1617
      %1619 = vmatmul.bf16.gmra.mxu0 %v1546
      %v1620 = vpop.f32.mrf.mxu0
      %v1621 = vadd.f32 %v1502, %v1620
      %v1622 = vpop.f32.mrf.mxu0
      %v1623 = vadd.f32 %v1502, %v1622
      %1624 = vmatmul.bf16.gmra.mxu0 %v1548
      %v1625 = vpop.f32.mrf.mxu0
      %v1626 = vadd.f32 %v1502, %v1625
      %v1627 = vpop.f32.mrf.mxu0
      %v1628 = vadd.f32 %v1502, %v1627
      %1629 = vmatmul.bf16.gmra.mxu0 %v1550
      %v1630 = vpop.f32.mrf.mxu0
      %v1631 = vadd.f32 %v1502, %v1630
      %v1632 = vpop.f32.mrf.mxu0
      %v1633 = vadd.f32 %v1502, %v1632
      %1634 = vmatmul.bf16.gmra.mxu0 %v1552
      %v1635 = vpop.f32.mrf.mxu0
      %v1636 = vadd.f32 %v1502, %v1635
      %v1637 = vpop.f32.mrf.mxu0
      %v1638 = vadd.f32 %v1502, %v1637
      %1639 = vmatmul.bf16.gmra.mxu0 %v1554
      %v1640 = vpop.f32.mrf.mxu0
      %v1641 = vadd.f32 %v1502, %v1640
      %v1642 = vpop.f32.mrf.mxu0
      %v1643 = vadd.f32 %v1502, %v1642
      %1644 = vmatmul.bf16.gmra.mxu0 %v1556
      %v1645 = vpop.f32.mrf.mxu0
      %v1646 = vadd.f32 %v1502, %v1645
      %v1647 = vpop.f32.mrf.mxu0
      %v1648 = vadd.f32 %v1502, %v1647
      %1649 = vmatmul.bf16.gmra.mxu0 %v1558
      %v1650 = vpop.f32.mrf.mxu0
      %v1651 = vadd.f32 %v1502, %v1650
      %v1652 = vpop.f32.mrf.mxu0
      %v1653 = vadd.f32 %v1502, %v1652
      %1654 = vmatmul.bf16.gmra.mxu0 %v1560
      %v1655 = vpop.f32.mrf.mxu0
      %v1656 = vadd.f32 %v1502, %v1655
      %v1657 = vpop.f32.mrf.mxu0
      %v1658 = vadd.f32 %v1502, %v1657
      %1659 = vmatmul.bf16.gmra.mxu0 %v1562
      %v1660 = vpop.f32.mrf.mxu0
      %v1661 = vadd.f32 %v1502, %v1660
      %v1662 = vpop.f32.mrf.mxu0
      %v1663 = vadd.f32 %v1502, %v1662
      %1664 = vmatmul.bf16.gmra.mxu0 %v1564
      %v1665 = vpop.f32.mrf.mxu0
      %v1666 = vadd.f32 %v1502, %v1665
      %v1667 = vpop.f32.mrf.mxu0
      %v1668 = vadd.f32 %v1502, %v1667
      %1669 = vmatmul.bf16.gmra.mxu0 %v1566
      %v1670 = vpop.f32.mrf.mxu0
      %v1671 = vadd.f32 %v1502, %v1670
      %v1672 = vpop.f32.mrf.mxu0
      %v1673 = vadd.f32 %v1502, %v1672
      %1674 = vmatmul.bf16.gmra.mxu0 %v1568
      %v1675 = vpop.f32.mrf.mxu0
      %v1676 = vadd.f32 %v1502, %v1675
      %v1677 = vpop.f32.mrf.mxu0
      %v1678 = vadd.f32 %v1502, %v1677
      %1679 = vmatmul.bf16.gmra.mxu0 %v1570
      %v1680 = vpop.f32.mrf.mxu0
      %v1681 = vadd.f32 %v1502, %v1680
      %v1682 = vpop.f32.mrf.mxu0
      %v1683 = vadd.f32 %v1502, %v1682
      %1684 = vdwg.mxu0
      %v1685 = vmul.f32 %v1586, 0.5
      %v1686 = vmul.f32 %v1588, 0.5
      %v1687 = vmul.f32 %v1591, 0.5
      %v1688 = vmul.f32 %v1593, 0.5
      %v1689 = vmul.f32 %v1596, 0.5
      %v1690 = vmul.f32 %v1598, 0.5
      %v1691 = vmul.f32 %v1601, 0.5
      %v1692 = vmul.f32 %v1603, 0.5
      %v1693 = vmul.f32 %v1606, 0.5
      %v1694 = vmul.f32 %v1608, 0.5
      %v1695 = vmul.f32 %v1611, 0.5
      %v1696 = vmul.f32 %v1613, 0.5
      %v1697 = vmul.f32 %v1616, 0.5
      %v1698 = vmul.f32 %v1618, 0.5
      %v1699 = vmul.f32 %v1621, 0.5
      %v1700 = vmul.f32 %v1623, 0.5
      %v1701 = vmul.f32 %v1626, 0.5
      %v1702 = vmul.f32 %v1628, 0.5
      %v1703 = vmul.f32 %v1631, 0.5
      %v1704 = vmul.f32 %v1633, 0.5
      %v1705 = vmul.f32 %v1636, 0.5
      %v1706 = vmul.f32 %v1638, 0.5
      %v1707 = vmul.f32 %v1641, 0.5
      %v1708 = vmul.f32 %v1643, 0.5
      %v1709 = vmul.f32 %v1646, 0.5
      %v1710 = vmul.f32 %v1648, 0.5
      %v1711 = vmul.f32 %v1651, 0.5
      %v1712 = vmul.f32 %v1653, 0.5
      %v1713 = vmul.f32 %v1656, 0.5
      %v1714 = vmul.f32 %v1658, 0.5
      %v1715 = vmul.f32 %v1661, 0.5
      %v1716 = vmul.f32 %v1663, 0.5
      %v1717 = vmul.f32 %v1666, 0.5
      %v1718 = vmul.f32 %v1668, 0.5
      %v1719 = vmul.f32 %v1671, 0.5
      %v1720 = vmul.f32 %v1673, 0.5
      %v1721 = vmul.f32 %v1676, 0.5
      %v1722 = vmul.f32 %v1678, 0.5
      %v1723 = vmul.f32 %v1681, 0.5
      %v1724 = vmul.f32 %v1683, 0.5
      %v1725 = vmul.f32 %v1586, 0.70710677
      %v1726 = vmul.f32 %v1588, 0.70710677
      %v1727 = vmul.f32 %v1591, 0.70710677
      %v1728 = vmul.f32 %v1593, 0.70710677
      %v1729 = vmul.f32 %v1596, 0.70710677
      %v1730 = vmul.f32 %v1598, 0.70710677
      %v1731 = vmul.f32 %v1601, 0.70710677
      %v1732 = vmul.f32 %v1603, 0.70710677
      %v1733 = vmul.f32 %v1606, 0.70710677
      %v1734 = vmul.f32 %v1608, 0.70710677
      %v1735 = vmul.f32 %v1611, 0.70710677
      %v1736 = vmul.f32 %v1613, 0.70710677
      %v1737 = vmul.f32 %v1616, 0.70710677
      %v1738 = vmul.f32 %v1618, 0.70710677
      %v1739 = vmul.f32 %v1621, 0.70710677
      %v1740 = vmul.f32 %v1623, 0.70710677
      %v1741 = vmul.f32 %v1626, 0.70710677
      %v1742 = vmul.f32 %v1628, 0.70710677
      %v1743 = vmul.f32 %v1631, 0.70710677
      %v1744 = vmul.f32 %v1633, 0.70710677
      %v1745 = vmul.f32 %v1636, 0.70710677
      %v1746 = vmul.f32 %v1638, 0.70710677
      %v1747 = vmul.f32 %v1641, 0.70710677
      %v1748 = vmul.f32 %v1643, 0.70710677
      %v1749 = vmul.f32 %v1646, 0.70710677
      %v1750 = vmul.f32 %v1648, 0.70710677
      %v1751 = vmul.f32 %v1651, 0.70710677
      %v1752 = vmul.f32 %v1653, 0.70710677
      %v1753 = vmul.f32 %v1656, 0.70710677
      %v1754 = vmul.f32 %v1658, 0.70710677
      %v1755 = vmul.f32 %v1661, 0.70710677
      %v1756 = vmul.f32 %v1663, 0.70710677
      %v1757 = vmul.f32 %v1666, 0.70710677
      %v1758 = vmul.f32 %v1668, 0.70710677
      %v1759 = vmul.f32 %v1671, 0.70710677
      %v1760 = vmul.f32 %v1673, 0.70710677
      %v1761 = vmul.f32 %v1676, 0.70710677
      %v1762 = vmul.f32 %v1678, 0.70710677
      %v1763 = vmul.f32 %v1681, 0.70710677
      %v1764 = vmul.f32 %v1683, 0.70710677
      %v1765 = vand.u32 2147483647, %v1725
      %v1766 = vand.u32 2147483647, %v1726
      %v1767 = vand.u32 2147483647, %v1727
      %v1768 = vand.u32 2147483647, %v1728
      %v1769 = vand.u32 2147483647, %v1729
      %v1770 = vand.u32 2147483647, %v1730
      %v1771 = vand.u32 2147483647, %v1731
      %v1772 = vand.u32 2147483647, %v1732
      %v1773 = vand.u32 2147483647, %v1733
      %v1774 = vand.u32 2147483647, %v1734
      %v1775 = vand.u32 2147483647, %v1735
      %v1776 = vand.u32 2147483647, %v1736
      %v1777 = vand.u32 2147483647, %v1737
      %v1778 = vand.u32 2147483647, %v1738
      %v1779 = vand.u32 2147483647, %v1739
      %v1780 = vand.u32 2147483647, %v1740
      %v1781 = vand.u32 2147483647, %v1741
      %v1782 = vand.u32 2147483647, %v1742
      %v1783 = vand.u32 2147483647, %v1743
      %v1784 = vand.u32 2147483647, %v1744
      %v1785 = vand.u32 2147483647, %v1745
      %v1786 = vand.u32 2147483647, %v1746
      %v1787 = vand.u32 2147483647, %v1747
      %v1788 = vand.u32 2147483647, %v1748
      %v1789 = vand.u32 2147483647, %v1749
      %v1790 = vand.u32 2147483647, %v1750
      %v1791 = vand.u32 2147483647, %v1751
      %v1792 = vand.u32 2147483647, %v1752
      %v1793 = vand.u32 2147483647, %v1753
      %v1794 = vand.u32 2147483647, %v1754
      %v1795 = vand.u32 2147483647, %v1755
      %v1796 = vand.u32 2147483647, %v1756
      %v1797 = vand.u32 2147483647, %v1757
      %v1798 = vand.u32 2147483647, %v1758
      %v1799 = vand.u32 2147483647, %v1759
      %v1800 = vand.u32 2147483647, %v1760
      %v1801 = vand.u32 2147483647, %v1761
      %v1802 = vand.u32 2147483647, %v1762
      %v1803 = vand.u32 2147483647, %v1763
      %v1804 = vand.u32 2147483647, %v1764
      %v1805 = vmul.f32 %v1765, 0.3275911
      %v1806 = vmul.f32 %v1766, 0.3275911
      %v1807 = vmul.f32 %v1767, 0.3275911
      %v1808 = vmul.f32 %v1768, 0.3275911
      %v1809 = vmul.f32 %v1769, 0.3275911
      %v1810 = vmul.f32 %v1770, 0.3275911
      %v1811 = vmul.f32 %v1771, 0.3275911
      %v1812 = vmul.f32 %v1772, 0.3275911
      %v1813 = vmul.f32 %v1773, 0.3275911
      %v1814 = vmul.f32 %v1774, 0.3275911
      %v1815 = vmul.f32 %v1775, 0.3275911
      %v1816 = vmul.f32 %v1776, 0.3275911
      %v1817 = vmul.f32 %v1777, 0.3275911
      %v1818 = vmul.f32 %v1778, 0.3275911
      %v1819 = vmul.f32 %v1779, 0.3275911
      %v1820 = vmul.f32 %v1780, 0.3275911
      %v1821 = vmul.f32 %v1781, 0.3275911
      %v1822 = vmul.f32 %v1782, 0.3275911
      %v1823 = vmul.f32 %v1783, 0.3275911
      %v1824 = vmul.f32 %v1784, 0.3275911
      %v1825 = vmul.f32 %v1785, 0.3275911
      %v1826 = vmul.f32 %v1786, 0.3275911
      %v1827 = vmul.f32 %v1787, 0.3275911
      %v1828 = vmul.f32 %v1788, 0.3275911
      %v1829 = vmul.f32 %v1789, 0.3275911
      %v1830 = vmul.f32 %v1790, 0.3275911
      %v1831 = vmul.f32 %v1791, 0.3275911
      %v1832 = vmul.f32 %v1792, 0.3275911
      %v1833 = vmul.f32 %v1793, 0.3275911
      %v1834 = vmul.f32 %v1794, 0.3275911
      %v1835 = vmul.f32 %v1795, 0.3275911
      %v1836 = vmul.f32 %v1796, 0.3275911
      %v1837 = vmul.f32 %v1797, 0.3275911
      %v1838 = vmul.f32 %v1798, 0.3275911
      %v1839 = vmul.f32 %v1799, 0.3275911
      %v1840 = vmul.f32 %v1800, 0.3275911
      %v1841 = vmul.f32 %v1801, 0.3275911
      %v1842 = vmul.f32 %v1802, 0.3275911
      %v1843 = vmul.f32 %v1803, 0.3275911
      %v1844 = vmul.f32 %v1804, 0.3275911
      %v1845 = vadd.f32 %v1805, 1.0
      %v1846 = vadd.f32 %v1806, 1.0
      %v1847 = vadd.f32 %v1807, 1.0
      %v1848 = vadd.f32 %v1808, 1.0
      %v1849 = vadd.f32 %v1809, 1.0
      %v1850 = vadd.f32 %v1810, 1.0
      %v1851 = vadd.f32 %v1811, 1.0
      %v1852 = vadd.f32 %v1812, 1.0
      %v1853 = vadd.f32 %v1813, 1.0
      %v1854 = vadd.f32 %v1814, 1.0
      %v1855 = vadd.f32 %v1815, 1.0
      %v1856 = vadd.f32 %v1816, 1.0
      %v1857 = vadd.f32 %v1817, 1.0
      %v1858 = vadd.f32 %v1818, 1.0
      %v1859 = vadd.f32 %v1819, 1.0
      %v1860 = vadd.f32 %v1820, 1.0
      %v1861 = vadd.f32 %v1821, 1.0
      %v1862 = vadd.f32 %v1822, 1.0
      %v1863 = vadd.f32 %v1823, 1.0
      %v1864 = vadd.f32 %v1824, 1.0
      %v1865 = vadd.f32 %v1825, 1.0
      %v1866 = vadd.f32 %v1826, 1.0
      %v1867 = vadd.f32 %v1827, 1.0
      %v1868 = vadd.f32 %v1828, 1.0
      %v1869 = vadd.f32 %v1829, 1.0
      %v1870 = vadd.f32 %v1830, 1.0
      %v1871 = vadd.f32 %v1831, 1.0
      %v1872 = vadd.f32 %v1832, 1.0
      %v1873 = vadd.f32 %v1833, 1.0
      %v1874 = vadd.f32 %v1834, 1.0
      %v1875 = vadd.f32 %v1835, 1.0
      %v1876 = vadd.f32 %v1836, 1.0
      %v1877 = vadd.f32 %v1837, 1.0
      %v1878 = vadd.f32 %v1838, 1.0
      %v1879 = vadd.f32 %v1839, 1.0
      %v1880 = vadd.f32 %v1840, 1.0
      %v1881 = vadd.f32 %v1841, 1.0
      %v1882 = vadd.f32 %v1842, 1.0
      %v1883 = vadd.f32 %v1843, 1.0
      %v1884 = vadd.f32 %v1844, 1.0
      %v1885 = vrcp.pop %v1845
      %v1886 = vmul.f32 %v1845, %v1885
      %v1887 = vsub.f32 1.0, %v1886
      %v1888 = vmul.f32 %v1885, %v1887
      %v1889 = vadd.f32 %v1885, %v1888
      %vm1890 = vweird.f32 %v1845
      %vm1891 = vweird.f32 %v1885
      %vm1892 = vmor %vm1890, %vm1891
      %v1893 = vsel %vm1892, %v1885, %v1889
      %v1894 = vand.u32 2147483647, %v1845
      %vm1895 = vcmp.eq.f32.partialorder %v1894, 8.507059e+37
      %v1896 = vand.u32 %v1845, 2147483648
      %v1897 = vor.u32 1.1754944e-38, %v1896
      %v1898 = vsel %vm1895, %v1897, %v1893
      %v1899 = vmul.f32 1.0, %v1898
      %v1900 = vrcp.pop %v1846
      %v1901 = vmul.f32 %v1846, %v1900
      %v1902 = vsub.f32 1.0, %v1901
      %v1903 = vmul.f32 %v1900, %v1902
      %v1904 = vadd.f32 %v1900, %v1903
      %vm1905 = vweird.f32 %v1846
      %vm1906 = vweird.f32 %v1900
      %vm1907 = vmor %vm1905, %vm1906
      %v1908 = vsel %vm1907, %v1900, %v1904
      %v1909 = vand.u32 2147483647, %v1846
      %vm1910 = vcmp.eq.f32.partialorder %v1909, 8.507059e+37
      %v1911 = vand.u32 %v1846, 2147483648
      %v1912 = vor.u32 1.1754944e-38, %v1911
      %v1913 = vsel %vm1910, %v1912, %v1908
      %v1914 = vmul.f32 1.0, %v1913
      %v1915 = vrcp.pop %v1847
      %v1916 = vmul.f32 %v1847, %v1915
      %v1917 = vsub.f32 1.0, %v1916
      %v1918 = vmul.f32 %v1915, %v1917
      %v1919 = vadd.f32 %v1915, %v1918
      %vm1920 = vweird.f32 %v1847
      %vm1921 = vweird.f32 %v1915
      %vm1922 = vmor %vm1920, %vm1921
      %v1923 = vsel %vm1922, %v1915, %v1919
      %v1924 = vand.u32 2147483647, %v1847
      %vm1925 = vcmp.eq.f32.partialorder %v1924, 8.507059e+37
      %v1926 = vand.u32 %v1847, 2147483648
      %v1927 = vor.u32 1.1754944e-38, %v1926
      %v1928 = vsel %vm1925, %v1927, %v1923
      %v1929 = vmul.f32 1.0, %v1928
      %v1930 = vrcp.pop %v1848
      %v1931 = vmul.f32 %v1848, %v1930
      %v1932 = vsub.f32 1.0, %v1931
      %v1933 = vmul.f32 %v1930, %v1932
      %v1934 = vadd.f32 %v1930, %v1933
      %vm1935 = vweird.f32 %v1848
      %vm1936 = vweird.f32 %v1930
      %vm1937 = vmor %vm1935, %vm1936
      %v1938 = vsel %vm1937, %v1930, %v1934
      %v1939 = vand.u32 2147483647, %v1848
      %vm1940 = vcmp.eq.f32.partialorder %v1939, 8.507059e+37
      %v1941 = vand.u32 %v1848, 2147483648
      %v1942 = vor.u32 1.1754944e-38, %v1941
      %v1943 = vsel %vm1940, %v1942, %v1938
      %v1944 = vmul.f32 1.0, %v1943
      %v1945 = vrcp.pop %v1849
      %v1946 = vmul.f32 %v1849, %v1945
      %v1947 = vsub.f32 1.0, %v1946
      %v1948 = vmul.f32 %v1945, %v1947
      %v1949 = vadd.f32 %v1945, %v1948
      %vm1950 = vweird.f32 %v1849
      %vm1951 = vweird.f32 %v1945
      %vm1952 = vmor %vm1950, %vm1951
      %v1953 = vsel %vm1952, %v1945, %v1949
      %v1954 = vand.u32 2147483647, %v1849
      %vm1955 = vcmp.eq.f32.partialorder %v1954, 8.507059e+37
      %v1956 = vand.u32 %v1849, 2147483648
      %v1957 = vor.u32 1.1754944e-38, %v1956
      %v1958 = vsel %vm1955, %v1957, %v1953
      %v1959 = vmul.f32 1.0, %v1958
      %v1960 = vrcp.pop %v1850
      %v1961 = vmul.f32 %v1850, %v1960
      %v1962 = vsub.f32 1.0, %v1961
      %v1963 = vmul.f32 %v1960, %v1962
      %v1964 = vadd.f32 %v1960, %v1963
      %vm1965 = vweird.f32 %v1850
      %vm1966 = vweird.f32 %v1960
      %vm1967 = vmor %vm1965, %vm1966
      %v1968 = vsel %vm1967, %v1960, %v1964
      %v1969 = vand.u32 2147483647, %v1850
      %vm1970 = vcmp.eq.f32.partialorder %v1969, 8.507059e+37
      %v1971 = vand.u32 %v1850, 2147483648
      %v1972 = vor.u32 1.1754944e-38, %v1971
      %v1973 = vsel %vm1970, %v1972, %v1968
      %v1974 = vmul.f32 1.0, %v1973
      %v1975 = vrcp.pop %v1851
      %v1976 = vmul.f32 %v1851, %v1975
      %v1977 = vsub.f32 1.0, %v1976
      %v1978 = vmul.f32 %v1975, %v1977
      %v1979 = vadd.f32 %v1975, %v1978
      %vm1980 = vweird.f32 %v1851
      %vm1981 = vweird.f32 %v1975
      %vm1982 = vmor %vm1980, %vm1981
      %v1983 = vsel %vm1982, %v1975, %v1979
      %v1984 = vand.u32 2147483647, %v1851
      %vm1985 = vcmp.eq.f32.partialorder %v1984, 8.507059e+37
      %v1986 = vand.u32 %v1851, 2147483648
      %v1987 = vor.u32 1.1754944e-38, %v1986
      %v1988 = vsel %vm1985, %v1987, %v1983
      %v1989 = vmul.f32 1.0, %v1988
      %v1990 = vrcp.pop %v1852
      %v1991 = vmul.f32 %v1852, %v1990
      %v1992 = vsub.f32 1.0, %v1991
      %v1993 = vmul.f32 %v1990, %v1992
      %v1994 = vadd.f32 %v1990, %v1993
      %vm1995 = vweird.f32 %v1852
      %vm1996 = vweird.f32 %v1990
      %vm1997 = vmor %vm1995, %vm1996
      %v1998 = vsel %vm1997, %v1990, %v1994
      %v1999 = vand.u32 2147483647, %v1852
      %vm2000 = vcmp.eq.f32.partialorder %v1999, 8.507059e+37
      %v2001 = vand.u32 %v1852, 2147483648
      %v2002 = vor.u32 1.1754944e-38, %v2001
      %v2003 = vsel %vm2000, %v2002, %v1998
      %v2004 = vmul.f32 1.0, %v2003
      %v2005 = vrcp.pop %v1853
      %v2006 = vmul.f32 %v1853, %v2005
      %v2007 = vsub.f32 1.0, %v2006
      %v2008 = vmul.f32 %v2005, %v2007
      %v2009 = vadd.f32 %v2005, %v2008
      %vm2010 = vweird.f32 %v1853
      %vm2011 = vweird.f32 %v2005
      %vm2012 = vmor %vm2010, %vm2011
      %v2013 = vsel %vm2012, %v2005, %v2009
      %v2014 = vand.u32 2147483647, %v1853
      %vm2015 = vcmp.eq.f32.partialorder %v2014, 8.507059e+37
      %v2016 = vand.u32 %v1853, 2147483648
      %v2017 = vor.u32 1.1754944e-38, %v2016
      %v2018 = vsel %vm2015, %v2017, %v2013
      %v2019 = vmul.f32 1.0, %v2018
      %v2020 = vrcp.pop %v1854
      %v2021 = vmul.f32 %v1854, %v2020
      %v2022 = vsub.f32 1.0, %v2021
      %v2023 = vmul.f32 %v2020, %v2022
      %v2024 = vadd.f32 %v2020, %v2023
      %vm2025 = vweird.f32 %v1854
      %vm2026 = vweird.f32 %v2020
      %vm2027 = vmor %vm2025, %vm2026
      %v2028 = vsel %vm2027, %v2020, %v2024
      %v2029 = vand.u32 2147483647, %v1854
      %vm2030 = vcmp.eq.f32.partialorder %v2029, 8.507059e+37
      %v2031 = vand.u32 %v1854, 2147483648
      %v2032 = vor.u32 1.1754944e-38, %v2031
      %v2033 = vsel %vm2030, %v2032, %v2028
      %v2034 = vmul.f32 1.0, %v2033
      %v2035 = vrcp.pop %v1855
      %v2036 = vmul.f32 %v1855, %v2035
      %v2037 = vsub.f32 1.0, %v2036
      %v2038 = vmul.f32 %v2035, %v2037
      %v2039 = vadd.f32 %v2035, %v2038
      %vm2040 = vweird.f32 %v1855
      %vm2041 = vweird.f32 %v2035
      %vm2042 = vmor %vm2040, %vm2041
      %v2043 = vsel %vm2042, %v2035, %v2039
      %v2044 = vand.u32 2147483647, %v1855
      %vm2045 = vcmp.eq.f32.partialorder %v2044, 8.507059e+37
      %v2046 = vand.u32 %v1855, 2147483648
      %v2047 = vor.u32 1.1754944e-38, %v2046
      %v2048 = vsel %vm2045, %v2047, %v2043
      %v2049 = vmul.f32 1.0, %v2048
      %v2050 = vrcp.pop %v1856
      %v2051 = vmul.f32 %v1856, %v2050
      %v2052 = vsub.f32 1.0, %v2051
      %v2053 = vmul.f32 %v2050, %v2052
      %v2054 = vadd.f32 %v2050, %v2053
      %vm2055 = vweird.f32 %v1856
      %vm2056 = vweird.f32 %v2050
      %vm2057 = vmor %vm2055, %vm2056
      %v2058 = vsel %vm2057, %v2050, %v2054
      %v2059 = vand.u32 2147483647, %v1856
      %vm2060 = vcmp.eq.f32.partialorder %v2059, 8.507059e+37
      %v2061 = vand.u32 %v1856, 2147483648
      %v2062 = vor.u32 1.1754944e-38, %v2061
      %v2063 = vsel %vm2060, %v2062, %v2058
      %v2064 = vmul.f32 1.0, %v2063
      %v2065 = vrcp.pop %v1857
      %v2066 = vmul.f32 %v1857, %v2065
      %v2067 = vsub.f32 1.0, %v2066
      %v2068 = vmul.f32 %v2065, %v2067
      %v2069 = vadd.f32 %v2065, %v2068
      %vm2070 = vweird.f32 %v1857
      %vm2071 = vweird.f32 %v2065
      %vm2072 = vmor %vm2070, %vm2071
      %v2073 = vsel %vm2072, %v2065, %v2069
      %v2074 = vand.u32 2147483647, %v1857
      %vm2075 = vcmp.eq.f32.partialorder %v2074, 8.507059e+37
      %v2076 = vand.u32 %v1857, 2147483648
      %v2077 = vor.u32 1.1754944e-38, %v2076
      %v2078 = vsel %vm2075, %v2077, %v2073
      %v2079 = vmul.f32 1.0, %v2078
      %v2080 = vrcp.pop %v1858
      %v2081 = vmul.f32 %v1858, %v2080
      %v2082 = vsub.f32 1.0, %v2081
      %v2083 = vmul.f32 %v2080, %v2082
      %v2084 = vadd.f32 %v2080, %v2083
      %vm2085 = vweird.f32 %v1858
      %vm2086 = vweird.f32 %v2080
      %vm2087 = vmor %vm2085, %vm2086
      %v2088 = vsel %vm2087, %v2080, %v2084
      %v2089 = vand.u32 2147483647, %v1858
      %vm2090 = vcmp.eq.f32.partialorder %v2089, 8.507059e+37
      %v2091 = vand.u32 %v1858, 2147483648
      %v2092 = vor.u32 1.1754944e-38, %v2091
      %v2093 = vsel %vm2090, %v2092, %v2088
      %v2094 = vmul.f32 1.0, %v2093
      %v2095 = vrcp.pop %v1859
      %v2096 = vmul.f32 %v1859, %v2095
      %v2097 = vsub.f32 1.0, %v2096
      %v2098 = vmul.f32 %v2095, %v2097
      %v2099 = vadd.f32 %v2095, %v2098
      %vm2100 = vweird.f32 %v1859
      %vm2101 = vweird.f32 %v2095
      %vm2102 = vmor %vm2100, %vm2101
      %v2103 = vsel %vm2102, %v2095, %v2099
      %v2104 = vand.u32 2147483647, %v1859
      %vm2105 = vcmp.eq.f32.partialorder %v2104, 8.507059e+37
      %v2106 = vand.u32 %v1859, 2147483648
      %v2107 = vor.u32 1.1754944e-38, %v2106
      %v2108 = vsel %vm2105, %v2107, %v2103
      %v2109 = vmul.f32 1.0, %v2108
      %v2110 = vrcp.pop %v1860
      %v2111 = vmul.f32 %v1860, %v2110
      %v2112 = vsub.f32 1.0, %v2111
      %v2113 = vmul.f32 %v2110, %v2112
      %v2114 = vadd.f32 %v2110, %v2113
      %vm2115 = vweird.f32 %v1860
      %vm2116 = vweird.f32 %v2110
      %vm2117 = vmor %vm2115, %vm2116
      %v2118 = vsel %vm2117, %v2110, %v2114
      %v2119 = vand.u32 2147483647, %v1860
      %vm2120 = vcmp.eq.f32.partialorder %v2119, 8.507059e+37
      %v2121 = vand.u32 %v1860, 2147483648
      %v2122 = vor.u32 1.1754944e-38, %v2121
      %v2123 = vsel %vm2120, %v2122, %v2118
      %v2124 = vmul.f32 1.0, %v2123
      %v2125 = vrcp.pop %v1861
      %v2126 = vmul.f32 %v1861, %v2125
      %v2127 = vsub.f32 1.0, %v2126
      %v2128 = vmul.f32 %v2125, %v2127
      %v2129 = vadd.f32 %v2125, %v2128
      %vm2130 = vweird.f32 %v1861
      %vm2131 = vweird.f32 %v2125
      %vm2132 = vmor %vm2130, %vm2131
      %v2133 = vsel %vm2132, %v2125, %v2129
      %v2134 = vand.u32 2147483647, %v1861
      %vm2135 = vcmp.eq.f32.partialorder %v2134, 8.507059e+37
      %v2136 = vand.u32 %v1861, 2147483648
      %v2137 = vor.u32 1.1754944e-38, %v2136
      %v2138 = vsel %vm2135, %v2137, %v2133
      %v2139 = vmul.f32 1.0, %v2138
      %v2140 = vrcp.pop %v1862
      %v2141 = vmul.f32 %v1862, %v2140
      %v2142 = vsub.f32 1.0, %v2141
      %v2143 = vmul.f32 %v2140, %v2142
      %v2144 = vadd.f32 %v2140, %v2143
      %vm2145 = vweird.f32 %v1862
      %vm2146 = vweird.f32 %v2140
      %vm2147 = vmor %vm2145, %vm2146
      %v2148 = vsel %vm2147, %v2140, %v2144
      %v2149 = vand.u32 2147483647, %v1862
      %vm2150 = vcmp.eq.f32.partialorder %v2149, 8.507059e+37
      %v2151 = vand.u32 %v1862, 2147483648
      %v2152 = vor.u32 1.1754944e-38, %v2151
      %v2153 = vsel %vm2150, %v2152, %v2148
      %v2154 = vmul.f32 1.0, %v2153
      %v2155 = vrcp.pop %v1863
      %v2156 = vmul.f32 %v1863, %v2155
      %v2157 = vsub.f32 1.0, %v2156
      %v2158 = vmul.f32 %v2155, %v2157
      %v2159 = vadd.f32 %v2155, %v2158
      %vm2160 = vweird.f32 %v1863
      %vm2161 = vweird.f32 %v2155
      %vm2162 = vmor %vm2160, %vm2161
      %v2163 = vsel %vm2162, %v2155, %v2159
      %v2164 = vand.u32 2147483647, %v1863
      %vm2165 = vcmp.eq.f32.partialorder %v2164, 8.507059e+37
      %v2166 = vand.u32 %v1863, 2147483648
      %v2167 = vor.u32 1.1754944e-38, %v2166
      %v2168 = vsel %vm2165, %v2167, %v2163
      %v2169 = vmul.f32 1.0, %v2168
      %v2170 = vrcp.pop %v1864
      %v2171 = vmul.f32 %v1864, %v2170
      %v2172 = vsub.f32 1.0, %v2171
      %v2173 = vmul.f32 %v2170, %v2172
      %v2174 = vadd.f32 %v2170, %v2173
      %vm2175 = vweird.f32 %v1864
      %vm2176 = vweird.f32 %v2170
      %vm2177 = vmor %vm2175, %vm2176
      %v2178 = vsel %vm2177, %v2170, %v2174
      %v2179 = vand.u32 2147483647, %v1864
      %vm2180 = vcmp.eq.f32.partialorder %v2179, 8.507059e+37
      %v2181 = vand.u32 %v1864, 2147483648
      %v2182 = vor.u32 1.1754944e-38, %v2181
      %v2183 = vsel %vm2180, %v2182, %v2178
      %v2184 = vmul.f32 1.0, %v2183
      %v2185 = vrcp.pop %v1865
      %v2186 = vmul.f32 %v1865, %v2185
      %v2187 = vsub.f32 1.0, %v2186
      %v2188 = vmul.f32 %v2185, %v2187
      %v2189 = vadd.f32 %v2185, %v2188
      %vm2190 = vweird.f32 %v1865
      %vm2191 = vweird.f32 %v2185
      %vm2192 = vmor %vm2190, %vm2191
      %v2193 = vsel %vm2192, %v2185, %v2189
      %v2194 = vand.u32 2147483647, %v1865
      %vm2195 = vcmp.eq.f32.partialorder %v2194, 8.507059e+37
      %v2196 = vand.u32 %v1865, 2147483648
      %v2197 = vor.u32 1.1754944e-38, %v2196
      %v2198 = vsel %vm2195, %v2197, %v2193
      %v2199 = vmul.f32 1.0, %v2198
      %v2200 = vrcp.pop %v1866
      %v2201 = vmul.f32 %v1866, %v2200
      %v2202 = vsub.f32 1.0, %v2201
      %v2203 = vmul.f32 %v2200, %v2202
      %v2204 = vadd.f32 %v2200, %v2203
      %vm2205 = vweird.f32 %v1866
      %vm2206 = vweird.f32 %v2200
      %vm2207 = vmor %vm2205, %vm2206
      %v2208 = vsel %vm2207, %v2200, %v2204
      %v2209 = vand.u32 2147483647, %v1866
      %vm2210 = vcmp.eq.f32.partialorder %v2209, 8.507059e+37
      %v2211 = vand.u32 %v1866, 2147483648
      %v2212 = vor.u32 1.1754944e-38, %v2211
      %v2213 = vsel %vm2210, %v2212, %v2208
      %v2214 = vmul.f32 1.0, %v2213
      %v2215 = vrcp.pop %v1867
      %v2216 = vmul.f32 %v1867, %v2215
      %v2217 = vsub.f32 1.0, %v2216
      %v2218 = vmul.f32 %v2215, %v2217
      %v2219 = vadd.f32 %v2215, %v2218
      %vm2220 = vweird.f32 %v1867
      %vm2221 = vweird.f32 %v2215
      %vm2222 = vmor %vm2220, %vm2221
      %v2223 = vsel %vm2222, %v2215, %v2219
      %v2224 = vand.u32 2147483647, %v1867
      %vm2225 = vcmp.eq.f32.partialorder %v2224, 8.507059e+37
      %v2226 = vand.u32 %v1867, 2147483648
      %v2227 = vor.u32 1.1754944e-38, %v2226
      %v2228 = vsel %vm2225, %v2227, %v2223
      %v2229 = vmul.f32 1.0, %v2228
      %v2230 = vrcp.pop %v1868
      %v2231 = vmul.f32 %v1868, %v2230
      %v2232 = vsub.f32 1.0, %v2231
      %v2233 = vmul.f32 %v2230, %v2232
      %v2234 = vadd.f32 %v2230, %v2233
      %vm2235 = vweird.f32 %v1868
      %vm2236 = vweird.f32 %v2230
      %vm2237 = vmor %vm2235, %vm2236
      %v2238 = vsel %vm2237, %v2230, %v2234
      %v2239 = vand.u32 2147483647, %v1868
      %vm2240 = vcmp.eq.f32.partialorder %v2239, 8.507059e+37
      %v2241 = vand.u32 %v1868, 2147483648
      %v2242 = vor.u32 1.1754944e-38, %v2241
      %v2243 = vsel %vm2240, %v2242, %v2238
      %v2244 = vmul.f32 1.0, %v2243
      %v2245 = vrcp.pop %v1869
      %v2246 = vmul.f32 %v1869, %v2245
      %v2247 = vsub.f32 1.0, %v2246
      %v2248 = vmul.f32 %v2245, %v2247
      %v2249 = vadd.f32 %v2245, %v2248
      %vm2250 = vweird.f32 %v1869
      %vm2251 = vweird.f32 %v2245
      %vm2252 = vmor %vm2250, %vm2251
      %v2253 = vsel %vm2252, %v2245, %v2249
      %v2254 = vand.u32 2147483647, %v1869
      %vm2255 = vcmp.eq.f32.partialorder %v2254, 8.507059e+37
      %v2256 = vand.u32 %v1869, 2147483648
      %v2257 = vor.u32 1.1754944e-38, %v2256
      %v2258 = vsel %vm2255, %v2257, %v2253
      %v2259 = vmul.f32 1.0, %v2258
      %v2260 = vrcp.pop %v1870
      %v2261 = vmul.f32 %v1870, %v2260
      %v2262 = vsub.f32 1.0, %v2261
      %v2263 = vmul.f32 %v2260, %v2262
      %v2264 = vadd.f32 %v2260, %v2263
      %vm2265 = vweird.f32 %v1870
      %vm2266 = vweird.f32 %v2260
      %vm2267 = vmor %vm2265, %vm2266
      %v2268 = vsel %vm2267, %v2260, %v2264
      %v2269 = vand.u32 2147483647, %v1870
      %vm2270 = vcmp.eq.f32.partialorder %v2269, 8.507059e+37
      %v2271 = vand.u32 %v1870, 2147483648
      %v2272 = vor.u32 1.1754944e-38, %v2271
      %v2273 = vsel %vm2270, %v2272, %v2268
      %v2274 = vmul.f32 1.0, %v2273
      %v2275 = vrcp.pop %v1871
      %v2276 = vmul.f32 %v1871, %v2275
      %v2277 = vsub.f32 1.0, %v2276
      %v2278 = vmul.f32 %v2275, %v2277
      %v2279 = vadd.f32 %v2275, %v2278
      %vm2280 = vweird.f32 %v1871
      %vm2281 = vweird.f32 %v2275
      %vm2282 = vmor %vm2280, %vm2281
      %v2283 = vsel %vm2282, %v2275, %v2279
      %v2284 = vand.u32 2147483647, %v1871
      %vm2285 = vcmp.eq.f32.partialorder %v2284, 8.507059e+37
      %v2286 = vand.u32 %v1871, 2147483648
      %v2287 = vor.u32 1.1754944e-38, %v2286
      %v2288 = vsel %vm2285, %v2287, %v2283
      %v2289 = vmul.f32 1.0, %v2288
      %v2290 = vrcp.pop %v1872
      %v2291 = vmul.f32 %v1872, %v2290
      %v2292 = vsub.f32 1.0, %v2291
      %v2293 = vmul.f32 %v2290, %v2292
      %v2294 = vadd.f32 %v2290, %v2293
      %vm2295 = vweird.f32 %v1872
      %vm2296 = vweird.f32 %v2290
      %vm2297 = vmor %vm2295, %vm2296
      %v2298 = vsel %vm2297, %v2290, %v2294
      %v2299 = vand.u32 2147483647, %v1872
      %vm2300 = vcmp.eq.f32.partialorder %v2299, 8.507059e+37
      %v2301 = vand.u32 %v1872, 2147483648
      %v2302 = vor.u32 1.1754944e-38, %v2301
      %v2303 = vsel %vm2300, %v2302, %v2298
      %v2304 = vmul.f32 1.0, %v2303
      %v2305 = vrcp.pop %v1873
      %v2306 = vmul.f32 %v1873, %v2305
      %v2307 = vsub.f32 1.0, %v2306
      %v2308 = vmul.f32 %v2305, %v2307
      %v2309 = vadd.f32 %v2305, %v2308
      %vm2310 = vweird.f32 %v1873
      %vm2311 = vweird.f32 %v2305
      %vm2312 = vmor %vm2310, %vm2311
      %v2313 = vsel %vm2312, %v2305, %v2309
      %v2314 = vand.u32 2147483647, %v1873
      %vm2315 = vcmp.eq.f32.partialorder %v2314, 8.507059e+37
      %v2316 = vand.u32 %v1873, 2147483648
      %v2317 = vor.u32 1.1754944e-38, %v2316
      %v2318 = vsel %vm2315, %v2317, %v2313
      %v2319 = vmul.f32 1.0, %v2318
      %v2320 = vrcp.pop %v1874
      %v2321 = vmul.f32 %v1874, %v2320
      %v2322 = vsub.f32 1.0, %v2321
      %v2323 = vmul.f32 %v2320, %v2322
      %v2324 = vadd.f32 %v2320, %v2323
      %vm2325 = vweird.f32 %v1874
      %vm2326 = vweird.f32 %v2320
      %vm2327 = vmor %vm2325, %vm2326
      %v2328 = vsel %vm2327, %v2320, %v2324
      %v2329 = vand.u32 2147483647, %v1874
      %vm2330 = vcmp.eq.f32.partialorder %v2329, 8.507059e+37
      %v2331 = vand.u32 %v1874, 2147483648
      %v2332 = vor.u32 1.1754944e-38, %v2331
      %v2333 = vsel %vm2330, %v2332, %v2328
      %v2334 = vmul.f32 1.0, %v2333
      %v2335 = vrcp.pop %v1875
      %v2336 = vmul.f32 %v1875, %v2335
      %v2337 = vsub.f32 1.0, %v2336
      %v2338 = vmul.f32 %v2335, %v2337
      %v2339 = vadd.f32 %v2335, %v2338
      %vm2340 = vweird.f32 %v1875
      %vm2341 = vweird.f32 %v2335
      %vm2342 = vmor %vm2340, %vm2341
      %v2343 = vsel %vm2342, %v2335, %v2339
      %v2344 = vand.u32 2147483647, %v1875
      %vm2345 = vcmp.eq.f32.partialorder %v2344, 8.507059e+37
      %v2346 = vand.u32 %v1875, 2147483648
      %v2347 = vor.u32 1.1754944e-38, %v2346
      %v2348 = vsel %vm2345, %v2347, %v2343
      %v2349 = vmul.f32 1.0, %v2348
      %v2350 = vrcp.pop %v1876
      %v2351 = vmul.f32 %v1876, %v2350
      %v2352 = vsub.f32 1.0, %v2351
      %v2353 = vmul.f32 %v2350, %v2352
      %v2354 = vadd.f32 %v2350, %v2353
      %vm2355 = vweird.f32 %v1876
      %vm2356 = vweird.f32 %v2350
      %vm2357 = vmor %vm2355, %vm2356
      %v2358 = vsel %vm2357, %v2350, %v2354
      %v2359 = vand.u32 2147483647, %v1876
      %vm2360 = vcmp.eq.f32.partialorder %v2359, 8.507059e+37
      %v2361 = vand.u32 %v1876, 2147483648
      %v2362 = vor.u32 1.1754944e-38, %v2361
      %v2363 = vsel %vm2360, %v2362, %v2358
      %v2364 = vmul.f32 1.0, %v2363
      %v2365 = vrcp.pop %v1877
      %v2366 = vmul.f32 %v1877, %v2365
      %v2367 = vsub.f32 1.0, %v2366
      %v2368 = vmul.f32 %v2365, %v2367
      %v2369 = vadd.f32 %v2365, %v2368
      %vm2370 = vweird.f32 %v1877
      %vm2371 = vweird.f32 %v2365
      %vm2372 = vmor %vm2370, %vm2371
      %v2373 = vsel %vm2372, %v2365, %v2369
      %v2374 = vand.u32 2147483647, %v1877
      %vm2375 = vcmp.eq.f32.partialorder %v2374, 8.507059e+37
      %v2376 = vand.u32 %v1877, 2147483648
      %v2377 = vor.u32 1.1754944e-38, %v2376
      %v2378 = vsel %vm2375, %v2377, %v2373
      %v2379 = vmul.f32 1.0, %v2378
      %v2380 = vrcp.pop %v1878
      %v2381 = vmul.f32 %v1878, %v2380
      %v2382 = vsub.f32 1.0, %v2381
      %v2383 = vmul.f32 %v2380, %v2382
      %v2384 = vadd.f32 %v2380, %v2383
      %vm2385 = vweird.f32 %v1878
      %vm2386 = vweird.f32 %v2380
      %vm2387 = vmor %vm2385, %vm2386
      %v2388 = vsel %vm2387, %v2380, %v2384
      %v2389 = vand.u32 2147483647, %v1878
      %vm2390 = vcmp.eq.f32.partialorder %v2389, 8.507059e+37
      %v2391 = vand.u32 %v1878, 2147483648
      %v2392 = vor.u32 1.1754944e-38, %v2391
      %v2393 = vsel %vm2390, %v2392, %v2388
      %v2394 = vmul.f32 1.0, %v2393
      %v2395 = vrcp.pop %v1879
      %v2396 = vmul.f32 %v1879, %v2395
      %v2397 = vsub.f32 1.0, %v2396
      %v2398 = vmul.f32 %v2395, %v2397
      %v2399 = vadd.f32 %v2395, %v2398
      %vm2400 = vweird.f32 %v1879
      %vm2401 = vweird.f32 %v2395
      %vm2402 = vmor %vm2400, %vm2401
      %v2403 = vsel %vm2402, %v2395, %v2399
      %v2404 = vand.u32 2147483647, %v1879
      %vm2405 = vcmp.eq.f32.partialorder %v2404, 8.507059e+37
      %v2406 = vand.u32 %v1879, 2147483648
      %v2407 = vor.u32 1.1754944e-38, %v2406
      %v2408 = vsel %vm2405, %v2407, %v2403
      %v2409 = vmul.f32 1.0, %v2408
      %v2410 = vrcp.pop %v1880
      %v2411 = vmul.f32 %v1880, %v2410
      %v2412 = vsub.f32 1.0, %v2411
      %v2413 = vmul.f32 %v2410, %v2412
      %v2414 = vadd.f32 %v2410, %v2413
      %vm2415 = vweird.f32 %v1880
      %vm2416 = vweird.f32 %v2410
      %vm2417 = vmor %vm2415, %vm2416
      %v2418 = vsel %vm2417, %v2410, %v2414
      %v2419 = vand.u32 2147483647, %v1880
      %vm2420 = vcmp.eq.f32.partialorder %v2419, 8.507059e+37
      %v2421 = vand.u32 %v1880, 2147483648
      %v2422 = vor.u32 1.1754944e-38, %v2421
      %v2423 = vsel %vm2420, %v2422, %v2418
      %v2424 = vmul.f32 1.0, %v2423
      %v2425 = vrcp.pop %v1881
      %v2426 = vmul.f32 %v1881, %v2425
      %v2427 = vsub.f32 1.0, %v2426
      %v2428 = vmul.f32 %v2425, %v2427
      %v2429 = vadd.f32 %v2425, %v2428
      %vm2430 = vweird.f32 %v1881
      %vm2431 = vweird.f32 %v2425
      %vm2432 = vmor %vm2430, %vm2431
      %v2433 = vsel %vm2432, %v2425, %v2429
      %v2434 = vand.u32 2147483647, %v1881
      %vm2435 = vcmp.eq.f32.partialorder %v2434, 8.507059e+37
      %v2436 = vand.u32 %v1881, 2147483648
      %v2437 = vor.u32 1.1754944e-38, %v2436
      %v2438 = vsel %vm2435, %v2437, %v2433
      %v2439 = vmul.f32 1.0, %v2438
      %v2440 = vrcp.pop %v1882
      %v2441 = vmul.f32 %v1882, %v2440
      %v2442 = vsub.f32 1.0, %v2441
      %v2443 = vmul.f32 %v2440, %v2442
      %v2444 = vadd.f32 %v2440, %v2443
      %vm2445 = vweird.f32 %v1882
      %vm2446 = vweird.f32 %v2440
      %vm2447 = vmor %vm2445, %vm2446
      %v2448 = vsel %vm2447, %v2440, %v2444
      %v2449 = vand.u32 2147483647, %v1882
      %vm2450 = vcmp.eq.f32.partialorder %v2449, 8.507059e+37
      %v2451 = vand.u32 %v1882, 2147483648
      %v2452 = vor.u32 1.1754944e-38, %v2451
      %v2453 = vsel %vm2450, %v2452, %v2448
      %v2454 = vmul.f32 1.0, %v2453
      %v2455 = vrcp.pop %v1883
      %v2456 = vmul.f32 %v1883, %v2455
      %v2457 = vsub.f32 1.0, %v2456
      %v2458 = vmul.f32 %v2455, %v2457
      %v2459 = vadd.f32 %v2455, %v2458
      %vm2460 = vweird.f32 %v1883
      %vm2461 = vweird.f32 %v2455
      %vm2462 = vmor %vm2460, %vm2461
      %v2463 = vsel %vm2462, %v2455, %v2459
      %v2464 = vand.u32 2147483647, %v1883
      %vm2465 = vcmp.eq.f32.partialorder %v2464, 8.507059e+37
      %v2466 = vand.u32 %v1883, 2147483648
      %v2467 = vor.u32 1.1754944e-38, %v2466
      %v2468 = vsel %vm2465, %v2467, %v2463
      %v2469 = vmul.f32 1.0, %v2468
      %v2470 = vrcp.pop %v1884
      %v2471 = vmul.f32 %v1884, %v2470
      %v2472 = vsub.f32 1.0, %v2471
      %v2473 = vmul.f32 %v2470, %v2472
      %v2474 = vadd.f32 %v2470, %v2473
      %vm2475 = vweird.f32 %v1884
      %vm2476 = vweird.f32 %v2470
      %vm2477 = vmor %vm2475, %vm2476
      %v2478 = vsel %vm2477, %v2470, %v2474
      %v2479 = vand.u32 2147483647, %v1884
      %vm2480 = vcmp.eq.f32.partialorder %v2479, 8.507059e+37
      %v2481 = vand.u32 %v1884, 2147483648
      %v2482 = vor.u32 1.1754944e-38, %v2481
      %v2483 = vsel %vm2480, %v2482, %v2478
      %v2484 = vmul.f32 1.0, %v2483
      %v2485 = vmul.f32 %v1899, 1.0614054
      %v2486 = vmul.f32 %v1914, 1.0614054
      %v2487 = vmul.f32 %v1929, 1.0614054
      %v2488 = vmul.f32 %v1944, 1.0614054
      %v2489 = vmul.f32 %v1959, 1.0614054
      %v2490 = vmul.f32 %v1974, 1.0614054
      %v2491 = vmul.f32 %v1989, 1.0614054
      %v2492 = vmul.f32 %v2004, 1.0614054
      %v2493 = vmul.f32 %v2019, 1.0614054
      %v2494 = vmul.f32 %v2034, 1.0614054
      %v2495 = vmul.f32 %v2049, 1.0614054
      %v2496 = vmul.f32 %v2064, 1.0614054
      %v2497 = vmul.f32 %v2079, 1.0614054
      %v2498 = vmul.f32 %v2094, 1.0614054
      %v2499 = vmul.f32 %v2109, 1.0614054
      %v2500 = vmul.f32 %v2124, 1.0614054
      %v2501 = vmul.f32 %v2139, 1.0614054
      %v2502 = vmul.f32 %v2154, 1.0614054
      %v2503 = vmul.f32 %v2169, 1.0614054
      %v2504 = vmul.f32 %v2184, 1.0614054
      %v2505 = vmul.f32 %v2199, 1.0614054
      %v2506 = vmul.f32 %v2214, 1.0614054
      %v2507 = vmul.f32 %v2229, 1.0614054
      %v2508 = vmul.f32 %v2244, 1.0614054
      %v2509 = vmul.f32 %v2259, 1.0614054
      %v2510 = vmul.f32 %v2274, 1.0614054
      %v2511 = vmul.f32 %v2289, 1.0614054
      %v2512 = vmul.f32 %v2304, 1.0614054
      %v2513 = vmul.f32 %v2319, 1.0614054
      %v2514 = vmul.f32 %v2334, 1.0614054
      %v2515 = vmul.f32 %v2349, 1.0614054
      %v2516 = vmul.f32 %v2364, 1.0614054
      %v2517 = vmul.f32 %v2379, 1.0614054
      %v2518 = vmul.f32 %v2394, 1.0614054
      %v2519 = vmul.f32 %v2409, 1.0614054
      %v2520 = vmul.f32 %v2424, 1.0614054
      %v2521 = vmul.f32 %v2439, 1.0614054
      %v2522 = vmul.f32 %v2454, 1.0614054
      %v2523 = vmul.f32 %v2469, 1.0614054
      %v2524 = vmul.f32 %v2484, 1.0614054
      %v2525 = vadd.f32 %v2485, -1.4531521
      %v2526 = vadd.f32 %v2486, -1.4531521
      %v2527 = vadd.f32 %v2487, -1.4531521
      %v2528 = vadd.f32 %v2488, -1.4531521
      %v2529 = vadd.f32 %v2489, -1.4531521
      %v2530 = vadd.f32 %v2490, -1.4531521
      %v2531 = vadd.f32 %v2491, -1.4531521
      %v2532 = vadd.f32 %v2492, -1.4531521
      %v2533 = vadd.f32 %v2493, -1.4531521
      %v2534 = vadd.f32 %v2494, -1.4531521
      %v2535 = vadd.f32 %v2495, -1.4531521
      %v2536 = vadd.f32 %v2496, -1.4531521
      %v2537 = vadd.f32 %v2497, -1.4531521
      %v2538 = vadd.f32 %v2498, -1.4531521
      %v2539 = vadd.f32 %v2499, -1.4531521
      %v2540 = vadd.f32 %v2500, -1.4531521
      %v2541 = vadd.f32 %v2501, -1.4531521
      %v2542 = vadd.f32 %v2502, -1.4531521
      %v2543 = vadd.f32 %v2503, -1.4531521
      %v2544 = vadd.f32 %v2504, -1.4531521
      %v2545 = vadd.f32 %v2505, -1.4531521
      %v2546 = vadd.f32 %v2506, -1.4531521
      %v2547 = vadd.f32 %v2507, -1.4531521
      %v2548 = vadd.f32 %v2508, -1.4531521
      %v2549 = vadd.f32 %v2509, -1.4531521
      %v2550 = vadd.f32 %v2510, -1.4531521
      %v2551 = vadd.f32 %v2511, -1.4531521
      %v2552 = vadd.f32 %v2512, -1.4531521
      %v2553 = vadd.f32 %v2513, -1.4531521
      %v2554 = vadd.f32 %v2514, -1.4531521
      %v2555 = vadd.f32 %v2515, -1.4531521
      %v2556 = vadd.f32 %v2516, -1.4531521
      %v2557 = vadd.f32 %v2517, -1.4531521
      %v2558 = vadd.f32 %v2518, -1.4531521
      %v2559 = vadd.f32 %v2519, -1.4531521
      %v2560 = vadd.f32 %v2520, -1.4531521
      %v2561 = vadd.f32 %v2521, -1.4531521
      %v2562 = vadd.f32 %v2522, -1.4531521
      %v2563 = vadd.f32 %v2523, -1.4531521
      %v2564 = vadd.f32 %v2524, -1.4531521
      %v2565 = vmul.f32 %v2525, %v1899
      %v2566 = vmul.f32 %v2526, %v1914
      %v2567 = vmul.f32 %v2527, %v1929
      %v2568 = vmul.f32 %v2528, %v1944
      %v2569 = vmul.f32 %v2529, %v1959
      %v2570 = vmul.f32 %v2530, %v1974
      %v2571 = vmul.f32 %v2531, %v1989
      %v2572 = vmul.f32 %v2532, %v2004
      %v2573 = vmul.f32 %v2533, %v2019
      %v2574 = vmul.f32 %v2534, %v2034
      %v2575 = vmul.f32 %v2535, %v2049
      %v2576 = vmul.f32 %v2536, %v2064
      %v2577 = vmul.f32 %v2537, %v2079
      %v2578 = vmul.f32 %v2538, %v2094
      %v2579 = vmul.f32 %v2539, %v2109
      %v2580 = vmul.f32 %v2540, %v2124
      %v2581 = vmul.f32 %v2541, %v2139
      %v2582 = vmul.f32 %v2542, %v2154
      %v2583 = vmul.f32 %v2543, %v2169
      %v2584 = vmul.f32 %v2544, %v2184
      %v2585 = vmul.f32 %v2545, %v2199
      %v2586 = vmul.f32 %v2546, %v2214
      %v2587 = vmul.f32 %v2547, %v2229
      %v2588 = vmul.f32 %v2548, %v2244
      %v2589 = vmul.f32 %v2549, %v2259
      %v2590 = vmul.f32 %v2550, %v2274
      %v2591 = vmul.f32 %v2551, %v2289
      %v2592 = vmul.f32 %v2552, %v2304
      %v2593 = vmul.f32 %v2553, %v2319
      %v2594 = vmul.f32 %v2554, %v2334
      %v2595 = vmul.f32 %v2555, %v2349
      %v2596 = vmul.f32 %v2556, %v2364
      %v2597 = vmul.f32 %v2557, %v2379
      %v2598 = vmul.f32 %v2558, %v2394
      %v2599 = vmul.f32 %v2559, %v2409
      %v2600 = vmul.f32 %v2560, %v2424
      %v2601 = vmul.f32 %v2561, %v2439
      %v2602 = vmul.f32 %v2562, %v2454
      %v2603 = vmul.f32 %v2563, %v2469
      %v2604 = vmul.f32 %v2564, %v2484
      %v2605 = vadd.f32 %v2565, 1.4214138
      %v2606 = vadd.f32 %v2566, 1.4214138
      %v2607 = vadd.f32 %v2567, 1.4214138
      %v2608 = vadd.f32 %v2568, 1.4214138
      %v2609 = vadd.f32 %v2569, 1.4214138
      %v2610 = vadd.f32 %v2570, 1.4214138
      %v2611 = vadd.f32 %v2571, 1.4214138
      %v2612 = vadd.f32 %v2572, 1.4214138
      %v2613 = vadd.f32 %v2573, 1.4214138
      %v2614 = vadd.f32 %v2574, 1.4214138
      %v2615 = vadd.f32 %v2575, 1.4214138
      %v2616 = vadd.f32 %v2576, 1.4214138
      %v2617 = vadd.f32 %v2577, 1.4214138
      %v2618 = vadd.f32 %v2578, 1.4214138
      %v2619 = vadd.f32 %v2579, 1.4214138
      %v2620 = vadd.f32 %v2580, 1.4214138
      %v2621 = vadd.f32 %v2581, 1.4214138
      %v2622 = vadd.f32 %v2582, 1.4214138
      %v2623 = vadd.f32 %v2583, 1.4214138
      %v2624 = vadd.f32 %v2584, 1.4214138
      %v2625 = vadd.f32 %v2585, 1.4214138
      %v2626 = vadd.f32 %v2586, 1.4214138
      %v2627 = vadd.f32 %v2587, 1.4214138
      %v2628 = vadd.f32 %v2588, 1.4214138
      %v2629 = vadd.f32 %v2589, 1.4214138
      %v2630 = vadd.f32 %v2590, 1.4214138
      %v2631 = vadd.f32 %v2591, 1.4214138
      %v2632 = vadd.f32 %v2592, 1.4214138
      %v2633 = vadd.f32 %v2593, 1.4214138
      %v2634 = vadd.f32 %v2594, 1.4214138
      %v2635 = vadd.f32 %v2595, 1.4214138
      %v2636 = vadd.f32 %v2596, 1.4214138
      %v2637 = vadd.f32 %v2597, 1.4214138
      %v2638 = vadd.f32 %v2598, 1.4214138
      %v2639 = vadd.f32 %v2599, 1.4214138
      %v2640 = vadd.f32 %v2600, 1.4214138
      %v2641 = vadd.f32 %v2601, 1.4214138
      %v2642 = vadd.f32 %v2602, 1.4214138
      %v2643 = vadd.f32 %v2603, 1.4214138
      %v2644 = vadd.f32 %v2604, 1.4214138
      %v2645 = vmul.f32 %v2605, %v1899
      %v2646 = vmul.f32 %v2606, %v1914
      %v2647 = vmul.f32 %v2607, %v1929
      %v2648 = vmul.f32 %v2608, %v1944
      %v2649 = vmul.f32 %v2609, %v1959
      %v2650 = vmul.f32 %v2610, %v1974
      %v2651 = vmul.f32 %v2611, %v1989
      %v2652 = vmul.f32 %v2612, %v2004
      %v2653 = vmul.f32 %v2613, %v2019
      %v2654 = vmul.f32 %v2614, %v2034
      %v2655 = vmul.f32 %v2615, %v2049
      %v2656 = vmul.f32 %v2616, %v2064
      %v2657 = vmul.f32 %v2617, %v2079
      %v2658 = vmul.f32 %v2618, %v2094
      %v2659 = vmul.f32 %v2619, %v2109
      %v2660 = vmul.f32 %v2620, %v2124
      %v2661 = vmul.f32 %v2621, %v2139
      %v2662 = vmul.f32 %v2622, %v2154
      %v2663 = vmul.f32 %v2623, %v2169
      %v2664 = vmul.f32 %v2624, %v2184
      %v2665 = vmul.f32 %v2625, %v2199
      %v2666 = vmul.f32 %v2626, %v2214
      %v2667 = vmul.f32 %v2627, %v2229
      %v2668 = vmul.f32 %v2628, %v2244
      %v2669 = vmul.f32 %v2629, %v2259
      %v2670 = vmul.f32 %v2630, %v2274
      %v2671 = vmul.f32 %v2631, %v2289
      %v2672 = vmul.f32 %v2632, %v2304
      %v2673 = vmul.f32 %v2633, %v2319
      %v2674 = vmul.f32 %v2634, %v2334
      %v2675 = vmul.f32 %v2635, %v2349
      %v2676 = vmul.f32 %v2636, %v2364
      %v2677 = vmul.f32 %v2637, %v2379
      %v2678 = vmul.f32 %v2638, %v2394
      %v2679 = vmul.f32 %v2639, %v2409
      %v2680 = vmul.f32 %v2640, %v2424
      %v2681 = vmul.f32 %v2641, %v2439
      %v2682 = vmul.f32 %v2642, %v2454
      %v2683 = vmul.f32 %v2643, %v2469
      %v2684 = vmul.f32 %v2644, %v2484
      %v2685 = vadd.f32 %v2645, -0.28449672
      %v2686 = vadd.f32 %v2646, -0.28449672
      %v2687 = vadd.f32 %v2647, -0.28449672
      %v2688 = vadd.f32 %v2648, -0.28449672
      %v2689 = vadd.f32 %v2649, -0.28449672
      %v2690 = vadd.f32 %v2650, -0.28449672
      %v2691 = vadd.f32 %v2651, -0.28449672
      %v2692 = vadd.f32 %v2652, -0.28449672
      %v2693 = vadd.f32 %v2653, -0.28449672
      %v2694 = vadd.f32 %v2654, -0.28449672
      %v2695 = vadd.f32 %v2655, -0.28449672
      %v2696 = vadd.f32 %v2656, -0.28449672
      %v2697 = vadd.f32 %v2657, -0.28449672
      %v2698 = vadd.f32 %v2658, -0.28449672
      %v2699 = vadd.f32 %v2659, -0.28449672
      %v2700 = vadd.f32 %v2660, -0.28449672
      %v2701 = vadd.f32 %v2661, -0.28449672
      %v2702 = vadd.f32 %v2662, -0.28449672
      %v2703 = vadd.f32 %v2663, -0.28449672
      %v2704 = vadd.f32 %v2664, -0.28449672
      %v2705 = vadd.f32 %v2665, -0.28449672
      %v2706 = vadd.f32 %v2666, -0.28449672
      %v2707 = vadd.f32 %v2667, -0.28449672
      %v2708 = vadd.f32 %v2668, -0.28449672
      %v2709 = vadd.f32 %v2669, -0.28449672
      %v2710 = vadd.f32 %v2670, -0.28449672
      %v2711 = vadd.f32 %v2671, -0.28449672
      %v2712 = vadd.f32 %v2672, -0.28449672
      %v2713 = vadd.f32 %v2673, -0.28449672
      %v2714 = vadd.f32 %v2674, -0.28449672
      %v2715 = vadd.f32 %v2675, -0.28449672
      %v2716 = vadd.f32 %v2676, -0.28449672
      %v2717 = vadd.f32 %v2677, -0.28449672
      %v2718 = vadd.f32 %v2678, -0.28449672
      %v2719 = vadd.f32 %v2679, -0.28449672
      %v2720 = vadd.f32 %v2680, -0.28449672
      %v2721 = vadd.f32 %v2681, -0.28449672
      %v2722 = vadd.f32 %v2682, -0.28449672
      %v2723 = vadd.f32 %v2683, -0.28449672
      %v2724 = vadd.f32 %v2684, -0.28449672
      %v2725 = vmul.f32 %v2685, %v1899
      %v2726 = vmul.f32 %v2686, %v1914
      %v2727 = vmul.f32 %v2687, %v1929
      %v2728 = vmul.f32 %v2688, %v1944
      %v2729 = vmul.f32 %v2689, %v1959
      %v2730 = vmul.f32 %v2690, %v1974
      %v2731 = vmul.f32 %v2691, %v1989
      %v2732 = vmul.f32 %v2692, %v2004
      %v2733 = vmul.f32 %v2693, %v2019
      %v2734 = vmul.f32 %v2694, %v2034
      %v2735 = vmul.f32 %v2695, %v2049
      %v2736 = vmul.f32 %v2696, %v2064
      %v2737 = vmul.f32 %v2697, %v2079
      %v2738 = vmul.f32 %v2698, %v2094
      %v2739 = vmul.f32 %v2699, %v2109
      %v2740 = vmul.f32 %v2700, %v2124
      %v2741 = vmul.f32 %v2701, %v2139
      %v2742 = vmul.f32 %v2702, %v2154
      %v2743 = vmul.f32 %v2703, %v2169
      %v2744 = vmul.f32 %v2704, %v2184
      %v2745 = vmul.f32 %v2705, %v2199
      %v2746 = vmul.f32 %v2706, %v2214
      %v2747 = vmul.f32 %v2707, %v2229
      %v2748 = vmul.f32 %v2708, %v2244
      %v2749 = vmul.f32 %v2709, %v2259
      %v2750 = vmul.f32 %v2710, %v2274
      %v2751 = vmul.f32 %v2711, %v2289
      %v2752 = vmul.f32 %v2712, %v2304
      %v2753 = vmul.f32 %v2713, %v2319
      %v2754 = vmul.f32 %v2714, %v2334
      %v2755 = vmul.f32 %v2715, %v2349
      %v2756 = vmul.f32 %v2716, %v2364
      %v2757 = vmul.f32 %v2717, %v2379
      %v2758 = vmul.f32 %v2718, %v2394
      %v2759 = vmul.f32 %v2719, %v2409
      %v2760 = vmul.f32 %v2720, %v2424
      %v2761 = vmul.f32 %v2721, %v2439
      %v2762 = vmul.f32 %v2722, %v2454
      %v2763 = vmul.f32 %v2723, %v2469
      %v2764 = vmul.f32 %v2724, %v2484
      %v2765 = vadd.f32 %v2725, 0.2548296
      %v2766 = vadd.f32 %v2726, 0.2548296
      %v2767 = vadd.f32 %v2727, 0.2548296
      %v2768 = vadd.f32 %v2728, 0.2548296
      %v2769 = vadd.f32 %v2729, 0.2548296
      %v2770 = vadd.f32 %v2730, 0.2548296
      %v2771 = vadd.f32 %v2731, 0.2548296
      %v2772 = vadd.f32 %v2732, 0.2548296
      %v2773 = vadd.f32 %v2733, 0.2548296
      %v2774 = vadd.f32 %v2734, 0.2548296
      %v2775 = vadd.f32 %v2735, 0.2548296
      %v2776 = vadd.f32 %v2736, 0.2548296
      %v2777 = vadd.f32 %v2737, 0.2548296
      %v2778 = vadd.f32 %v2738, 0.2548296
      %v2779 = vadd.f32 %v2739, 0.2548296
      %v2780 = vadd.f32 %v2740, 0.2548296
      %v2781 = vadd.f32 %v2741, 0.2548296
      %v2782 = vadd.f32 %v2742, 0.2548296
      %v2783 = vadd.f32 %v2743, 0.2548296
      %v2784 = vadd.f32 %v2744, 0.2548296
      %v2785 = vadd.f32 %v2745, 0.2548296
      %v2786 = vadd.f32 %v2746, 0.2548296
      %v2787 = vadd.f32 %v2747, 0.2548296
      %v2788 = vadd.f32 %v2748, 0.2548296
      %v2789 = vadd.f32 %v2749, 0.2548296
      %v2790 = vadd.f32 %v2750, 0.2548296
      %v2791 = vadd.f32 %v2751, 0.2548296
      %v2792 = vadd.f32 %v2752, 0.2548296
      %v2793 = vadd.f32 %v2753, 0.2548296
      %v2794 = vadd.f32 %v2754, 0.2548296
      %v2795 = vadd.f32 %v2755, 0.2548296
      %v2796 = vadd.f32 %v2756, 0.2548296
      %v2797 = vadd.f32 %v2757, 0.2548296
      %v2798 = vadd.f32 %v2758, 0.2548296
      %v2799 = vadd.f32 %v2759, 0.2548296
      %v2800 = vadd.f32 %v2760, 0.2548296
      %v2801 = vadd.f32 %v2761, 0.2548296
      %v2802 = vadd.f32 %v2762, 0.2548296
      %v2803 = vadd.f32 %v2763, 0.2548296
      %v2804 = vadd.f32 %v2764, 0.2548296
      %v2805 = vmul.f32 %v2765, %v1899
      %v2806 = vmul.f32 %v2766, %v1914
      %v2807 = vmul.f32 %v2767, %v1929
      %v2808 = vmul.f32 %v2768, %v1944
      %v2809 = vmul.f32 %v2769, %v1959
      %v2810 = vmul.f32 %v2770, %v1974
      %v2811 = vmul.f32 %v2771, %v1989
      %v2812 = vmul.f32 %v2772, %v2004
      %v2813 = vmul.f32 %v2773, %v2019
      %v2814 = vmul.f32 %v2774, %v2034
      %v2815 = vmul.f32 %v2775, %v2049
      %v2816 = vmul.f32 %v2776, %v2064
      %v2817 = vmul.f32 %v2777, %v2079
      %v2818 = vmul.f32 %v2778, %v2094
      %v2819 = vmul.f32 %v2779, %v2109
      %v2820 = vmul.f32 %v2780, %v2124
      %v2821 = vmul.f32 %v2781, %v2139
      %v2822 = vmul.f32 %v2782, %v2154
      %v2823 = vmul.f32 %v2783, %v2169
      %v2824 = vmul.f32 %v2784, %v2184
      %v2825 = vmul.f32 %v2785, %v2199
      %v2826 = vmul.f32 %v2786, %v2214
      %v2827 = vmul.f32 %v2787, %v2229
      %v2828 = vmul.f32 %v2788, %v2244
      %v2829 = vmul.f32 %v2789, %v2259
      %v2830 = vmul.f32 %v2790, %v2274
      %v2831 = vmul.f32 %v2791, %v2289
      %v2832 = vmul.f32 %v2792, %v2304
      %v2833 = vmul.f32 %v2793, %v2319
      %v2834 = vmul.f32 %v2794, %v2334
      %v2835 = vmul.f32 %v2795, %v2349
      %v2836 = vmul.f32 %v2796, %v2364
      %v2837 = vmul.f32 %v2797, %v2379
      %v2838 = vmul.f32 %v2798, %v2394
      %v2839 = vmul.f32 %v2799, %v2409
      %v2840 = vmul.f32 %v2800, %v2424
      %v2841 = vmul.f32 %v2801, %v2439
      %v2842 = vmul.f32 %v2802, %v2454
      %v2843 = vmul.f32 %v2803, %v2469
      %v2844 = vmul.f32 %v2804, %v2484
      %v2845 = vsub.f32 0.0, %v1765
      %v2846 = vsub.f32 0.0, %v1766
      %v2847 = vsub.f32 0.0, %v1767
      %v2848 = vsub.f32 0.0, %v1768
      %v2849 = vsub.f32 0.0, %v1769
      %v2850 = vsub.f32 0.0, %v1770
      %v2851 = vsub.f32 0.0, %v1771
      %v2852 = vsub.f32 0.0, %v1772
      %v2853 = vsub.f32 0.0, %v1773
      %v2854 = vsub.f32 0.0, %v1774
      %v2855 = vsub.f32 0.0, %v1775
      %v2856 = vsub.f32 0.0, %v1776
      %v2857 = vsub.f32 0.0, %v1777
      %v2858 = vsub.f32 0.0, %v1778
      %v2859 = vsub.f32 0.0, %v1779
      %v2860 = vsub.f32 0.0, %v1780
      %v2861 = vsub.f32 0.0, %v1781
      %v2862 = vsub.f32 0.0, %v1782
      %v2863 = vsub.f32 0.0, %v1783
      %v2864 = vsub.f32 0.0, %v1784
      %v2865 = vsub.f32 0.0, %v1785
      %v2866 = vsub.f32 0.0, %v1786
      %v2867 = vsub.f32 0.0, %v1787
      %v2868 = vsub.f32 0.0, %v1788
      %v2869 = vsub.f32 0.0, %v1789
      %v2870 = vsub.f32 0.0, %v1790
      %v2871 = vsub.f32 0.0, %v1791
      %v2872 = vsub.f32 0.0, %v1792
      %v2873 = vsub.f32 0.0, %v1793
      %v2874 = vsub.f32 0.0, %v1794
      %v2875 = vsub.f32 0.0, %v1795
      %v2876 = vsub.f32 0.0, %v1796
      %v2877 = vsub.f32 0.0, %v1797
      %v2878 = vsub.f32 0.0, %v1798
      %v2879 = vsub.f32 0.0, %v1799
      %v2880 = vsub.f32 0.0, %v1800
      %v2881 = vsub.f32 0.0, %v1801
      %v2882 = vsub.f32 0.0, %v1802
      %v2883 = vsub.f32 0.0, %v1803
      %v2884 = vsub.f32 0.0, %v1804
      %v2885 = vmul.f32 %v2845, %v1765
      %v2886 = vmul.f32 %v2846, %v1766
      %v2887 = vmul.f32 %v2847, %v1767
      %v2888 = vmul.f32 %v2848, %v1768
      %v2889 = vmul.f32 %v2849, %v1769
      %v2890 = vmul.f32 %v2850, %v1770
      %v2891 = vmul.f32 %v2851, %v1771
      %v2892 = vmul.f32 %v2852, %v1772
      %v2893 = vmul.f32 %v2853, %v1773
      %v2894 = vmul.f32 %v2854, %v1774
      %v2895 = vmul.f32 %v2855, %v1775
      %v2896 = vmul.f32 %v2856, %v1776
      %v2897 = vmul.f32 %v2857, %v1777
      %v2898 = vmul.f32 %v2858, %v1778
      %v2899 = vmul.f32 %v2859, %v1779
      %v2900 = vmul.f32 %v2860, %v1780
      %v2901 = vmul.f32 %v2861, %v1781
      %v2902 = vmul.f32 %v2862, %v1782
      %v2903 = vmul.f32 %v2863, %v1783
      %v2904 = vmul.f32 %v2864, %v1784
      %v2905 = vmul.f32 %v2865, %v1785
      %v2906 = vmul.f32 %v2866, %v1786
      %v2907 = vmul.f32 %v2867, %v1787
      %v2908 = vmul.f32 %v2868, %v1788
      %v2909 = vmul.f32 %v2869, %v1789
      %v2910 = vmul.f32 %v2870, %v1790
      %v2911 = vmul.f32 %v2871, %v1791
      %v2912 = vmul.f32 %v2872, %v1792
      %v2913 = vmul.f32 %v2873, %v1793
      %v2914 = vmul.f32 %v2874, %v1794
      %v2915 = vmul.f32 %v2875, %v1795
      %v2916 = vmul.f32 %v2876, %v1796
      %v2917 = vmul.f32 %v2877, %v1797
      %v2918 = vmul.f32 %v2878, %v1798
      %v2919 = vmul.f32 %v2879, %v1799
      %v2920 = vmul.f32 %v2880, %v1800
      %v2921 = vmul.f32 %v2881, %v1801
      %v2922 = vmul.f32 %v2882, %v1802
      %v2923 = vmul.f32 %v2883, %v1803
      %v2924 = vmul.f32 %v2884, %v1804
      %v2925 = vmul.f32 %v2885, 1.442695
      %v2926 = vpow.pop %v2925
      %v2927 = vmul.f32 %v2886, 1.442695
      %v2928 = vpow.pop %v2927
      %v2929 = vmul.f32 %v2887, 1.442695
      %v2930 = vpow.pop %v2929
      %v2931 = vmul.f32 %v2888, 1.442695
      %v2932 = vpow.pop %v2931
      %v2933 = vmul.f32 %v2889, 1.442695
      %v2934 = vpow.pop %v2933
      %v2935 = vmul.f32 %v2890, 1.442695
      %v2936 = vpow.pop %v2935
      %v2937 = vmul.f32 %v2891, 1.442695
      %v2938 = vpow.pop %v2937
      %v2939 = vmul.f32 %v2892, 1.442695
      %v2940 = vpow.pop %v2939
      %v2941 = vmul.f32 %v2893, 1.442695
      %v2942 = vpow.pop %v2941
      %v2943 = vmul.f32 %v2894, 1.442695
      %v2944 = vpow.pop %v2943
      %v2945 = vmul.f32 %v2895, 1.442695
      %v2946 = vpow.pop %v2945
      %v2947 = vmul.f32 %v2896, 1.442695
      %v2948 = vpow.pop %v2947
      %v2949 = vmul.f32 %v2897, 1.442695
      %v2950 = vpow.pop %v2949
      %v2951 = vmul.f32 %v2898, 1.442695
      %v2952 = vpow.pop %v2951
      %v2953 = vmul.f32 %v2899, 1.442695
      %v2954 = vpow.pop %v2953
      %v2955 = vmul.f32 %v2900, 1.442695
      %v2956 = vpow.pop %v2955
      %v2957 = vmul.f32 %v2901, 1.442695
      %v2958 = vpow.pop %v2957
      %v2959 = vmul.f32 %v2902, 1.442695
      %v2960 = vpow.pop %v2959
      %v2961 = vmul.f32 %v2903, 1.442695
      %v2962 = vpow.pop %v2961
      %v2963 = vmul.f32 %v2904, 1.442695
      %v2964 = vpow.pop %v2963
      %v2965 = vmul.f32 %v2905, 1.442695
      %v2966 = vpow.pop %v2965
      %v2967 = vmul.f32 %v2906, 1.442695
      %v2968 = vpow.pop %v2967
      %v2969 = vmul.f32 %v2907, 1.442695
      %v2970 = vpow.pop %v2969
      %v2971 = vmul.f32 %v2908, 1.442695
      %v2972 = vpow.pop %v2971
      %v2973 = vmul.f32 %v2909, 1.442695
      %v2974 = vpow.pop %v2973
      %v2975 = vmul.f32 %v2910, 1.442695
      %v2976 = vpow.pop %v2975
      %v2977 = vmul.f32 %v2911, 1.442695
      %v2978 = vpow.pop %v2977
      %v2979 = vmul.f32 %v2912, 1.442695
      %v2980 = vpow.pop %v2979
      %v2981 = vmul.f32 %v2913, 1.442695
      %v2982 = vpow.pop %v2981
      %v2983 = vmul.f32 %v2914, 1.442695
      %v2984 = vpow.pop %v2983
      %v2985 = vmul.f32 %v2915, 1.442695
      %v2986 = vpow.pop %v2985
      %v2987 = vmul.f32 %v2916, 1.442695
      %v2988 = vpow.pop %v2987
      %v2989 = vmul.f32 %v2917, 1.442695
      %v2990 = vpow.pop %v2989
      %v2991 = vmul.f32 %v2918, 1.442695
      %v2992 = vpow.pop %v2991
      %v2993 = vmul.f32 %v2919, 1.442695
      %v2994 = vpow.pop %v2993
      %v2995 = vmul.f32 %v2920, 1.442695
      %v2996 = vpow.pop %v2995
      %v2997 = vmul.f32 %v2921, 1.442695
      %v2998 = vpow.pop %v2997
      %v2999 = vmul.f32 %v2922, 1.442695
      %v3000 = vpow.pop %v2999
      %v3001 = vmul.f32 %v2923, 1.442695
      %v3002 = vpow.pop %v3001
      %v3003 = vmul.f32 %v2924, 1.442695
      %v3004 = vpow.pop %v3003
      %v3005 = vmul.f32 %v2805, %v2926
      %v3006 = vmul.f32 %v2806, %v2928
      %v3007 = vmul.f32 %v2807, %v2930
      %v3008 = vmul.f32 %v2808, %v2932
      %v3009 = vmul.f32 %v2809, %v2934
      %v3010 = vmul.f32 %v2810, %v2936
      %v3011 = vmul.f32 %v2811, %v2938
      %v3012 = vmul.f32 %v2812, %v2940
      %v3013 = vmul.f32 %v2813, %v2942
      %v3014 = vmul.f32 %v2814, %v2944
      %v3015 = vmul.f32 %v2815, %v2946
      %v3016 = vmul.f32 %v2816, %v2948
      %v3017 = vmul.f32 %v2817, %v2950
      %v3018 = vmul.f32 %v2818, %v2952
      %v3019 = vmul.f32 %v2819, %v2954
      %v3020 = vmul.f32 %v2820, %v2956
      %v3021 = vmul.f32 %v2821, %v2958
      %v3022 = vmul.f32 %v2822, %v2960
      %v3023 = vmul.f32 %v2823, %v2962
      %v3024 = vmul.f32 %v2824, %v2964
      %v3025 = vmul.f32 %v2825, %v2966
      %v3026 = vmul.f32 %v2826, %v2968
      %v3027 = vmul.f32 %v2827, %v2970
      %v3028 = vmul.f32 %v2828, %v2972
      %v3029 = vmul.f32 %v2829, %v2974
      %v3030 = vmul.f32 %v2830, %v2976
      %v3031 = vmul.f32 %v2831, %v2978
      %v3032 = vmul.f32 %v2832, %v2980
      %v3033 = vmul.f32 %v2833, %v2982
      %v3034 = vmul.f32 %v2834, %v2984
      %v3035 = vmul.f32 %v2835, %v2986
      %v3036 = vmul.f32 %v2836, %v2988
      %v3037 = vmul.f32 %v2837, %v2990
      %v3038 = vmul.f32 %v2838, %v2992
      %v3039 = vmul.f32 %v2839, %v2994
      %v3040 = vmul.f32 %v2840, %v2996
      %v3041 = vmul.f32 %v2841, %v2998
      %v3042 = vmul.f32 %v2842, %v3000
      %v3043 = vmul.f32 %v2843, %v3002
      %v3044 = vmul.f32 %v2844, %v3004
      %v3045 = vsub.f32 1.0, %v3005
      %v3046 = vsub.f32 1.0, %v3006
      %v3047 = vsub.f32 1.0, %v3007
      %v3048 = vsub.f32 1.0, %v3008
      %v3049 = vsub.f32 1.0, %v3009
      %v3050 = vsub.f32 1.0, %v3010
      %v3051 = vsub.f32 1.0, %v3011
      %v3052 = vsub.f32 1.0, %v3012
      %v3053 = vsub.f32 1.0, %v3013
      %v3054 = vsub.f32 1.0, %v3014
      %v3055 = vsub.f32 1.0, %v3015
      %v3056 = vsub.f32 1.0, %v3016
      %v3057 = vsub.f32 1.0, %v3017
      %v3058 = vsub.f32 1.0, %v3018
      %v3059 = vsub.f32 1.0, %v3019
      %v3060 = vsub.f32 1.0, %v3020
      %v3061 = vsub.f32 1.0, %v3021
      %v3062 = vsub.f32 1.0, %v3022
      %v3063 = vsub.f32 1.0, %v3023
      %v3064 = vsub.f32 1.0, %v3024
      %v3065 = vsub.f32 1.0, %v3025
      %v3066 = vsub.f32 1.0, %v3026
      %v3067 = vsub.f32 1.0, %v3027
      %v3068 = vsub.f32 1.0, %v3028
      %v3069 = vsub.f32 1.0, %v3029
      %v3070 = vsub.f32 1.0, %v3030
      %v3071 = vsub.f32 1.0, %v3031
      %v3072 = vsub.f32 1.0, %v3032
      %v3073 = vsub.f32 1.0, %v3033
      %v3074 = vsub.f32 1.0, %v3034
      %v3075 = vsub.f32 1.0, %v3035
      %v3076 = vsub.f32 1.0, %v3036
      %v3077 = vsub.f32 1.0, %v3037
      %v3078 = vsub.f32 1.0, %v3038
      %v3079 = vsub.f32 1.0, %v3039
      %v3080 = vsub.f32 1.0, %v3040
      %v3081 = vsub.f32 1.0, %v3041
      %v3082 = vsub.f32 1.0, %v3042
      %v3083 = vsub.f32 1.0, %v3043
      %v3084 = vsub.f32 1.0, %v3044
      %vm3085 = vcmp.ge.f32.partialorder %v1725, 0.0
      %vm3086 = vcmp.ge.f32.partialorder %v1726, 0.0
      %vm3087 = vcmp.ge.f32.partialorder %v1727, 0.0
      %vm3088 = vcmp.ge.f32.partialorder %v1728, 0.0
      %vm3089 = vcmp.ge.f32.partialorder %v1729, 0.0
      %vm3090 = vcmp.ge.f32.partialorder %v1730, 0.0
      %vm3091 = vcmp.ge.f32.partialorder %v1731, 0.0
      %vm3092 = vcmp.ge.f32.partialorder %v1732, 0.0
      %vm3093 = vcmp.ge.f32.partialorder %v1733, 0.0
      %vm3094 = vcmp.ge.f32.partialorder %v1734, 0.0
      %vm3095 = vcmp.ge.f32.partialorder %v1735, 0.0
      %vm3096 = vcmp.ge.f32.partialorder %v1736, 0.0
      %vm3097 = vcmp.ge.f32.partialorder %v1737, 0.0
      %vm3098 = vcmp.ge.f32.partialorder %v1738, 0.0
      %vm3099 = vcmp.ge.f32.partialorder %v1739, 0.0
      %vm3100 = vcmp.ge.f32.partialorder %v1740, 0.0
      %vm3101 = vcmp.ge.f32.partialorder %v1741, 0.0
      %vm3102 = vcmp.ge.f32.partialorder %v1742, 0.0
      %vm3103 = vcmp.ge.f32.partialorder %v1743, 0.0
      %vm3104 = vcmp.ge.f32.partialorder %v1744, 0.0
      %vm3105 = vcmp.ge.f32.partialorder %v1745, 0.0
      %vm3106 = vcmp.ge.f32.partialorder %v1746, 0.0
      %vm3107 = vcmp.ge.f32.partialorder %v1747, 0.0
      %vm3108 = vcmp.ge.f32.partialorder %v1748, 0.0
      %vm3109 = vcmp.ge.f32.partialorder %v1749, 0.0
      %vm3110 = vcmp.ge.f32.partialorder %v1750, 0.0
      %vm3111 = vcmp.ge.f32.partialorder %v1751, 0.0
      %vm3112 = vcmp.ge.f32.partialorder %v1752, 0.0
      %vm3113 = vcmp.ge.f32.partialorder %v1753, 0.0
      %vm3114 = vcmp.ge.f32.partialorder %v1754, 0.0
      %vm3115 = vcmp.ge.f32.partialorder %v1755, 0.0
      %vm3116 = vcmp.ge.f32.partialorder %v1756, 0.0
      %vm3117 = vcmp.ge.f32.partialorder %v1757, 0.0
      %vm3118 = vcmp.ge.f32.partialorder %v1758, 0.0
      %vm3119 = vcmp.ge.f32.partialorder %v1759, 0.0
      %vm3120 = vcmp.ge.f32.partialorder %v1760, 0.0
      %vm3121 = vcmp.ge.f32.partialorder %v1761, 0.0
      %vm3122 = vcmp.ge.f32.partialorder %v1762, 0.0
      %vm3123 = vcmp.ge.f32.partialorder %v1763, 0.0
      %vm3124 = vcmp.ge.f32.partialorder %v1764, 0.0
      %v3125 = vsub.f32 0.0, %v3045
      %v3126 = vsub.f32 0.0, %v3046
      %v3127 = vsub.f32 0.0, %v3047
      %v3128 = vsub.f32 0.0, %v3048
      %v3129 = vsub.f32 0.0, %v3049
      %v3130 = vsub.f32 0.0, %v3050
      %v3131 = vsub.f32 0.0, %v3051
      %v3132 = vsub.f32 0.0, %v3052
      %v3133 = vsub.f32 0.0, %v3053
      %v3134 = vsub.f32 0.0, %v3054
      %v3135 = vsub.f32 0.0, %v3055
      %v3136 = vsub.f32 0.0, %v3056
      %v3137 = vsub.f32 0.0, %v3057
      %v3138 = vsub.f32 0.0, %v3058
      %v3139 = vsub.f32 0.0, %v3059
      %v3140 = vsub.f32 0.0, %v3060
      %v3141 = vsub.f32 0.0, %v3061
      %v3142 = vsub.f32 0.0, %v3062
      %v3143 = vsub.f32 0.0, %v3063
      %v3144 = vsub.f32 0.0, %v3064
      %v3145 = vsub.f32 0.0, %v3065
      %v3146 = vsub.f32 0.0, %v3066
      %v3147 = vsub.f32 0.0, %v3067
      %v3148 = vsub.f32 0.0, %v3068
      %v3149 = vsub.f32 0.0, %v3069
      %v3150 = vsub.f32 0.0, %v3070
      %v3151 = vsub.f32 0.0, %v3071
      %v3152 = vsub.f32 0.0, %v3072
      %v3153 = vsub.f32 0.0, %v3073
      %v3154 = vsub.f32 0.0, %v3074
      %v3155 = vsub.f32 0.0, %v3075
      %v3156 = vsub.f32 0.0, %v3076
      %v3157 = vsub.f32 0.0, %v3077
      %v3158 = vsub.f32 0.0, %v3078
      %v3159 = vsub.f32 0.0, %v3079
      %v3160 = vsub.f32 0.0, %v3080
      %v3161 = vsub.f32 0.0, %v3081
      %v3162 = vsub.f32 0.0, %v3082
      %v3163 = vsub.f32 0.0, %v3083
      %v3164 = vsub.f32 0.0, %v3084
      %v3165 = vsel %vm3085, %v3045, %v3125
      %v3166 = vsel %vm3086, %v3046, %v3126
      %v3167 = vsel %vm3087, %v3047, %v3127
      %v3168 = vsel %vm3088, %v3048, %v3128
      %v3169 = vsel %vm3089, %v3049, %v3129
      %v3170 = vsel %vm3090, %v3050, %v3130
      %v3171 = vsel %vm3091, %v3051, %v3131
      %v3172 = vsel %vm3092, %v3052, %v3132
      %v3173 = vsel %vm3093, %v3053, %v3133
      %v3174 = vsel %vm3094, %v3054, %v3134
      %v3175 = vsel %vm3095, %v3055, %v3135
      %v3176 = vsel %vm3096, %v3056, %v3136
      %v3177 = vsel %vm3097, %v3057, %v3137
      %v3178 = vsel %vm3098, %v3058, %v3138
      %v3179 = vsel %vm3099, %v3059, %v3139
      %v3180 = vsel %vm3100, %v3060, %v3140
      %v3181 = vsel %vm3101, %v3061, %v3141
      %v3182 = vsel %vm3102, %v3062, %v3142
      %v3183 = vsel %vm3103, %v3063, %v3143
      %v3184 = vsel %vm3104, %v3064, %v3144
      %v3185 = vsel %vm3105, %v3065, %v3145
      %v3186 = vsel %vm3106, %v3066, %v3146
      %v3187 = vsel %vm3107, %v3067, %v3147
      %v3188 = vsel %vm3108, %v3068, %v3148
      %v3189 = vsel %vm3109, %v3069, %v3149
      %v3190 = vsel %vm3110, %v3070, %v3150
      %v3191 = vsel %vm3111, %v3071, %v3151
      %v3192 = vsel %vm3112, %v3072, %v3152
      %v3193 = vsel %vm3113, %v3073, %v3153
      %v3194 = vsel %vm3114, %v3074, %v3154
      %v3195 = vsel %vm3115, %v3075, %v3155
      %v3196 = vsel %vm3116, %v3076, %v3156
      %v3197 = vsel %vm3117, %v3077, %v3157
      %v3198 = vsel %vm3118, %v3078, %v3158
      %v3199 = vsel %vm3119, %v3079, %v3159
      %v3200 = vsel %vm3120, %v3080, %v3160
      %v3201 = vsel %vm3121, %v3081, %v3161
      %v3202 = vsel %vm3122, %v3082, %v3162
      %v3203 = vsel %vm3123, %v3083, %v3163
      %v3204 = vsel %vm3124, %v3084, %v3164
      %v3205 = vadd.f32 %v3165, 1.0
      %v3206 = vadd.f32 %v3166, 1.0
      %v3207 = vadd.f32 %v3167, 1.0
      %v3208 = vadd.f32 %v3168, 1.0
      %v3209 = vadd.f32 %v3169, 1.0
      %v3210 = vadd.f32 %v3170, 1.0
      %v3211 = vadd.f32 %v3171, 1.0
      %v3212 = vadd.f32 %v3172, 1.0
      %v3213 = vadd.f32 %v3173, 1.0
      %v3214 = vadd.f32 %v3174, 1.0
      %v3215 = vadd.f32 %v3175, 1.0
      %v3216 = vadd.f32 %v3176, 1.0
      %v3217 = vadd.f32 %v3177, 1.0
      %v3218 = vadd.f32 %v3178, 1.0
      %v3219 = vadd.f32 %v3179, 1.0
      %v3220 = vadd.f32 %v3180, 1.0
      %v3221 = vadd.f32 %v3181, 1.0
      %v3222 = vadd.f32 %v3182, 1.0
      %v3223 = vadd.f32 %v3183, 1.0
      %v3224 = vadd.f32 %v3184, 1.0
      %v3225 = vadd.f32 %v3185, 1.0
      %v3226 = vadd.f32 %v3186, 1.0
      %v3227 = vadd.f32 %v3187, 1.0
      %v3228 = vadd.f32 %v3188, 1.0
      %v3229 = vadd.f32 %v3189, 1.0
      %v3230 = vadd.f32 %v3190, 1.0
      %v3231 = vadd.f32 %v3191, 1.0
      %v3232 = vadd.f32 %v3192, 1.0
      %v3233 = vadd.f32 %v3193, 1.0
      %v3234 = vadd.f32 %v3194, 1.0
      %v3235 = vadd.f32 %v3195, 1.0
      %v3236 = vadd.f32 %v3196, 1.0
      %v3237 = vadd.f32 %v3197, 1.0
      %v3238 = vadd.f32 %v3198, 1.0
      %v3239 = vadd.f32 %v3199, 1.0
      %v3240 = vadd.f32 %v3200, 1.0
      %v3241 = vadd.f32 %v3201, 1.0
      %v3242 = vadd.f32 %v3202, 1.0
      %v3243 = vadd.f32 %v3203, 1.0
      %v3244 = vadd.f32 %v3204, 1.0
      %v3245 = vmul.f32 %v1685, %v3205
      %v3246 = vmul.f32 %v1686, %v3206
      %v3247 = vmul.f32 %v1687, %v3207
      %v3248 = vmul.f32 %v1688, %v3208
      %v3249 = vmul.f32 %v1689, %v3209
      %v3250 = vmul.f32 %v1690, %v3210
      %v3251 = vmul.f32 %v1691, %v3211
      %v3252 = vmul.f32 %v1692, %v3212
      %v3253 = vmul.f32 %v1693, %v3213
      %v3254 = vmul.f32 %v1694, %v3214
      %v3255 = vmul.f32 %v1695, %v3215
      %v3256 = vmul.f32 %v1696, %v3216
      %v3257 = vmul.f32 %v1697, %v3217
      %v3258 = vmul.f32 %v1698, %v3218
      %v3259 = vmul.f32 %v1699, %v3219
      %v3260 = vmul.f32 %v1700, %v3220
      %v3261 = vmul.f32 %v1701, %v3221
      %v3262 = vmul.f32 %v1702, %v3222
      %v3263 = vmul.f32 %v1703, %v3223
      %v3264 = vmul.f32 %v1704, %v3224
      %v3265 = vmul.f32 %v1705, %v3225
      %v3266 = vmul.f32 %v1706, %v3226
      %v3267 = vmul.f32 %v1707, %v3227
      %v3268 = vmul.f32 %v1708, %v3228
      %v3269 = vmul.f32 %v1709, %v3229
      %v3270 = vmul.f32 %v1710, %v3230
      %v3271 = vmul.f32 %v1711, %v3231
      %v3272 = vmul.f32 %v1712, %v3232
      %v3273 = vmul.f32 %v1713, %v3233
      %v3274 = vmul.f32 %v1714, %v3234
      %v3275 = vmul.f32 %v1715, %v3235
      %v3276 = vmul.f32 %v1716, %v3236
      %v3277 = vmul.f32 %v1717, %v3237
      %v3278 = vmul.f32 %v1718, %v3238
      %v3279 = vmul.f32 %v1719, %v3239
      %v3280 = vmul.f32 %v1720, %v3240
      %v3281 = vmul.f32 %v1721, %v3241
      %v3282 = vmul.f32 %v1722, %v3242
      %v3283 = vmul.f32 %v1723, %v3243
      %v3284 = vmul.f32 %v1724, %v3244
      %p3285 = scmp.gt.s32.totalorder %s22, 0
      %s3286 = scalar_select %p3285, 1, 0
      %s3287 = scvt.s32.f32 %s3286
      %p3288 = scmp.lt.s32.totalorder %s22, 3
      %s3289 = scalar_select %p3288, 1, 0
      %s3290 = scvt.s32.f32 %s3289
      %v3291 = vstv %s3287
      %v3292 = vmul.f32 %v3245, %v3291
      %v3293 = vmul.f32 %v3246, %v3291
      %v3294 = vmul.f32 %v3247, %v3291
      %v3295 = vmul.f32 %v3248, %v3291
      %v3296 = vstv %s3290
      %v3297 = vmul.f32 %v3281, %v3296
      %v3298 = vmul.f32 %v3282, %v3296
      %v3299 = vmul.f32 %v3283, %v3296
      %v3300 = vmul.f32 %v3284, %v3296
      %vm3341 = vcmask 1040384
      %v3342 = vrot.slane %v3292, 7
      %v3343 = vrot.slane %v3293, 7
      %v3344 = vsel %vm3341, %v3342, %v3343
      %v3345 = vrot.slane %v3294, 7
      %v3346 = vsel %vm3341, %v3343, %v3345
      %v3347 = vrot.slane %v3295, 7
      %v3348 = vsel %vm3341, %v3345, %v3347
      %v3349 = vrot.slane %v3249, 7
      %v3350 = vrot.slane %v3250, 7
      %v3351 = vsel %vm3341, %v3349, %v3350
      %v3352 = vrot.slane %v3251, 7
      %v3353 = vsel %vm3341, %v3350, %v3352
      %v3354 = vrot.slane %v3252, 7
      %v3355 = vsel %vm3341, %v3352, %v3354
      %v3356 = vrot.slane %v3253, 7
      %v3357 = vrot.slane %v3254, 7
      %v3358 = vsel %vm3341, %v3356, %v3357
      %v3359 = vrot.slane %v3255, 7
      %v3360 = vsel %vm3341, %v3357, %v3359
      %v3361 = vrot.slane %v3256, 7
      %v3362 = vsel %vm3341, %v3359, %v3361
      %v3363 = vrot.slane %v3257, 7
      %v3364 = vrot.slane %v3258, 7
      %v3365 = vsel %vm3341, %v3363, %v3364
      %v3366 = vrot.slane %v3259, 7
      %v3367 = vsel %vm3341, %v3364, %v3366
      %v3368 = vrot.slane %v3260, 7
      %v3369 = vsel %vm3341, %v3366, %v3368
      %v3370 = vrot.slane %v3261, 7
      %v3371 = vrot.slane %v3262, 7
      %v3372 = vsel %vm3341, %v3370, %v3371
      %v3373 = vrot.slane %v3263, 7
      %v3374 = vsel %vm3341, %v3371, %v3373
      %v3375 = vrot.slane %v3264, 7
      %v3376 = vsel %vm3341, %v3373, %v3375
      %v3377 = vrot.slane %v3265, 7
      %v3378 = vrot.slane %v3266, 7
      %v3379 = vsel %vm3341, %v3377, %v3378
      %v3380 = vrot.slane %v3267, 7
      %v3381 = vsel %vm3341, %v3378, %v3380
      %v3382 = vrot.slane %v3268, 7
      %v3383 = vsel %vm3341, %v3380, %v3382
      %v3384 = vrot.slane %v3269, 7
      %v3385 = vrot.slane %v3270, 7
      %v3386 = vsel %vm3341, %v3384, %v3385
      %v3387 = vrot.slane %v3271, 7
      %v3388 = vsel %vm3341, %v3385, %v3387
      %v3389 = vrot.slane %v3272, 7
      %v3390 = vsel %vm3341, %v3387, %v3389
      %v3391 = vrot.slane %v3273, 7
      %v3392 = vrot.slane %v3274, 7
      %v3393 = vsel %vm3341, %v3391, %v3392
      %v3394 = vrot.slane %v3275, 7
      %v3395 = vsel %vm3341, %v3392, %v3394
      %v3396 = vrot.slane %v3276, 7
      %v3397 = vsel %vm3341, %v3394, %v3396
      %v3398 = vrot.slane %v3277, 7
      %v3399 = vrot.slane %v3278, 7
      %v3400 = vsel %vm3341, %v3398, %v3399
      %v3401 = vrot.slane %v3279, 7
      %v3402 = vsel %vm3341, %v3399, %v3401
      %v3403 = vrot.slane %v3280, 7
      %v3404 = vsel %vm3341, %v3401, %v3403
      %v3405 = vrot.slane %v3297, 7
      %v3406 = vrot.slane %v3298, 7
      %v3407 = vsel %vm3341, %v3405, %v3406
      %v3408 = vrot.slane %v3299, 7
      %v3409 = vsel %vm3341, %v3406, %v3408
      %v3410 = vrot.slane %v3300, 7
      %v3411 = vsel %vm3341, %v3408, %v3410
      %v3462 = vsel %vm3341, 0.0, %v3342
      %v3463 = vsel %vm3341, 0.0, %v3349
      %v3464 = vsel %vm3341, 0.0, %v3356
      %v3465 = vsel %vm3341, 0.0, %v3363
      %v3466 = vsel %vm3341, 0.0, %v3370
      %v3467 = vsel %vm3341, 0.0, %v3377
      %v3468 = vsel %vm3341, 0.0, %v3384
      %v3469 = vsel %vm3341, 0.0, %v3391
      %v3470 = vsel %vm3341, 0.0, %v3398
      %v3471 = vsel %vm3341, 0.0, %v3405
      %v3472 = vsel %vm3341, %v3347, 0.0
      %v3473 = vsel %vm3341, %v3354, 0.0
      %v3474 = vsel %vm3341, %v3361, 0.0
      %v3475 = vsel %vm3341, %v3368, 0.0
      %v3476 = vsel %vm3341, %v3375, 0.0
      %v3477 = vsel %vm3341, %v3382, 0.0
      %v3478 = vsel %vm3341, %v3389, 0.0
      %v3479 = vsel %vm3341, %v3396, 0.0
      %v3480 = vsel %vm3341, %v3403, 0.0
      %v3481 = vsel %vm3341, %v3410, 0.0
      %v3482 = vpack.c.bf16 %v3462, %v3462
      %v3483 = vpack.c.bf16 %v3344, %v3344
      %v3484 = vpack.c.bf16 %v3346, %v3346
      %v3485 = vpack.c.bf16 %v3348, %v3348
      %v3486 = vpack.c.bf16 %v3472, %v3472
      %v3487 = vpack.c.bf16 %v3463, %v3463
      %v3488 = vpack.c.bf16 %v3351, %v3351
      %v3489 = vpack.c.bf16 %v3353, %v3353
      %v3490 = vpack.c.bf16 %v3355, %v3355
      %v3491 = vpack.c.bf16 %v3473, %v3473
      %v3492 = vpack.c.bf16 %v3464, %v3464
      %v3493 = vpack.c.bf16 %v3358, %v3358
      %v3494 = vpack.c.bf16 %v3360, %v3360
      %v3495 = vpack.c.bf16 %v3362, %v3362
      %v3496 = vpack.c.bf16 %v3474, %v3474
      %v3497 = vpack.c.bf16 %v3465, %v3465
      %v3498 = vpack.c.bf16 %v3365, %v3365
      %v3499 = vpack.c.bf16 %v3367, %v3367
      %v3500 = vpack.c.bf16 %v3369, %v3369
      %v3501 = vpack.c.bf16 %v3475, %v3475
      %v3502 = vpack.c.bf16 %v3466, %v3466
      %v3503 = vpack.c.bf16 %v3372, %v3372
      %v3504 = vpack.c.bf16 %v3374, %v3374
      %v3505 = vpack.c.bf16 %v3376, %v3376
      %v3506 = vpack.c.bf16 %v3476, %v3476
      %v3507 = vpack.c.bf16 %v3467, %v3467
      %v3508 = vpack.c.bf16 %v3379, %v3379
      %v3509 = vpack.c.bf16 %v3381, %v3381
      %v3510 = vpack.c.bf16 %v3383, %v3383
      %v3511 = vpack.c.bf16 %v3477, %v3477
      %v3512 = vpack.c.bf16 %v3468, %v3468
      %v3513 = vpack.c.bf16 %v3386, %v3386
      %v3514 = vpack.c.bf16 %v3388, %v3388
      %v3515 = vpack.c.bf16 %v3390, %v3390
      %v3516 = vpack.c.bf16 %v3478, %v3478
      %v3517 = vpack.c.bf16 %v3469, %v3469
      %v3518 = vpack.c.bf16 %v3393, %v3393
      %v3519 = vpack.c.bf16 %v3395, %v3395
      %v3520 = vpack.c.bf16 %v3397, %v3397
      %v3521 = vpack.c.bf16 %v3479, %v3479
      %v3522 = vpack.c.bf16 %v3470, %v3470
      %v3523 = vpack.c.bf16 %v3400, %v3400
      %v3524 = vpack.c.bf16 %v3402, %v3402
      %v3525 = vpack.c.bf16 %v3404, %v3404
      %v3526 = vpack.c.bf16 %v3480, %v3480
      %v3527 = vpack.c.bf16 %v3471, %v3471
      %v3528 = vpack.c.bf16 %v3407, %v3407
      %v3529 = vpack.c.bf16 %v3409, %v3409
      %v3530 = vpack.c.bf16 %v3411, %v3411
      %v3531 = vpack.c.bf16 %v3481, %v3481
      %v3572 = vunpack.c.l.b16 %v3482
      %v3573 = vunpack.c.l.b16 %v3483
      %v3574 = vunpack.c.l.b16 %v3484
      %v3575 = vunpack.c.l.b16 %v3485
      %v3576 = vunpack.c.l.b16 %v3487
      %v3577 = vunpack.c.l.b16 %v3488
      %v3578 = vunpack.c.l.b16 %v3489
      %v3579 = vunpack.c.l.b16 %v3490
      %v3580 = vunpack.c.l.b16 %v3492
      %v3581 = vunpack.c.l.b16 %v3493
      %v3582 = vunpack.c.l.b16 %v3494
      %v3583 = vunpack.c.l.b16 %v3495
      %v3584 = vunpack.c.l.b16 %v3497
      %v3585 = vunpack.c.l.b16 %v3498
      %v3586 = vunpack.c.l.b16 %v3499
      %v3587 = vunpack.c.l.b16 %v3500
      %v3588 = vunpack.c.l.b16 %v3502
      %v3589 = vunpack.c.l.b16 %v3503
      %v3590 = vunpack.c.l.b16 %v3504
      %v3591 = vunpack.c.l.b16 %v3505
      %v3592 = vunpack.c.l.b16 %v3507
      %v3593 = vunpack.c.l.b16 %v3508
      %v3594 = vunpack.c.l.b16 %v3509
      %v3595 = vunpack.c.l.b16 %v3510
      %v3596 = vunpack.c.l.b16 %v3512
      %v3597 = vunpack.c.l.b16 %v3513
      %v3598 = vunpack.c.l.b16 %v3514
      %v3599 = vunpack.c.l.b16 %v3515
      %v3600 = vunpack.c.l.b16 %v3517
      %v3601 = vunpack.c.l.b16 %v3518
      %v3602 = vunpack.c.l.b16 %v3519
      %v3603 = vunpack.c.l.b16 %v3520
      %v3604 = vunpack.c.l.b16 %v3522
      %v3605 = vunpack.c.l.b16 %v3523
      %v3606 = vunpack.c.l.b16 %v3524
      %v3607 = vunpack.c.l.b16 %v3525
      %v3608 = vunpack.c.l.b16 %v3527
      %v3609 = vunpack.c.l.b16 %v3528
      %v3610 = vunpack.c.l.b16 %v3529
      %v3611 = vunpack.c.l.b16 %v3530
      %v3612 = vpack.c.b16 %v3573, %v3572
      %v3613 = vpack.c.b16 %v3575, %v3574
      %v3614 = vpack.c.b16 %v3577, %v3576
      %v3615 = vpack.c.b16 %v3579, %v3578
      %v3616 = vpack.c.b16 %v3581, %v3580
      %v3617 = vpack.c.b16 %v3583, %v3582
      %v3618 = vpack.c.b16 %v3585, %v3584
      %v3619 = vpack.c.b16 %v3587, %v3586
      %v3620 = vpack.c.b16 %v3589, %v3588
      %v3621 = vpack.c.b16 %v3591, %v3590
      %v3622 = vpack.c.b16 %v3593, %v3592
      %v3623 = vpack.c.b16 %v3595, %v3594
      %v3624 = vpack.c.b16 %v3597, %v3596
      %v3625 = vpack.c.b16 %v3599, %v3598
      %v3626 = vpack.c.b16 %v3601, %v3600
      %v3627 = vpack.c.b16 %v3603, %v3602
      %v3628 = vpack.c.b16 %v3605, %v3604
      %v3629 = vpack.c.b16 %v3607, %v3606
      %v3630 = vpack.c.b16 %v3609, %v3608
      %v3631 = vpack.c.b16 %v3611, %v3610
      %v3642 = vunpack.c.l.b16 %v3486
      %v3643 = vunpack.c.l.b16 %v3491
      %v3644 = vunpack.c.l.b16 %v3496
      %v3645 = vunpack.c.l.b16 %v3501
      %v3646 = vunpack.c.l.b16 %v3506
      %v3647 = vunpack.c.l.b16 %v3511
      %v3648 = vunpack.c.l.b16 %v3516
      %v3649 = vunpack.c.l.b16 %v3521
      %v3650 = vunpack.c.l.b16 %v3526
      %v3651 = vunpack.c.l.b16 %v3531
      %v3652 = vpack.c.b16 %v3642, %v3642
      %v3653 = vpack.c.b16 %v3643, %v3643
      %v3654 = vpack.c.b16 %v3644, %v3644
      %v3655 = vpack.c.b16 %v3645, %v3645
      %v3656 = vpack.c.b16 %v3646, %v3646
      %v3657 = vpack.c.b16 %v3647, %v3647
      %v3658 = vpack.c.b16 %v3648, %v3648
      %v3659 = vpack.c.b16 %v3649, %v3649
      %v3660 = vpack.c.b16 %v3650, %v3650
      %v3661 = vpack.c.b16 %v3651, %v3651
      %v3663 = vshrl.u32 %v3612, 16
      %v3665 = vshll.u32 %v3612, 16
      %v3667 = vrot.slane %v3665, 1
      %v3668 = vor.u32 %v3663, %v3667
      %v3670 = vshll.u32 %v3613, 16
      %v3672 = vrot.slane %v3670, 1
      %v3673 = vsel %vm811, %v3668, %v3672
      %v3674 = vshrl.u32 %v3613, 16
      %v3676 = vor.u32 %v3674, %v3672
      %v3678 = vshll.u32 %v3652, 16
      %v3680 = vrot.slane %v3678, 1
      %v3681 = vsel %vm811, %v3676, %v3680
      %v3683 = vshrl.u32 %v3614, 16
      %v3685 = vshll.u32 %v3614, 16
      %v3687 = vrot.slane %v3685, 1
      %v3688 = vor.u32 %v3683, %v3687
      %v3690 = vshll.u32 %v3615, 16
      %v3692 = vrot.slane %v3690, 1
      %v3693 = vsel %vm811, %v3688, %v3692
      %v3694 = vshrl.u32 %v3615, 16
      %v3696 = vor.u32 %v3694, %v3692
      %v3698 = vshll.u32 %v3653, 16
      %v3700 = vrot.slane %v3698, 1
      %v3701 = vsel %vm811, %v3696, %v3700
      %v3703 = vshrl.u32 %v3616, 16
      %v3705 = vshll.u32 %v3616, 16
      %v3707 = vrot.slane %v3705, 1
      %v3708 = vor.u32 %v3703, %v3707
      %v3710 = vshll.u32 %v3617, 16
      %v3712 = vrot.slane %v3710, 1
      %v3713 = vsel %vm811, %v3708, %v3712
      %v3714 = vshrl.u32 %v3617, 16
      %v3716 = vor.u32 %v3714, %v3712
      %v3718 = vshll.u32 %v3654, 16
      %v3720 = vrot.slane %v3718, 1
      %v3721 = vsel %vm811, %v3716, %v3720
      %v3723 = vshrl.u32 %v3618, 16
      %v3725 = vshll.u32 %v3618, 16
      %v3727 = vrot.slane %v3725, 1
      %v3728 = vor.u32 %v3723, %v3727
      %v3730 = vshll.u32 %v3619, 16
      %v3732 = vrot.slane %v3730, 1
      %v3733 = vsel %vm811, %v3728, %v3732
      %v3734 = vshrl.u32 %v3619, 16
      %v3736 = vor.u32 %v3734, %v3732
      %v3738 = vshll.u32 %v3655, 16
      %v3740 = vrot.slane %v3738, 1
      %v3741 = vsel %vm811, %v3736, %v3740
      %v3743 = vshrl.u32 %v3620, 16
      %v3745 = vshll.u32 %v3620, 16
      %v3747 = vrot.slane %v3745, 1
      %v3748 = vor.u32 %v3743, %v3747
      %v3750 = vshll.u32 %v3621, 16
      %v3752 = vrot.slane %v3750, 1
      %v3753 = vsel %vm811, %v3748, %v3752
      %v3754 = vshrl.u32 %v3621, 16
      %v3756 = vor.u32 %v3754, %v3752
      %v3758 = vshll.u32 %v3656, 16
      %v3760 = vrot.slane %v3758, 1
      %v3761 = vsel %vm811, %v3756, %v3760
      %v3763 = vshrl.u32 %v3622, 16
      %v3765 = vshll.u32 %v3622, 16
      %v3767 = vrot.slane %v3765, 1
      %v3768 = vor.u32 %v3763, %v3767
      %v3770 = vshll.u32 %v3623, 16
      %v3772 = vrot.slane %v3770, 1
      %v3773 = vsel %vm811, %v3768, %v3772
      %v3774 = vshrl.u32 %v3623, 16
      %v3776 = vor.u32 %v3774, %v3772
      %v3778 = vshll.u32 %v3657, 16
      %v3780 = vrot.slane %v3778, 1
      %v3781 = vsel %vm811, %v3776, %v3780
      %v3783 = vshrl.u32 %v3624, 16
      %v3785 = vshll.u32 %v3624, 16
      %v3787 = vrot.slane %v3785, 1
      %v3788 = vor.u32 %v3783, %v3787
      %v3790 = vshll.u32 %v3625, 16
      %v3792 = vrot.slane %v3790, 1
      %v3793 = vsel %vm811, %v3788, %v3792
      %v3794 = vshrl.u32 %v3625, 16
      %v3796 = vor.u32 %v3794, %v3792
      %v3798 = vshll.u32 %v3658, 16
      %v3800 = vrot.slane %v3798, 1
      %v3801 = vsel %vm811, %v3796, %v3800
      %v3803 = vshrl.u32 %v3626, 16
      %v3805 = vshll.u32 %v3626, 16
      %v3807 = vrot.slane %v3805, 1
      %v3808 = vor.u32 %v3803, %v3807
      %v3810 = vshll.u32 %v3627, 16
      %v3812 = vrot.slane %v3810, 1
      %v3813 = vsel %vm811, %v3808, %v3812
      %v3814 = vshrl.u32 %v3627, 16
      %v3816 = vor.u32 %v3814, %v3812
      %v3818 = vshll.u32 %v3659, 16
      %v3820 = vrot.slane %v3818, 1
      %v3821 = vsel %vm811, %v3816, %v3820
      %v3823 = vshrl.u32 %v3628, 16
      %v3825 = vshll.u32 %v3628, 16
      %v3827 = vrot.slane %v3825, 1
      %v3828 = vor.u32 %v3823, %v3827
      %v3830 = vshll.u32 %v3629, 16
      %v3832 = vrot.slane %v3830, 1
      %v3833 = vsel %vm811, %v3828, %v3832
      %v3834 = vshrl.u32 %v3629, 16
      %v3836 = vor.u32 %v3834, %v3832
      %v3838 = vshll.u32 %v3660, 16
      %v3840 = vrot.slane %v3838, 1
      %v3841 = vsel %vm811, %v3836, %v3840
      %v3843 = vshrl.u32 %v3630, 16
      %v3845 = vshll.u32 %v3630, 16
      %v3847 = vrot.slane %v3845, 1
      %v3848 = vor.u32 %v3843, %v3847
      %v3850 = vshll.u32 %v3631, 16
      %v3852 = vrot.slane %v3850, 1
      %v3853 = vsel %vm811, %v3848, %v3852
      %v3854 = vshrl.u32 %v3631, 16
      %v3856 = vor.u32 %v3854, %v3852
      %v3858 = vshll.u32 %v3661, 16
      %v3860 = vrot.slane %v3858, 1
      %v3861 = vsel %vm811, %v3856, %v3860
      %3862 = vrot.lane.b32.xlu0 %v3673, 8
      %v3863 = vpop.permute.xlu0 %3862
      %3864 = vrot.lane.b32.xlu0 %v3681, 8
      %v3865 = vpop.permute.xlu0 %3864
      %3866 = vrot.lane.b32.xlu0 %v3693, 8
      %v3867 = vpop.permute.xlu0 %3866
      %3868 = vrot.lane.b32.xlu0 %v3701, 8
      %v3869 = vpop.permute.xlu0 %3868
      %3870 = vrot.lane.b32.xlu0 %v3713, 8
      %v3871 = vpop.permute.xlu0 %3870
      %3872 = vrot.lane.b32.xlu0 %v3721, 8
      %v3873 = vpop.permute.xlu0 %3872
      %3874 = vrot.lane.b32.xlu0 %v3733, 8
      %v3875 = vpop.permute.xlu0 %3874
      %3876 = vrot.lane.b32.xlu0 %v3741, 8
      %v3877 = vpop.permute.xlu0 %3876
      %3878 = vrot.lane.b32.xlu0 %v3753, 8
      %v3879 = vpop.permute.xlu0 %3878
      %3880 = vrot.lane.b32.xlu0 %v3761, 8
      %v3881 = vpop.permute.xlu0 %3880
      %3882 = vrot.lane.b32.xlu0 %v3773, 8
      %v3883 = vpop.permute.xlu0 %3882
      %3884 = vrot.lane.b32.xlu0 %v3781, 8
      %v3885 = vpop.permute.xlu0 %3884
      %3886 = vrot.lane.b32.xlu0 %v3793, 8
      %v3887 = vpop.permute.xlu0 %3886
      %3888 = vrot.lane.b32.xlu0 %v3801, 8
      %v3889 = vpop.permute.xlu0 %3888
      %3890 = vrot.lane.b32.xlu0 %v3813, 8
      %v3891 = vpop.permute.xlu0 %3890
      %3892 = vrot.lane.b32.xlu0 %v3821, 8
      %v3893 = vpop.permute.xlu0 %3892
      %3894 = vrot.lane.b32.xlu0 %v3833, 8
      %v3895 = vpop.permute.xlu0 %3894
      %3896 = vrot.lane.b32.xlu0 %v3841, 8
      %v3897 = vpop.permute.xlu0 %3896
      %3898 = vrot.lane.b32.xlu0 %v3853, 8
      %v3899 = vpop.permute.xlu0 %3898
      %3900 = vrot.lane.b32.xlu0 %v3861, 8
      %v3901 = vpop.permute.xlu0 %3900
      %v3902 = vrot.slane %v3612, 1
      %v3903 = vrot.slane %v3613, 1
      %v3904 = vsel %vm1100, %v3902, %v3903
      %v3905 = vrot.slane %v3652, 1
      %v3906 = vsel %vm1100, %v3903, %v3905
      %v3907 = vrot.slane %v3614, 1
      %v3908 = vrot.slane %v3615, 1
      %v3909 = vsel %vm1100, %v3907, %v3908
      %v3910 = vrot.slane %v3653, 1
      %v3911 = vsel %vm1100, %v3908, %v3910
      %v3912 = vrot.slane %v3616, 1
      %v3913 = vrot.slane %v3617, 1
      %v3914 = vsel %vm1100, %v3912, %v3913
      %v3915 = vrot.slane %v3654, 1
      %v3916 = vsel %vm1100, %v3913, %v3915
      %v3917 = vrot.slane %v3618, 1
      %v3918 = vrot.slane %v3619, 1
      %v3919 = vsel %vm1100, %v3917, %v3918
      %v3920 = vrot.slane %v3655, 1
      %v3921 = vsel %vm1100, %v3918, %v3920
      %v3922 = vrot.slane %v3620, 1
      %v3923 = vrot.slane %v3621, 1
      %v3924 = vsel %vm1100, %v3922, %v3923
      %v3925 = vrot.slane %v3656, 1
      %v3926 = vsel %vm1100, %v3923, %v3925
      %v3927 = vrot.slane %v3622, 1
      %v3928 = vrot.slane %v3623, 1
      %v3929 = vsel %vm1100, %v3927, %v3928
      %v3930 = vrot.slane %v3657, 1
      %v3931 = vsel %vm1100, %v3928, %v3930
      %v3932 = vrot.slane %v3624, 1
      %v3933 = vrot.slane %v3625, 1
      %v3934 = vsel %vm1100, %v3932, %v3933
      %v3935 = vrot.slane %v3658, 1
      %v3936 = vsel %vm1100, %v3933, %v3935
      %v3937 = vrot.slane %v3626, 1
      %v3938 = vrot.slane %v3627, 1
      %v3939 = vsel %vm1100, %v3937, %v3938
      %v3940 = vrot.slane %v3659, 1
      %v3941 = vsel %vm1100, %v3938, %v3940
      %v3942 = vrot.slane %v3628, 1
      %v3943 = vrot.slane %v3629, 1
      %v3944 = vsel %vm1100, %v3942, %v3943
      %v3945 = vrot.slane %v3660, 1
      %v3946 = vsel %vm1100, %v3943, %v3945
      %v3947 = vrot.slane %v3630, 1
      %v3948 = vrot.slane %v3631, 1
      %v3949 = vsel %vm1100, %v3947, %v3948
      %v3950 = vrot.slane %v3661, 1
      %v3951 = vsel %vm1100, %v3948, %v3950
      %3952 = vrot.lane.b32.xlu0 %v3904, 16
      %v3953 = vpop.permute.xlu0 %3952
      %3954 = vrot.lane.b32.xlu0 %v3906, 16
      %v3955 = vpop.permute.xlu0 %3954
      %3956 = vrot.lane.b32.xlu0 %v3909, 16
      %v3957 = vpop.permute.xlu0 %3956
      %3958 = vrot.lane.b32.xlu0 %v3911, 16
      %v3959 = vpop.permute.xlu0 %3958
      %3960 = vrot.lane.b32.xlu0 %v3914, 16
      %v3961 = vpop.permute.xlu0 %3960
      %3962 = vrot.lane.b32.xlu0 %v3916, 16
      %v3963 = vpop.permute.xlu0 %3962
      %3964 = vrot.lane.b32.xlu0 %v3919, 16
      %v3965 = vpop.permute.xlu0 %3964
      %3966 = vrot.lane.b32.xlu0 %v3921, 16
      %v3967 = vpop.permute.xlu0 %3966
      %3968 = vrot.lane.b32.xlu0 %v3924, 16
      %v3969 = vpop.permute.xlu0 %3968
      %3970 = vrot.lane.b32.xlu0 %v3926, 16
      %v3971 = vpop.permute.xlu0 %3970
      %3972 = vrot.lane.b32.xlu0 %v3929, 16
      %v3973 = vpop.permute.xlu0 %3972
      %3974 = vrot.lane.b32.xlu0 %v3931, 16
      %v3975 = vpop.permute.xlu0 %3974
      %3976 = vrot.lane.b32.xlu0 %v3934, 16
      %v3977 = vpop.permute.xlu0 %3976
      %3978 = vrot.lane.b32.xlu0 %v3936, 16
      %v3979 = vpop.permute.xlu0 %3978
      %3980 = vrot.lane.b32.xlu0 %v3939, 16
      %v3981 = vpop.permute.xlu0 %3980
      %3982 = vrot.lane.b32.xlu0 %v3941, 16
      %v3983 = vpop.permute.xlu0 %3982
      %3984 = vrot.lane.b32.xlu0 %v3944, 16
      %v3985 = vpop.permute.xlu0 %3984
      %3986 = vrot.lane.b32.xlu0 %v3946, 16
      %v3987 = vpop.permute.xlu0 %3986
      %3988 = vrot.lane.b32.xlu0 %v3949, 16
      %v3989 = vpop.permute.xlu0 %3988
      %3990 = vrot.lane.b32.xlu0 %v3951, 16
      %v3991 = vpop.permute.xlu0 %3990
      %v3993 = vsel %vm1209, %v3612, %v3863
      %v3995 = vsel %vm1209, %v3613, %v3865
      %v3997 = vsel %vm1209, %v3614, %v3867
      %v3999 = vsel %vm1209, %v3615, %v3869
      %v4001 = vsel %vm1209, %v3616, %v3871
      %v4003 = vsel %vm1209, %v3617, %v3873
      %v4005 = vsel %vm1209, %v3618, %v3875
      %v4007 = vsel %vm1209, %v3619, %v3877
      %v4009 = vsel %vm1209, %v3620, %v3879
      %v4011 = vsel %vm1209, %v3621, %v3881
      %v4013 = vsel %vm1209, %v3622, %v3883
      %v4015 = vsel %vm1209, %v3623, %v3885
      %v4017 = vsel %vm1209, %v3624, %v3887
      %v4019 = vsel %vm1209, %v3625, %v3889
      %v4021 = vsel %vm1209, %v3626, %v3891
      %v4023 = vsel %vm1209, %v3627, %v3893
      %v4025 = vsel %vm1209, %v3628, %v3895
      %v4027 = vsel %vm1209, %v3629, %v3897
      %v4029 = vsel %vm1209, %v3630, %v3899
      %v4031 = vsel %vm1209, %v3631, %v3901
      %v4033 = vsel %vm1258, %v3993, %v3953
      %v4035 = vsel %vm1258, %v3995, %v3955
      %v4037 = vsel %vm1258, %v3997, %v3957
      %v4039 = vsel %vm1258, %v3999, %v3959
      %v4041 = vsel %vm1258, %v4001, %v3961
      %v4043 = vsel %vm1258, %v4003, %v3963
      %v4045 = vsel %vm1258, %v4005, %v3965
      %v4047 = vsel %vm1258, %v4007, %v3967
      %v4049 = vsel %vm1258, %v4009, %v3969
      %v4051 = vsel %vm1258, %v4011, %v3971
      %v4053 = vsel %vm1258, %v4013, %v3973
      %v4055 = vsel %vm1258, %v4015, %v3975
      %v4057 = vsel %vm1258, %v4017, %v3977
      %v4059 = vsel %vm1258, %v4019, %v3979
      %v4061 = vsel %vm1258, %v4021, %v3981
      %v4063 = vsel %vm1258, %v4023, %v3983
      %v4065 = vsel %vm1258, %v4025, %v3985
      %v4067 = vsel %vm1258, %v4027, %v3987
      %v4069 = vsel %vm1258, %v4029, %v3989
      %v4071 = vsel %vm1258, %v4031, %v3991
      %4088 = vrot.lane.b32.xlu0 %v4037, 24
      %v4089 = vpop.permute.xlu0 %4088
      %4090 = vrot.lane.b32.xlu0 %v4039, 24
      %v4091 = vpop.permute.xlu0 %4090
      %4092 = vrot.lane.b32.xlu0 %v4041, 24
      %v4093 = vpop.permute.xlu0 %4092
      %4094 = vrot.lane.b32.xlu0 %v4043, 24
      %v4095 = vpop.permute.xlu0 %4094
      %4096 = vrot.lane.b32.xlu0 %v4045, 24
      %v4097 = vpop.permute.xlu0 %4096
      %4098 = vrot.lane.b32.xlu0 %v4047, 24
      %v4099 = vpop.permute.xlu0 %4098
      %4100 = vrot.lane.b32.xlu0 %v4049, 24
      %v4101 = vpop.permute.xlu0 %4100
      %4102 = vrot.lane.b32.xlu0 %v4051, 24
      %v4103 = vpop.permute.xlu0 %4102
      %4104 = vrot.lane.b32.xlu0 %v4053, 24
      %v4105 = vpop.permute.xlu0 %4104
      %4106 = vrot.lane.b32.xlu0 %v4055, 24
      %v4107 = vpop.permute.xlu0 %4106
      %4108 = vrot.lane.b32.xlu0 %v4057, 24
      %v4109 = vpop.permute.xlu0 %4108
      %4110 = vrot.lane.b32.xlu0 %v4059, 24
      %v4111 = vpop.permute.xlu0 %4110
      %4112 = vrot.lane.b32.xlu0 %v4061, 24
      %v4113 = vpop.permute.xlu0 %4112
      %4114 = vrot.lane.b32.xlu0 %v4063, 24
      %v4115 = vpop.permute.xlu0 %4114
      %4116 = vrot.lane.b32.xlu0 %v4065, 24
      %v4117 = vpop.permute.xlu0 %4116
      %4118 = vrot.lane.b32.xlu0 %v4067, 24
      %v4119 = vpop.permute.xlu0 %4118
      %4122 = vrot.lane.b32.xlu0 %v4041, 48
      %v4123 = vpop.permute.xlu0 %4122
      %4124 = vrot.lane.b32.xlu0 %v4043, 48
      %v4125 = vpop.permute.xlu0 %4124
      %4126 = vrot.lane.b32.xlu0 %v4045, 48
      %v4127 = vpop.permute.xlu0 %4126
      %4128 = vrot.lane.b32.xlu0 %v4047, 48
      %v4129 = vpop.permute.xlu0 %4128
      %4130 = vrot.lane.b32.xlu0 %v4049, 48
      %v4131 = vpop.permute.xlu0 %4130
      %4132 = vrot.lane.b32.xlu0 %v4051, 48
      %v4133 = vpop.permute.xlu0 %4132
      %4134 = vrot.lane.b32.xlu0 %v4053, 48
      %v4135 = vpop.permute.xlu0 %4134
      %4136 = vrot.lane.b32.xlu0 %v4055, 48
      %v4137 = vpop.permute.xlu0 %4136
      %4138 = vrot.lane.b32.xlu0 %v4057, 48
      %v4139 = vpop.permute.xlu0 %4138
      %4140 = vrot.lane.b32.xlu0 %v4059, 48
      %v4141 = vpop.permute.xlu0 %4140
      %4142 = vrot.lane.b32.xlu0 %v4061, 48
      %v4143 = vpop.permute.xlu0 %4142
      %4144 = vrot.lane.b32.xlu0 %v4063, 48
      %v4145 = vpop.permute.xlu0 %4144
      %4146 = vrot.lane.b32.xlu0 %v4065, 48
      %v4147 = vpop.permute.xlu0 %4146
      %4148 = vrot.lane.b32.xlu0 %v4067, 48
      %v4149 = vpop.permute.xlu0 %4148
      %4150 = vrot.lane.b32.xlu0 %v4069, 48
      %v4151 = vpop.permute.xlu0 %4150
      %4152 = vrot.lane.b32.xlu0 %v4071, 48
      %v4153 = vpop.permute.xlu0 %4152
      %v4155 = vsel %vm1409, %v4033, %v4089
      %v4157 = vsel %vm1409, %v4035, %v4091
      %v4159 = vsel %vm1409, %v4037, %v4093
      %v4161 = vsel %vm1409, %v4039, %v4095
      %v4163 = vsel %vm1409, %v4041, %v4097
      %v4165 = vsel %vm1409, %v4043, %v4099
      %v4167 = vsel %vm1409, %v4045, %v4101
      %v4169 = vsel %vm1409, %v4047, %v4103
      %v4171 = vsel %vm1409, %v4049, %v4105
      %v4173 = vsel %vm1409, %v4051, %v4107
      %v4175 = vsel %vm1409, %v4053, %v4109
      %v4177 = vsel %vm1409, %v4055, %v4111
      %v4179 = vsel %vm1409, %v4057, %v4113
      %v4181 = vsel %vm1409, %v4059, %v4115
      %v4183 = vsel %vm1409, %v4061, %v4117
      %v4185 = vsel %vm1409, %v4063, %v4119
      %v4187 = vsel %vm1450, %v4155, %v4123
      %v4189 = vsel %vm1450, %v4157, %v4125
      %v4191 = vsel %vm1450, %v4159, %v4127
      %v4193 = vsel %vm1450, %v4161, %v4129
      %v4195 = vsel %vm1450, %v4163, %v4131
      %v4197 = vsel %vm1450, %v4165, %v4133
      %v4199 = vsel %vm1450, %v4167, %v4135
      %v4201 = vsel %vm1450, %v4169, %v4137
      %v4203 = vsel %vm1450, %v4171, %v4139
      %v4205 = vsel %vm1450, %v4173, %v4141
      %v4207 = vsel %vm1450, %v4175, %v4143
      %v4209 = vsel %vm1450, %v4177, %v4145
      %v4211 = vsel %vm1450, %v4179, %v4147
      %v4213 = vsel %vm1450, %v4181, %v4149
      %v4215 = vsel %vm1450, %v4183, %v4151
      %v4217 = vsel %vm1450, %v4185, %v4153
      %v4218 = vld [vmem:[%s4] sm:$0xf]
      %v4219 = vld [vmem:[%s5] sm:$0xff]
      %4221 = vset.pattern.permute.xlu0 0
      %4222 = vperm.xlu0 %4221, %v4219
      %v4223 = vpop.permute.xlu0 %4222
      %v4226 = vsel %vm1531, %v4218, 0
      %v4228 = vsel %vm1531, %v4187, 0
      %v4230 = vsel %vm1531, %v4189, 0
      %v4232 = vsel %vm1531, %v4191, 0
      %v4234 = vsel %vm1531, %v4193, 0
      %v4236 = vsel %vm1531, %v4195, 0
      %v4238 = vsel %vm1531, %v4197, 0
      %v4240 = vsel %vm1531, %v4199, 0
      %v4242 = vsel %vm1531, %v4201, 0
      %v4244 = vsel %vm1531, %v4203, 0
      %v4246 = vsel %vm1531, %v4205, 0
      %v4248 = vsel %vm1531, %v4207, 0
      %v4250 = vsel %vm1531, %v4209, 0
      %v4252 = vsel %vm1531, %v4211, 0
      %v4254 = vsel %vm1531, %v4213, 0
      %v4256 = vsel %vm1531, %v4215, 0
      %v4258 = vsel %vm1531, %v4217, 0
      %4260 = vmatpush.bf16.xpose.msra.mxu0 %v4242
      %4261 = vmatpush.bf16.xpose.msra.mxu0 %v4240
      %4262 = vmatpush.bf16.xpose.msra.mxu0 %v4238
      %4263 = vmatpush.bf16.xpose.msra.mxu0 %v4236
      %4264 = vmatpush.bf16.xpose.msra.mxu0 %v4234
      %4265 = vmatpush.bf16.xpose.msra.mxu0 %v4232
      %4266 = vmatpush.bf16.xpose.msra.mxu0 %v4230
      %4267 = vmatpush.bf16.xpose.msra.mxu0 %v4228
      %4268 = vmatmul.bf16.gmra.mxu0 %v4226
      %v4269 = vpop.f32.mrf.mxu0
      %v4270 = vadd.f32 %v4223, %v4269
      %v4271 = vpop.f32.mrf.mxu0
      %4272 = vdwg.mxu0
      %4273 = vmatpush.bf16.xpose.msra.mxu0 %v4258
      %4274 = vmatpush.bf16.xpose.msra.mxu0 %v4256
      %4275 = vmatpush.bf16.xpose.msra.mxu0 %v4254
      %4276 = vmatpush.bf16.xpose.msra.mxu0 %v4252
      %4277 = vmatpush.bf16.xpose.msra.mxu0 %v4250
      %4278 = vmatpush.bf16.xpose.msra.mxu0 %v4248
      %4279 = vmatpush.bf16.xpose.msra.mxu0 %v4246
      %4280 = vmatpush.bf16.xpose.msra.mxu0 %v4244
      %4281 = vmatmul.bf16.gmra.mxu0 %v4226
      %v4282 = vpop.f32.mrf.mxu0
      %v4283 = vadd.f32 %v4223, %v4282
      %v4284 = vpop.f32.mrf.mxu0
      %4285 = vdwg.mxu0
      %v4286 = vmul.f32 %v4270, 0.5
      %v4287 = vmul.f32 %v4283, 0.5
      %v4288 = vmul.f32 %v4270, 0.70710677
      %v4289 = vmul.f32 %v4283, 0.70710677
      %v4290 = vand.u32 2147483647, %v4288
      %v4291 = vand.u32 2147483647, %v4289
      %v4292 = vmul.f32 %v4290, 0.3275911
      %v4293 = vmul.f32 %v4291, 0.3275911
      %v4294 = vadd.f32 %v4292, 1.0
      %v4295 = vadd.f32 %v4293, 1.0
      %v4296 = vrcp.pop %v4294
      %v4297 = vmul.f32 %v4294, %v4296
      %v4298 = vsub.f32 1.0, %v4297
      %v4299 = vmul.f32 %v4296, %v4298
      %v4300 = vadd.f32 %v4296, %v4299
      %vm4301 = vweird.f32 %v4294
      %vm4302 = vweird.f32 %v4296
      %vm4303 = vmor %vm4301, %vm4302
      %v4304 = vsel %vm4303, %v4296, %v4300
      %v4305 = vand.u32 2147483647, %v4294
      %vm4306 = vcmp.eq.f32.partialorder %v4305, 8.507059e+37
      %v4307 = vand.u32 %v4294, 2147483648
      %v4308 = vor.u32 1.1754944e-38, %v4307
      %v4309 = vsel %vm4306, %v4308, %v4304
      %v4310 = vmul.f32 1.0, %v4309
      %v4311 = vrcp.pop %v4295
      %v4312 = vmul.f32 %v4295, %v4311
      %v4313 = vsub.f32 1.0, %v4312
      %v4314 = vmul.f32 %v4311, %v4313
      %v4315 = vadd.f32 %v4311, %v4314
      %vm4316 = vweird.f32 %v4295
      %vm4317 = vweird.f32 %v4311
      %vm4318 = vmor %vm4316, %vm4317
      %v4319 = vsel %vm4318, %v4311, %v4315
      %v4320 = vand.u32 2147483647, %v4295
      %vm4321 = vcmp.eq.f32.partialorder %v4320, 8.507059e+37
      %v4322 = vand.u32 %v4295, 2147483648
      %v4323 = vor.u32 1.1754944e-38, %v4322
      %v4324 = vsel %vm4321, %v4323, %v4319
      %v4325 = vmul.f32 1.0, %v4324
      %v4326 = vmul.f32 %v4310, 1.0614054
      %v4327 = vmul.f32 %v4325, 1.0614054
      %v4328 = vadd.f32 %v4326, -1.4531521
      %v4329 = vadd.f32 %v4327, -1.4531521
      %v4330 = vmul.f32 %v4328, %v4310
      %v4331 = vmul.f32 %v4329, %v4325
      %v4332 = vadd.f32 %v4330, 1.4214138
      %v4333 = vadd.f32 %v4331, 1.4214138
      %v4334 = vmul.f32 %v4332, %v4310
      %v4335 = vmul.f32 %v4333, %v4325
      %v4336 = vadd.f32 %v4334, -0.28449672
      %v4337 = vadd.f32 %v4335, -0.28449672
      %v4338 = vmul.f32 %v4336, %v4310
      %v4339 = vmul.f32 %v4337, %v4325
      %v4340 = vadd.f32 %v4338, 0.2548296
      %v4341 = vadd.f32 %v4339, 0.2548296
      %v4342 = vmul.f32 %v4340, %v4310
      %v4343 = vmul.f32 %v4341, %v4325
      %v4344 = vsub.f32 0.0, %v4290
      %v4345 = vsub.f32 0.0, %v4291
      %v4346 = vmul.f32 %v4344, %v4290
      %v4347 = vmul.f32 %v4345, %v4291
      %v4348 = vmul.f32 %v4346, 1.442695
      %v4349 = vpow.pop %v4348
      %v4350 = vmul.f32 %v4347, 1.442695
      %v4351 = vpow.pop %v4350
      %v4352 = vmul.f32 %v4342, %v4349
      %v4353 = vmul.f32 %v4343, %v4351
      %v4354 = vsub.f32 1.0, %v4352
      %v4355 = vsub.f32 1.0, %v4353
      %vm4356 = vcmp.ge.f32.partialorder %v4288, 0.0
      %vm4357 = vcmp.ge.f32.partialorder %v4289, 0.0
      %v4358 = vsub.f32 0.0, %v4354
      %v4359 = vsub.f32 0.0, %v4355
      %v4360 = vsel %vm4356, %v4354, %v4358
      %v4361 = vsel %vm4357, %v4355, %v4359
      %v4362 = vadd.f32 %v4360, 1.0
      %v4363 = vadd.f32 %v4361, 1.0
      %v4364 = vmul.f32 %v4286, %v4362
      %v4365 = vmul.f32 %v4287, %v4363
      %v4366 = vpack.c.bf16 %v4365, %v4364
      %4367 = vst [vmem:[%s321] sm:$0xff] %v4366
      %s4368 = smul.u32 2, %s22
      %p4369 = scmp.lt.s32.totalorder %s21, 1
      %s4370 = scalar_select %p4369, %s21, 1
      %p4371 = scmp.lt.s32.totalorder %s4368, 7
      %s4372 = scalar_select %p4371, %s4368, 7
      %s4373 = smul.addr %s4370, 8
      %s4374 = sadd.s32 %s4372, %s4373
      %s4375 = smul.addr %s4374, 4
      %s4376 = scalar_lea.vmem %s6, %s4375
      // Predicated region
      $region45: #{fwd.1} parent=43 // pred_check
        %p4377 = pneg %p193
      $region46: #{fwd.1} parent=43 // pred_check_branch
        %4379 = sbr.rel (%p4377) target = $region48
      $region47: #{fwd.1} parent=43 // pred_region
        %s4380 = smul.u32 2, %s22
      $region48: #{fwd.1} parent=43 // pred_fallthru
        _
    $region44: #{fwd.1} parent=5 // pred_fallthru
      _
    %p4381 = scmp.le.s32.totalorder 2, %s12
    // Predicated region
    $region49: #{fwd.1} parent=5 // pred_check
      %p4382 = pneg %p4381
    $region50: #{fwd.1} parent=5 // pred_check_branch
      %4384 = sbr.rel (%p4382) target = $region52
    $region51: #{fwd.1} parent=5 // pred_region
      %s4385 = ssub.s32 %s12, 2
      // Predicated region
      $region53: #{fwd.1} parent=51 // pred_check
        %p4386 = pneg %p199
      $region54: #{fwd.1} parent=51 // pred_check_branch
        %4388 = sbr.rel (%p4386) target = $region56
      $region55: #{fwd.1} parent=51 // pred_region
        %s4389 = smul.u32 2, %s24
        %p4390 = scmp.lt.s32.totalorder %s23, 1
        %s4391 = scalar_select %p4390, %s23, 1
        %p4392 = scmp.lt.s32.totalorder %s4389, 7
        %s4393 = scalar_select %p4392, %s4389, 7
        %s4394 = smul.addr %s4391, 8
        %s4395 = sadd.s32 %s4393, %s4394
        %s4396 = smul.addr %s4395, 4
        %s4397 = scalar_lea.vmem %s6, %s4396
      $region56: #{fwd.1} parent=51 // pred_fallthru
        _
    $region52: #{fwd.1} parent=5 // pred_fallthru
      _
  $region6: #{fwd.1} parent=0 // loop_footer
    %s16 = sadd.s32 1, %s12
  $region7: #{fwd.1} parent=0 // loop_footer_branch
    %11 = sbr.rel target = $region3
  $region8: #{fwd.1} parent=0 // loop_exit
    _

</llo_original>
